<compile_context>
chip_gen: v6e
topology: v6e:2x2x1
jax: 0.10.0
libtpu: 0.0.40
codegen_flags: <defaults>
</compile_context>

<pallas_src>
import functools

import jax
import jax.numpy as jnp
from jax.experimental import pallas as pl
from jax.experimental.pallas import tpu as pltpu

LATENT_DIMS = 2
IN_FEATURES = 784   # 28 * 28
IN_PAD = 896        # 7 * 128 — clean K tiles on the MXU
HIDDEN = 512
OUT = 784           # 28 * 28
OUT_PAD = 896       # 7 * 128 — lane-dense output stores, full MXU N tiles


def _round_up(x, m):
    return ((x + m - 1) // m) * m


def _choose_tile(B, tile_b):
    """Pick a batch tile (multiple of 8) and padded batch size.

    Ensures >= 2 grid steps whenever B > 8 so the 'parallel' batch axis can
    shard across both TensorCores on v7x."""
    b8 = _round_up(max(B, 1), 8)
    tile = min(tile_b, b8)
    if b8 > 8 and b8 <= 2 * tile:
        tile = _round_up((b8 + 1) // 2, 8)
    b_pad = _round_up(b8, tile)
    return tile, b_pad


def vae_kernel(x_ref, eps_ref,
               w1e_ref, b1e_ref, wms_ref, bms_ref,
               w1d_ref, b1d_ref, w2d_ref, b2d_ref,
               y_ref, ms_ref):
    # x_ref:   (TILE_B, 896) f32     eps_ref: (TILE_B, 2) f32
    # w1e_ref: (896, 512) bf16       b1e_ref: (1, 512) f32
    # wms_ref: (512, 4)  bf16 [mu | log-sigma heads fused]   bms_ref: (1, 4) f32
    # w1d_ref: (2, 512) f32          b1d_ref: (1, 512) f32
    # w2d_ref: (512, 896) bf16       b2d_ref: (1, 896) f32
    # y_ref:   (TILE_B, 896) f32     ms_ref:  (TILE_B, 4) f32 = [mu | log_sigma]

    # ---- encoder layer 1: bf16 operands, f32 MXU accumulation, then ReLU ----
    xb = x_ref[...].astype(jnp.bfloat16)
    h = jnp.dot(xb, w1e_ref[...], preferred_element_type=jnp.float32) + b1e_ref[...]
    h = jnp.maximum(h, 0.0)
    hb = h.astype(jnp.bfloat16)

    # ---- mu / log-sigma heads fused into one small matmul ----
    ms = jnp.dot(hb, wms_ref[...], preferred_element_type=jnp.float32) + bms_ref[...]
    mu = ms[:, :LATENT_DIMS]
    sigma = jnp.exp(ms[:, LATENT_DIMS:])          # EUP exp
    z = mu + sigma * eps_ref[...]
    ms_ref[...] = ms                              # single merged [mu | log_sigma] stream

    # ---- decoder layer 1 (K = 2): VPU broadcast outer-product in f32, skip MXU ----
    w1d = w1d_ref[...]
    hd = b1d_ref[...]                             # (1, 512) broadcasts up
    for k in range(LATENT_DIMS):                  # static 2-iteration loop
        hd = hd + z[:, k:k + 1] * w1d[k:k + 1, :]
    hd = jnp.maximum(hd, 0.0)

    # ---- decoder layer 2: bf16 operands, f32 accumulation, sigmoid (EUP) ----
    y = jnp.dot(hd.astype(jnp.bfloat16), w2d_ref[...],
                preferred_element_type=jnp.float32) + b2d_ref[...]
    y_ref[...] = jax.nn.sigmoid(y).astype(y_ref.dtype)


def pack_params(params):
    """One-time weight prep: head fusion, padding, bf16 casts for MXU operands."""
    wms = jnp.concatenate([params["w_mu"], params["w_sig"]], axis=1)      # (512, 4)
    bms = jnp.concatenate([params["b_mu"], params["b_sig"]], axis=1)      # (1, 4)
    w1e = jnp.pad(params["w1e"], ((0, IN_PAD - IN_FEATURES), (0, 0)))     # (896, 512)
    w2d = jnp.pad(params["w2d"], ((0, 0), (0, OUT_PAD - OUT)))            # (512, 896)
    b2d = jnp.pad(params["b2d"], ((0, 0), (0, OUT_PAD - OUT)))            # (1, 896)
    return dict(
        w1e=w1e.astype(jnp.bfloat16), b1e=params["b1e"].astype(jnp.float32),
        wms=wms.astype(jnp.bfloat16), bms=bms.astype(jnp.float32),
        w1d=params["w1d"].astype(jnp.float32), b1d=params["b1d"].astype(jnp.float32),
        w2d=w2d.astype(jnp.bfloat16), b2d=b2d.astype(jnp.float32),
    )


@functools.partial(jax.jit, static_argnames=("tile_b",))
def vae_forward(x, packed, eps, *, tile_b=256):
    """x: (B, 1, 28, 28) f32, eps: (B, LATENT_DIMS) f32 -> ((B,1,28,28), kl)."""
    B = x.shape[0]
    xf = x.reshape(B, IN_FEATURES).astype(jnp.float32)
    xf = jnp.pad(xf, ((0, 0), (0, IN_PAD - IN_FEATURES)))   # K -> 896 (zero cols)

    tile, b_pad = _choose_tile(B, tile_b)
    if b_pad != B:
        xf = jnp.pad(xf, ((0, b_pad - B), (0, 0)))
        eps_p = jnp.pad(eps.astype(jnp.float32), ((0, b_pad - B), (0, 0)))
    else:
        eps_p = eps.astype(jnp.float32)

    grid = (b_pad // tile,)
    y, ms = pl.pallas_call(
        vae_kernel,
        out_shape=(
            jax.ShapeDtypeStruct((b_pad, OUT_PAD), jnp.float32),
            jax.ShapeDtypeStruct((b_pad, 2 * LATENT_DIMS), jnp.float32),
        ),
        grid=grid,
        in_specs=[
            # streamed per batch tile (double-buffered by the pipeline)
            pl.BlockSpec((tile, IN_PAD), lambda i: (i, 0)),
            pl.BlockSpec((tile, LATENT_DIMS), lambda i: (i, 0)),
            # weights / biases: constant index_map -> DMA'd once, VMEM-resident
            pl.BlockSpec((IN_PAD, HIDDEN), lambda i: (0, 0)),
            pl.BlockSpec((1, HIDDEN), lambda i: (0, 0)),
            pl.BlockSpec((HIDDEN, 2 * LATENT_DIMS), lambda i: (0, 0)),
            pl.BlockSpec((1, 2 * LATENT_DIMS), lambda i: (0, 0)),
            pl.BlockSpec((LATENT_DIMS, HIDDEN), lambda i: (0, 0)),
            pl.BlockSpec((1, HIDDEN), lambda i: (0, 0)),
            pl.BlockSpec((HIDDEN, OUT_PAD), lambda i: (0, 0)),
            pl.BlockSpec((1, OUT_PAD), lambda i: (0, 0)),
        ],
        out_specs=(
            pl.BlockSpec((tile, OUT_PAD), lambda i: (i, 0)),
            pl.BlockSpec((tile, 2 * LATENT_DIMS), lambda i: (i, 0)),
        ),
        compiler_params=pltpu.CompilerParams(
            dimension_semantics=("parallel",),          # megacore on v7x
            vmem_limit_bytes=32 * 1024 * 1024,
        ),
    )(xf, eps_p, packed["w1e"], packed["b1e"], packed["wms"], packed["bms"],
      packed["w1d"], packed["b1d"], packed["w2d"], packed["b2d"])

    out = y[:B, :OUT].reshape(B, 1, 28, 28)
    mu = ms[:B, :LATENT_DIMS]
    logsig = ms[:B, LATENT_DIMS:]
    sigma = jnp.exp(logsig)
    kl = jnp.sum(sigma ** 2 + mu ** 2 - logsig - 0.5)
    return out, kl


def init_params(key):
    """Deterministic init mimicking nn.Linear default U[-1/sqrt(fan_in), ...]."""
    keys = jax.random.split(key, 10)

    def linear(kw, kb, fan_in, fan_out):
        lim = 1.0 / jnp.sqrt(jnp.float32(fan_in))
        w = jax.random.uniform(kw, (fan_in, fan_out), jnp.float32, -lim, lim)
        b = jax.random.uniform(kb, (1, fan_out), jnp.float32, -lim, lim)
        return w, b

    w1e, b1e = linear(keys[0], keys[1], IN_FEATURES, HIDDEN)
    w_mu, b_mu = linear(keys[2], keys[3], HIDDEN, LATENT_DIMS)
    w_sig, b_sig = linear(keys[4], keys[5], HIDDEN, LATENT_DIMS)
    w1d, b1d = linear(keys[6], keys[7], LATENT_DIMS, HIDDEN)
    w2d, b2d = linear(keys[8], keys[9], HIDDEN, OUT)
    return dict(w1e=w1e, b1e=b1e, w_mu=w_mu, b_mu=b_mu, w_sig=w_sig, b_sig=b_sig,
                w1d=w1d, b1d=b1d, w2d=w2d, b2d=b2d)


def reference_forward(x, params, eps):
    """Pure-JAX reference with the same bf16-operand / f32-accumulate matmul math."""
    B = x.shape[0]
    bf = jnp.bfloat16
    xf = x.reshape(B, IN_FEATURES)
    h = jnp.maximum(
        jnp.dot(xf.astype(bf), params["w1e"].astype(bf),
                preferred_element_type=jnp.float32) + params["b1e"], 0.0)
    hb = h.astype(bf)
    mu = jnp.dot(hb, params["w_mu"].astype(bf),
                 preferred_element_type=jnp.float32) + params["b_mu"]
    logsig = jnp.dot(hb, params["w_sig"].astype(bf),
                     preferred_element_type=jnp.float32) + params["b_sig"]
    sigma = jnp.exp(logsig)
    z = mu + sigma * eps
    hd = jnp.maximum(z @ params["w1d"] + params["b1d"], 0.0)
    y = jax.nn.sigmoid(
        jnp.dot(hd.astype(bf), params["w2d"].astype(bf),
                preferred_element_type=jnp.float32) + params["b2d"])
    kl = jnp.sum(sigma ** 2 + mu ** 2 - logsig - 0.5)
    return y.reshape(B, 1, 28, 28), kl


if __name__ == "__main__":
    key = jax.random.PRNGKey(0)
    kx, kp, ke = jax.random.split(key, 3)

    B = 8
    x = jax.random.uniform(kx, (B, 1, 28, 28), jnp.float32)
    params = init_params(kp)
    packed = pack_params(params)
    # TODO(synk): torch.distributions.Normal(0,1).sample() has no in-kernel
    # equivalent here; the Gaussian noise is drawn in the wrapper and passed in.
    eps = jax.random.normal(ke, (B, LATENT_DIMS), jnp.float32)

    out, kl = vae_forward(x, packed, eps)
    out = jax.block_until_ready(out)

    ref_out, ref_kl = reference_forward(x, params, eps)
    assert out.shape == (B, 1, 28, 28), out.shape
    assert jnp.allclose(out, ref_out, atol=2e-3, rtol=2e-3), "output mismatch vs reference"
    assert jnp.allclose(kl, ref_kl, atol=1e-2, rtol=1e-2), "kl mismatch vs reference"

    print("KERNEL_OK")
</pallas_src>

<mosaic_0001>
module attributes {stable_mosaic.version = 11 : i64} {
  func.func @vae_kernel(%arg0: i32, %arg1: memref<8x896xf32, #tpu.memory_space<vmem>>, %arg2: memref<8x2xf32, #tpu.memory_space<vmem>>, %arg3: memref<896x512xbf16, #tpu.memory_space<vmem>>, %arg4: memref<1x512xf32, #tpu.memory_space<vmem>>, %arg5: memref<512x4xbf16, #tpu.memory_space<vmem>>, %arg6: memref<1x4xf32, #tpu.memory_space<vmem>>, %arg7: memref<2x512xf32, #tpu.memory_space<vmem>>, %arg8: memref<1x512xf32, #tpu.memory_space<vmem>>, %arg9: memref<512x896xbf16, #tpu.memory_space<vmem>>, %arg10: memref<1x896xf32, #tpu.memory_space<vmem>>, %arg11: memref<8x896xf32, #tpu.memory_space<vmem>>, %arg12: memref<8x4xf32, #tpu.memory_space<vmem>>) attributes {dimension_semantics = [#tpu.dimension_semantics<parallel>], iteration_bounds = array<i64: 1>, scalar_prefetch = 0 : i64, scratch_operands = 0 : i64, tpu.core_type = #tpu.core_type<tc>, window_params = [{transform_indices = @transform_0, window_bounds = array<i64: 8, 896>}, {transform_indices = @transform_1, window_bounds = array<i64: 8, 2>}, {pipeline_mode = #tpu.pipeline_mode<synchronous>, transform_indices = @transform_2, window_bounds = array<i64: 896, 512>}, {pipeline_mode = #tpu.pipeline_mode<synchronous>, transform_indices = @transform_3, window_bounds = array<i64: 1, 512>}, {pipeline_mode = #tpu.pipeline_mode<synchronous>, transform_indices = @transform_4, window_bounds = array<i64: 512, 4>}, {pipeline_mode = #tpu.pipeline_mode<synchronous>, transform_indices = @transform_5, window_bounds = array<i64: 1, 4>}, {pipeline_mode = #tpu.pipeline_mode<synchronous>, transform_indices = @transform_6, window_bounds = array<i64: 2, 512>}, {pipeline_mode = #tpu.pipeline_mode<synchronous>, transform_indices = @transform_7, window_bounds = array<i64: 1, 512>}, {pipeline_mode = #tpu.pipeline_mode<synchronous>, transform_indices = @transform_8, window_bounds = array<i64: 512, 896>}, {pipeline_mode = #tpu.pipeline_mode<synchronous>, transform_indices = @transform_9, window_bounds = array<i64: 1, 896>}, {transform_indices = @transform_10, window_bounds = array<i64: 8, 896>}, {transform_indices = @transform_11, window_bounds = array<i64: 8, 4>}]} {
    %c0 = arith.constant 0 : index
    %c0_0 = arith.constant 0 : index
    %0 = vector.load %arg1[%c0, %c0_0] : memref<8x896xf32, #tpu.memory_space<vmem>>, vector<8x896xf32>
    %1 = arith.truncf %0 : vector<8x896xf32> to vector<8x896xbf16>
    %c0_1 = arith.constant 0 : index
    %c0_2 = arith.constant 0 : index
    %2 = vector.load %arg3[%c0_1, %c0_2] : memref<896x512xbf16, #tpu.memory_space<vmem>>, vector<896x512xbf16>
    %cst = arith.constant dense<0.000000e+00> : vector<8x512xf32>
    %3 = tpu.matmul %1, %2, %cst {dimension_numbers = #tpu.dot_dimension_numbers<[1], [0], [0], [1], [0, 0, 1, 1], [], []>} : vector<8x896xbf16>, vector<896x512xbf16>, vector<8x512xf32> -> vector<8x512xf32>
    %c0_3 = arith.constant 0 : index
    %c0_4 = arith.constant 0 : index
    %4 = vector.load %arg4[%c0_3, %c0_4] : memref<1x512xf32, #tpu.memory_space<vmem>>, vector<1x512xf32>
    %5 = vector.broadcast %4 : vector<1x512xf32> to vector<8x512xf32>
    %6 = arith.addf %3, %5 : vector<8x512xf32>
    %cst_5 = arith.constant 0.000000e+00 : f32
    %7 = vector.broadcast %cst_5 : f32 to vector<8x512xf32>
    %8 = arith.maximumf %6, %7 : vector<8x512xf32>
    %9 = arith.truncf %8 : vector<8x512xf32> to vector<8x512xbf16>
    %c0_6 = arith.constant 0 : index
    %c0_7 = arith.constant 0 : index
    %10 = vector.load %arg5[%c0_6, %c0_7] : memref<512x4xbf16, #tpu.memory_space<vmem>>, vector<512x4xbf16>
    %cst_8 = arith.constant dense<0.000000e+00> : vector<8x4xf32>
    %11 = tpu.matmul %9, %10, %cst_8 {dimension_numbers = #tpu.dot_dimension_numbers<[1], [0], [0], [1], [0, 0, 1, 1], [], []>} : vector<8x512xbf16>, vector<512x4xbf16>, vector<8x4xf32> -> vector<8x4xf32>
    %c0_9 = arith.constant 0 : index
    %c0_10 = arith.constant 0 : index
    %12 = vector.load %arg6[%c0_9, %c0_10] : memref<1x4xf32, #tpu.memory_space<vmem>>, vector<1x4xf32>
    %13 = vector.broadcast %12 : vector<1x4xf32> to vector<8x4xf32>
    %14 = arith.addf %11, %13 : vector<8x4xf32>
    %15 = vector.extract_strided_slice %14 {offsets = [0, 0], sizes = [8, 2], strides = [1, 1]} : vector<8x4xf32> to vector<8x2xf32>
    %16 = vector.extract_strided_slice %14 {offsets = [0, 2], sizes = [8, 2], strides = [1, 1]} : vector<8x4xf32> to vector<8x2xf32>
    %17 = math.exp %16 : vector<8x2xf32>
    %c0_11 = arith.constant 0 : index
    %c0_12 = arith.constant 0 : index
    %18 = vector.load %arg2[%c0_11, %c0_12] : memref<8x2xf32, #tpu.memory_space<vmem>>, vector<8x2xf32>
    %19 = arith.mulf %17, %18 : vector<8x2xf32>
    %20 = arith.addf %15, %19 : vector<8x2xf32>
    %c0_13 = arith.constant 0 : index
    %c0_14 = arith.constant 0 : index
    %21 = vector.load %arg12[%c0_13, %c0_14] : memref<8x4xf32, #tpu.memory_space<vmem>>, vector<8x4xf32>
    tpu.vector_store %arg12[%c0_13, %c0_14], %14 {strides = array<i32>} : memref<8x4xf32, #tpu.memory_space<vmem>>, vector<8x4xf32>,
    %c0_15 = arith.constant 0 : index
    %c0_16 = arith.constant 0 : index
    %22 = vector.load %arg7[%c0_15, %c0_16] : memref<2x512xf32, #tpu.memory_space<vmem>>, vector<2x512xf32>
    %c0_17 = arith.constant 0 : index
    %c0_18 = arith.constant 0 : index
    %23 = vector.load %arg8[%c0_17, %c0_18] : memref<1x512xf32, #tpu.memory_space<vmem>>, vector<1x512xf32>
    %24 = vector.extract_strided_slice %20 {offsets = [0, 0], sizes = [8, 1], strides = [1, 1]} : vector<8x2xf32> to vector<8x1xf32>
    %25 = vector.extract_strided_slice %22 {offsets = [0, 0], sizes = [1, 512], strides = [1, 1]} : vector<2x512xf32> to vector<1x512xf32>
    %26 = vector.broadcast %24 : vector<8x1xf32> to vector<8x512xf32>
    %27 = vector.broadcast %25 : vector<1x512xf32> to vector<8x512xf32>
    %28 = arith.mulf %26, %27 : vector<8x512xf32>
    %29 = vector.broadcast %23 : vector<1x512xf32> to vector<8x512xf32>
    %30 = arith.addf %29, %28 : vector<8x512xf32>
    %31 = vector.extract_strided_slice %20 {offsets = [0, 1], sizes = [8, 1], strides = [1, 1]} : vector<8x2xf32> to vector<8x1xf32>
    %32 = vector.extract_strided_slice %22 {offsets = [1, 0], sizes = [1, 512], strides = [1, 1]} : vector<2x512xf32> to vector<1x512xf32>
    %33 = vector.broadcast %31 : vector<8x1xf32> to vector<8x512xf32>
    %34 = vector.broadcast %32 : vector<1x512xf32> to vector<8x512xf32>
    %35 = arith.mulf %33, %34 : vector<8x512xf32>
    %36 = arith.addf %30, %35 : vector<8x512xf32>
    %cst_19 = arith.constant 0.000000e+00 : f32
    %37 = vector.broadcast %cst_19 : f32 to vector<8x512xf32>
    %38 = arith.maximumf %36, %37 : vector<8x512xf32>
    %39 = arith.truncf %38 : vector<8x512xf32> to vector<8x512xbf16>
    %c0_20 = arith.constant 0 : index
    %c0_21 = arith.constant 0 : index
    %40 = vector.load %arg9[%c0_20, %c0_21] : memref<512x896xbf16, #tpu.memory_space<vmem>>, vector<512x896xbf16>
    %cst_22 = arith.constant dense<0.000000e+00> : vector<8x896xf32>
    %41 = tpu.matmul %39, %40, %cst_22 {dimension_numbers = #tpu.dot_dimension_numbers<[1], [0], [0], [1], [0, 0, 1, 1], [], []>} : vector<8x512xbf16>, vector<512x896xbf16>, vector<8x896xf32> -> vector<8x896xf32>
    %c0_23 = arith.constant 0 : index
    %c0_24 = arith.constant 0 : index
    %42 = vector.load %arg10[%c0_23, %c0_24] : memref<1x896xf32, #tpu.memory_space<vmem>>, vector<1x896xf32>
    %43 = vector.broadcast %42 : vector<1x896xf32> to vector<8x896xf32>
    %44 = arith.addf %41, %43 : vector<8x896xf32>
    %45 = arith.negf %44 : vector<8x896xf32>
    %46 = math.exp %45 : vector<8x896xf32>
    %cst_25 = arith.constant 1.000000e+00 : f32
    %47 = vector.broadcast %cst_25 : f32 to vector<8x896xf32>
    %48 = arith.addf %47, %46 : vector<8x896xf32>
    %49 = arith.divf %47, %48 : vector<8x896xf32>
    %c0_26 = arith.constant 0 : index
    %c0_27 = arith.constant 0 : index
    %50 = vector.load %arg11[%c0_26, %c0_27] : memref<8x896xf32, #tpu.memory_space<vmem>>, vector<8x896xf32>
    tpu.vector_store %arg11[%c0_26, %c0_27], %49 {strides = array<i32>} : memref<8x896xf32, #tpu.memory_space<vmem>>, vector<8x896xf32>,
    return
  }
  func.func @transform_0(%arg0: i32) -> (i32, i32) {
    %c0_i32 = arith.constant 0 : i32
    %c0_i32_0 = arith.constant 0 : i32
    return %arg0, %c0_i32 : i32, i32
  }
  func.func @transform_1(%arg0: i32) -> (i32, i32) {
    %c0_i32 = arith.constant 0 : i32
    %c0_i32_0 = arith.constant 0 : i32
    return %arg0, %c0_i32 : i32, i32
  }
  func.func @transform_2(%arg0: i32) -> (i32, i32) {
    %c0_i32 = arith.constant 0 : i32
    %c0_i32_0 = arith.constant 0 : i32
    %c0_i32_1 = arith.constant 0 : i32
    return %c0_i32, %c0_i32_0 : i32, i32
  }
  func.func @transform_3(%arg0: i32) -> (i32, i32) {
    %c0_i32 = arith.constant 0 : i32
    %c0_i32_0 = arith.constant 0 : i32
    %c0_i32_1 = arith.constant 0 : i32
    return %c0_i32, %c0_i32_0 : i32, i32
  }
  func.func @transform_4(%arg0: i32) -> (i32, i32) {
    %c0_i32 = arith.constant 0 : i32
    %c0_i32_0 = arith.constant 0 : i32
    %c0_i32_1 = arith.constant 0 : i32
    return %c0_i32, %c0_i32_0 : i32, i32
  }
  func.func @transform_5(%arg0: i32) -> (i32, i32) {
    %c0_i32 = arith.constant 0 : i32
    %c0_i32_0 = arith.constant 0 : i32
    %c0_i32_1 = arith.constant 0 : i32
    return %c0_i32, %c0_i32_0 : i32, i32
  }
  func.func @transform_6(%arg0: i32) -> (i32, i32) {
    %c0_i32 = arith.constant 0 : i32
    %c0_i32_0 = arith.constant 0 : i32
    %c0_i32_1 = arith.constant 0 : i32
    return %c0_i32, %c0_i32_0 : i32, i32
  }
  func.func @transform_7(%arg0: i32) -> (i32, i32) {
    %c0_i32 = arith.constant 0 : i32
    %c0_i32_0 = arith.constant 0 : i32
    %c0_i32_1 = arith.constant 0 : i32
    return %c0_i32, %c0_i32_0 : i32, i32
  }
  func.func @transform_8(%arg0: i32) -> (i32, i32) {
    %c0_i32 = arith.constant 0 : i32
    %c0_i32_0 = arith.constant 0 : i32
    %c0_i32_1 = arith.constant 0 : i32
    return %c0_i32, %c0_i32_0 : i32, i32
  }
  func.func @transform_9(%arg0: i32) -> (i32, i32) {
    %c0_i32 = arith.constant 0 : i32
    %c0_i32_0 = arith.constant 0 : i32
    %c0_i32_1 = arith.constant 0 : i32
    return %c0_i32, %c0_i32_0 : i32, i32
  }
  func.func @transform_10(%arg0: i32) -> (i32, i32) {
    %c0_i32 = arith.constant 0 : i32
    %c0_i32_0 = arith.constant 0 : i32
    return %arg0, %c0_i32 : i32, i32
  }
  func.func @transform_11(%arg0: i32) -> (i32, i32) {
    %c0_i32 = arith.constant 0 : i32
    %c0_i32_0 = arith.constant 0 : i32
    return %arg0, %c0_i32 : i32, i32
  }
}

</mosaic_0001>

<llo_original>
// kernel: vae_forward.1
$region0: #{vae_forward.1}
  #allocation0 [shape = 'u32[]', space=smem, size = 0x4, offset = 0x4, fixed_abs, tag = 'smem constant byte address 0x4 - core index']
  #allocation1 [shape = 'u32[144,128]{1,0:T(1,128)}', space=vmem, size = 0x12000, scoped, tag = 'internal scratch']
  %s0 = inlined_call_operand.vmem [shape: f32[8,896], index: 0, kind: input, shape index: {}]
  %s1 = inlined_call_operand.vmem [shape: f32[8,2], index: 1, kind: input, shape index: {}]
  %s2 = inlined_call_operand.hbm [shape: bf16[896,512], index: 2, kind: input, shape index: {}]
  %s3 = inlined_call_operand.vmem [shape: f32[1,512], index: 3, kind: input, shape index: {}]
  %s4 = inlined_call_operand.vmem [shape: bf16[512,4], index: 4, kind: input, shape index: {}]
  %s5 = inlined_call_operand.vmem [shape: f32[1,4], index: 5, kind: input, shape index: {}]
  %s6 = inlined_call_operand.vmem [shape: f32[2,512], index: 6, kind: input, shape index: {}]
  %s7 = inlined_call_operand.vmem [shape: f32[1,512], index: 7, kind: input, shape index: {}]
  %s8 = inlined_call_operand.hbm [shape: bf16[512,896], index: 8, kind: input, shape index: {}]
  %s9 = inlined_call_operand.vmem [shape: f32[1,896], index: 9, kind: input, shape index: {}]
  %s10 = inlined_call_operand.vmem [shape: f32[8,896], index: 10, kind: output, shape index: {0}]
  %s11 = inlined_call_operand.vmem [shape: f32[8,4], index: 11, kind: output, shape index: {1}]
  %12 = xla_tuple %s10, %s11
  %s13 = sld [smem:[#allocation0]]
  $region66: #{vae_forward.1} parent=0
    _
  %s15 = ssub.s32 1, %s13
  %s16 = scalar_select 0, %s15, %s13
  $region1: #{vae_forward.1} parent=0
    #allocation2 [shape = 'u8[917504]{0}', space=vmem, size = 0xe0000, scoped, tag = 'input window, operand 2, single buffered']
    #allocation3 [shape = 's32[1]{0}', space=sflag, size = 0x4, scoped, tag = 'scoped memory for vae_forward.1']
    #allocation4 [shape = 'u8[917504]{0}', space=vmem, size = 0xe0000, scoped, tag = 'input window, operand 8, single buffered']
    #allocation5 [shape = 's32[1]{0}', space=sflag, size = 0x4, scoped, tag = 'scoped memory for vae_forward.1']
    %17 = vsyncpa [#allocation3], 0
    %18 = vsyncpa [#allocation5], 0
    // Predicated region
    $region2: #{vae_forward.1} parent=1 // pred_check
      _
    $region3: #{vae_forward.1} parent=1 // pred_check_branch
      %20 = sbr.rel (0) target = $region5
    $region4: #{vae_forward.1} parent=1 // pred_region
      _
    $region5: #{vae_forward.1} parent=1 // pred_fallthru
      _
    // Predicated region
    $region6: #{vae_forward.1} parent=1 // pred_check
      _
    $region7: #{vae_forward.1} parent=1 // pred_check_branch
      %22 = sbr.rel (0) target = $region9
    $region8: #{vae_forward.1} parent=1 // pred_region
      _
    $region9: #{vae_forward.1} parent=1 // pred_fallthru
      _
    // Predicated region
    $region10: #{vae_forward.1} parent=1 // pred_check
      _
    $region11: #{vae_forward.1} parent=1 // pred_check_branch
      %24 = sbr.rel (0) target = $region13
    $region12: #{vae_forward.1} parent=1 // pred_region
      %s26 = ssub.s32 28672, 28672
      %27 = vsyncadd [#allocation3], %s26
      %s28 = sshll.u32 [#allocation2], 4
      %s29 = int_to_ptr.vmem [resolvable:$true] %s28
      %34 = dma.hbm_to_vmem [thread:$0]  %s2, 28672, %s29, [#allocation3], 256, 256, 16
    $region13: #{vae_forward.1} parent=1 // pred_fallthru
      _
    // Predicated region
    $region14: #{vae_forward.1} parent=1 // pred_check
      _
    $region15: #{vae_forward.1} parent=1 // pred_check_branch
      %36 = sbr.rel (0) target = $region17
    $region16: #{vae_forward.1} parent=1 // pred_region
      _
    $region17: #{vae_forward.1} parent=1 // pred_fallthru
      _
    // Predicated region
    $region18: #{vae_forward.1} parent=1 // pred_check
      _
    $region19: #{vae_forward.1} parent=1 // pred_check_branch
      %38 = sbr.rel (0) target = $region21
    $region20: #{vae_forward.1} parent=1 // pred_region
      _
    $region21: #{vae_forward.1} parent=1 // pred_fallthru
      _
    // Predicated region
    $region22: #{vae_forward.1} parent=1 // pred_check
      _
    $region23: #{vae_forward.1} parent=1 // pred_check_branch
      %40 = sbr.rel (0) target = $region25
    $region24: #{vae_forward.1} parent=1 // pred_region
      _
    $region25: #{vae_forward.1} parent=1 // pred_fallthru
      _
    // Predicated region
    $region26: #{vae_forward.1} parent=1 // pred_check
      _
    $region27: #{vae_forward.1} parent=1 // pred_check_branch
      %42 = sbr.rel (0) target = $region29
    $region28: #{vae_forward.1} parent=1 // pred_region
      _
    $region29: #{vae_forward.1} parent=1 // pred_fallthru
      _
    // Predicated region
    $region30: #{vae_forward.1} parent=1 // pred_check
      _
    $region31: #{vae_forward.1} parent=1 // pred_check_branch
      %44 = sbr.rel (0) target = $region33
    $region32: #{vae_forward.1} parent=1 // pred_region
      _
    $region33: #{vae_forward.1} parent=1 // pred_fallthru
      _
    // Predicated region
    $region34: #{vae_forward.1} parent=1 // pred_check
      _
    $region35: #{vae_forward.1} parent=1 // pred_check_branch
      %46 = sbr.rel (0) target = $region37
    $region36: #{vae_forward.1} parent=1 // pred_region
      %s48 = ssub.s32 28672, 28672
      %49 = vsyncadd [#allocation5], %s48
      %s50 = sshll.u32 [#allocation4], 4
      %s51 = int_to_ptr.vmem [resolvable:$true] %s50
      %56 = dma.hbm_to_vmem [thread:$0]  %s8, 28672, %s51, [#allocation5], 448, 448, 28
    $region37: #{vae_forward.1} parent=1 // pred_fallthru
      _
    // Predicated region
    $region38: #{vae_forward.1} parent=1 // pred_check
      _
    $region39: #{vae_forward.1} parent=1 // pred_check_branch
      %58 = sbr.rel (0) target = $region41
    $region40: #{vae_forward.1} parent=1 // pred_region
      _
    $region41: #{vae_forward.1} parent=1 // pred_fallthru
      _
    // Predicated region
    $region42: #{vae_forward.1} parent=1 // pred_check
      _
    $region43: #{vae_forward.1} parent=1 // pred_check_branch
      %60 = sbr.rel (0) target = $region45
    $region44: #{vae_forward.1} parent=1 // pred_region
      %61 = dma.done [#allocation3], 28672
    $region45: #{vae_forward.1} parent=1 // pred_fallthru
      _
    // Predicated region
    $region46: #{vae_forward.1} parent=1 // pred_check
      _
    $region47: #{vae_forward.1} parent=1 // pred_check_branch
      %63 = sbr.rel (0) target = $region49
    $region48: #{vae_forward.1} parent=1 // pred_region
      %64 = dma.done [#allocation5], 28672
    $region49: #{vae_forward.1} parent=1 // pred_fallthru
      _
    %v66 = vld [vmem:[%s0] sm:$0xff]
    %v67 = vld [vmem:[%s0 + $0x8] sm:$0xff]
    %v68 = vld [vmem:[%s0 + $0x10] sm:$0xff]
    %v69 = vld [vmem:[%s0 + $0x18] sm:$0xff]
    %v70 = vld [vmem:[%s0 + $0x20] sm:$0xff]
    %v71 = vld [vmem:[%s0 + $0x28] sm:$0xff]
    %v72 = vld [vmem:[%s0 + $0x30] sm:$0xff]
    %v73 = vpack.c.bf16 %v66, %v66
    %v74 = vpack.c.bf16 %v67, %v67
    %v75 = vpack.c.bf16 %v68, %v68
    %v76 = vpack.c.bf16 %v69, %v69
    %v77 = vpack.c.bf16 %v70, %v70
    %v78 = vpack.c.bf16 %v71, %v71
    %v79 = vpack.c.bf16 %v72, %v72
    %v80 = vld [vmem:[#allocation2] sm:$0xff]
    %v81 = vld [vmem:[#allocation2 + $0x8] sm:$0xff]
    %v82 = vld [vmem:[#allocation2 + $0x10] sm:$0xff]
    %v83 = vld [vmem:[#allocation2 + $0x18] sm:$0xff]
    %v84 = vld [vmem:[#allocation2 + $0x20] sm:$0xff]
    %v85 = vld [vmem:[#allocation2 + $0x28] sm:$0xff]
    %v86 = vld [vmem:[#allocation2 + $0x30] sm:$0xff]
    %v87 = vld [vmem:[#allocation2 + $0x38] sm:$0xff]
    %v88 = vld [vmem:[#allocation2 + $0x40] sm:$0xff]
    %v89 = vld [vmem:[#allocation2 + $0x48] sm:$0xff]
    %v90 = vld [vmem:[#allocation2 + $0x50] sm:$0xff]
    %v91 = vld [vmem:[#allocation2 + $0x58] sm:$0xff]
    %v92 = vld [vmem:[#allocation2 + $0x60] sm:$0xff]
    %v93 = vld [vmem:[#allocation2 + $0x68] sm:$0xff]
    %v94 = vld [vmem:[#allocation2 + $0x70] sm:$0xff]
    %v95 = vld [vmem:[#allocation2 + $0x78] sm:$0xff]
    %v96 = vld [vmem:[#allocation2 + $0x80] sm:$0xff]
    %v97 = vld [vmem:[#allocation2 + $0x88] sm:$0xff]
    %v98 = vld [vmem:[#allocation2 + $0x90] sm:$0xff]
    %v99 = vld [vmem:[#allocation2 + $0x98] sm:$0xff]
    %v100 = vld [vmem:[#allocation2 + $0xa0] sm:$0xff]
    %v101 = vld [vmem:[#allocation2 + $0xa8] sm:$0xff]
    %v102 = vld [vmem:[#allocation2 + $0xb0] sm:$0xff]
    %v103 = vld [vmem:[#allocation2 + $0xb8] sm:$0xff]
    %v104 = vld [vmem:[#allocation2 + $0xc0] sm:$0xff]
    %v105 = vld [vmem:[#allocation2 + $0xc8] sm:$0xff]
    %v106 = vld [vmem:[#allocation2 + $0xd0] sm:$0xff]
    %v107 = vld [vmem:[#allocation2 + $0xd8] sm:$0xff]
    %v108 = vld [vmem:[#allocation2 + $0xe0] sm:$0xff]
    %v109 = vld [vmem:[#allocation2 + $0xe8] sm:$0xff]
    %v110 = vld [vmem:[#allocation2 + $0xf0] sm:$0xff]
    %v111 = vld [vmem:[#allocation2 + $0xf8] sm:$0xff]
    %v112 = vld [vmem:[#allocation2 + $0x100] sm:$0xff]
    %v113 = vld [vmem:[#allocation2 + $0x108] sm:$0xff]
    %v114 = vld [vmem:[#allocation2 + $0x110] sm:$0xff]
    %v115 = vld [vmem:[#allocation2 + $0x118] sm:$0xff]
    %v116 = vld [vmem:[#allocation2 + $0x120] sm:$0xff]
    %v117 = vld [vmem:[#allocation2 + $0x128] sm:$0xff]
    %v118 = vld [vmem:[#allocation2 + $0x130] sm:$0xff]
    %v119 = vld [vmem:[#allocation2 + $0x138] sm:$0xff]
    %v120 = vld [vmem:[#allocation2 + $0x140] sm:$0xff]
    %v121 = vld [vmem:[#allocation2 + $0x148] sm:$0xff]
    %v122 = vld [vmem:[#allocation2 + $0x150] sm:$0xff]
    %v123 = vld [vmem:[#allocation2 + $0x158] sm:$0xff]
    %v124 = vld [vmem:[#allocation2 + $0x160] sm:$0xff]
    %v125 = vld [vmem:[#allocation2 + $0x168] sm:$0xff]
    %v126 = vld [vmem:[#allocation2 + $0x170] sm:$0xff]
    %v127 = vld [vmem:[#allocation2 + $0x178] sm:$0xff]
    %v128 = vld [vmem:[#allocation2 + $0x180] sm:$0xff]
    %v129 = vld [vmem:[#allocation2 + $0x188] sm:$0xff]
    %v130 = vld [vmem:[#allocation2 + $0x190] sm:$0xff]
    %v131 = vld [vmem:[#allocation2 + $0x198] sm:$0xff]
    %v132 = vld [vmem:[#allocation2 + $0x1a0] sm:$0xff]
    %v133 = vld [vmem:[#allocation2 + $0x1a8] sm:$0xff]
    %v134 = vld [vmem:[#allocation2 + $0x1b0] sm:$0xff]
    %v135 = vld [vmem:[#allocation2 + $0x1b8] sm:$0xff]
    %v136 = vld [vmem:[#allocation2 + $0x1c0] sm:$0xff]
    %v137 = vld [vmem:[#allocation2 + $0x1c8] sm:$0xff]
    %v138 = vld [vmem:[#allocation2 + $0x1d0] sm:$0xff]
    %v139 = vld [vmem:[#allocation2 + $0x1d8] sm:$0xff]
    %v140 = vld [vmem:[#allocation2 + $0x1e0] sm:$0xff]
    %v141 = vld [vmem:[#allocation2 + $0x1e8] sm:$0xff]
    %v142 = vld [vmem:[#allocation2 + $0x1f0] sm:$0xff]
    %v143 = vld [vmem:[#allocation2 + $0x1f8] sm:$0xff]
    %v144 = vld [vmem:[#allocation2 + $0x200] sm:$0xff]
    %v145 = vld [vmem:[#allocation2 + $0x208] sm:$0xff]
    %v146 = vld [vmem:[#allocation2 + $0x210] sm:$0xff]
    %v147 = vld [vmem:[#allocation2 + $0x218] sm:$0xff]
    %v148 = vld [vmem:[#allocation2 + $0x220] sm:$0xff]
    %v149 = vld [vmem:[#allocation2 + $0x228] sm:$0xff]
    %v150 = vld [vmem:[#allocation2 + $0x230] sm:$0xff]
    %v151 = vld [vmem:[#allocation2 + $0x238] sm:$0xff]
    %v152 = vld [vmem:[#allocation2 + $0x240] sm:$0xff]
    %v153 = vld [vmem:[#allocation2 + $0x248] sm:$0xff]
    %v154 = vld [vmem:[#allocation2 + $0x250] sm:$0xff]
    %v155 = vld [vmem:[#allocation2 + $0x258] sm:$0xff]
    %v156 = vld [vmem:[#allocation2 + $0x260] sm:$0xff]
    %v157 = vld [vmem:[#allocation2 + $0x268] sm:$0xff]
    %v158 = vld [vmem:[#allocation2 + $0x270] sm:$0xff]
    %v159 = vld [vmem:[#allocation2 + $0x278] sm:$0xff]
    %v160 = vld [vmem:[#allocation2 + $0x280] sm:$0xff]
    %v161 = vld [vmem:[#allocation2 + $0x288] sm:$0xff]
    %v162 = vld [vmem:[#allocation2 + $0x290] sm:$0xff]
    %v163 = vld [vmem:[#allocation2 + $0x298] sm:$0xff]
    %v164 = vld [vmem:[#allocation2 + $0x2a0] sm:$0xff]
    %v165 = vld [vmem:[#allocation2 + $0x2a8] sm:$0xff]
    %v166 = vld [vmem:[#allocation2 + $0x2b0] sm:$0xff]
    %v167 = vld [vmem:[#allocation2 + $0x2b8] sm:$0xff]
    %v168 = vld [vmem:[#allocation2 + $0x2c0] sm:$0xff]
    %v169 = vld [vmem:[#allocation2 + $0x2c8] sm:$0xff]
    %v170 = vld [vmem:[#allocation2 + $0x2d0] sm:$0xff]
    %v171 = vld [vmem:[#allocation2 + $0x2d8] sm:$0xff]
    %v172 = vld [vmem:[#allocation2 + $0x2e0] sm:$0xff]
    %v173 = vld [vmem:[#allocation2 + $0x2e8] sm:$0xff]
    %v174 = vld [vmem:[#allocation2 + $0x2f0] sm:$0xff]
    %v175 = vld [vmem:[#allocation2 + $0x2f8] sm:$0xff]
    %v176 = vld [vmem:[#allocation2 + $0x300] sm:$0xff]
    %v177 = vld [vmem:[#allocation2 + $0x308] sm:$0xff]
    %v178 = vld [vmem:[#allocation2 + $0x310] sm:$0xff]
    %v179 = vld [vmem:[#allocation2 + $0x318] sm:$0xff]
    %v180 = vld [vmem:[#allocation2 + $0x320] sm:$0xff]
    %v181 = vld [vmem:[#allocation2 + $0x328] sm:$0xff]
    %v182 = vld [vmem:[#allocation2 + $0x330] sm:$0xff]
    %v183 = vld [vmem:[#allocation2 + $0x338] sm:$0xff]
    %v184 = vld [vmem:[#allocation2 + $0x340] sm:$0xff]
    %v185 = vld [vmem:[#allocation2 + $0x348] sm:$0xff]
    %v186 = vld [vmem:[#allocation2 + $0x350] sm:$0xff]
    %v187 = vld [vmem:[#allocation2 + $0x358] sm:$0xff]
    %v188 = vld [vmem:[#allocation2 + $0x360] sm:$0xff]
    %v189 = vld [vmem:[#allocation2 + $0x368] sm:$0xff]
    %v190 = vld [vmem:[#allocation2 + $0x370] sm:$0xff]
    %v191 = vld [vmem:[#allocation2 + $0x378] sm:$0xff]
    %v192 = vld [vmem:[#allocation2 + $0x380] sm:$0xff]
    %v193 = vld [vmem:[#allocation2 + $0x388] sm:$0xff]
    %v194 = vld [vmem:[#allocation2 + $0x390] sm:$0xff]
    %v195 = vld [vmem:[#allocation2 + $0x398] sm:$0xff]
    %v196 = vld [vmem:[#allocation2 + $0x3a0] sm:$0xff]
    %v197 = vld [vmem:[#allocation2 + $0x3a8] sm:$0xff]
    %v198 = vld [vmem:[#allocation2 + $0x3b0] sm:$0xff]
    %v199 = vld [vmem:[#allocation2 + $0x3b8] sm:$0xff]
    %v200 = vld [vmem:[#allocation2 + $0x3c0] sm:$0xff]
    %v201 = vld [vmem:[#allocation2 + $0x3c8] sm:$0xff]
    %v202 = vld [vmem:[#allocation2 + $0x3d0] sm:$0xff]
    %v203 = vld [vmem:[#allocation2 + $0x3d8] sm:$0xff]
    %v204 = vld [vmem:[#allocation2 + $0x3e0] sm:$0xff]
    %v205 = vld [vmem:[#allocation2 + $0x3e8] sm:$0xff]
    %v206 = vld [vmem:[#allocation2 + $0x3f0] sm:$0xff]
    %v207 = vld [vmem:[#allocation2 + $0x3f8] sm:$0xff]
    %v208 = vld [vmem:[#allocation2 + $0x400] sm:$0xff]
    %v209 = vld [vmem:[#allocation2 + $0x408] sm:$0xff]
    %v210 = vld [vmem:[#allocation2 + $0x410] sm:$0xff]
    %v211 = vld [vmem:[#allocation2 + $0x418] sm:$0xff]
    %v212 = vld [vmem:[#allocation2 + $0x420] sm:$0xff]
    %v213 = vld [vmem:[#allocation2 + $0x428] sm:$0xff]
    %v214 = vld [vmem:[#allocation2 + $0x430] sm:$0xff]
    %v215 = vld [vmem:[#allocation2 + $0x438] sm:$0xff]
    %v216 = vld [vmem:[#allocation2 + $0x440] sm:$0xff]
    %v217 = vld [vmem:[#allocation2 + $0x448] sm:$0xff]
    %v218 = vld [vmem:[#allocation2 + $0x450] sm:$0xff]
    %v219 = vld [vmem:[#allocation2 + $0x458] sm:$0xff]
    %v220 = vld [vmem:[#allocation2 + $0x460] sm:$0xff]
    %v221 = vld [vmem:[#allocation2 + $0x468] sm:$0xff]
    %v222 = vld [vmem:[#allocation2 + $0x470] sm:$0xff]
    %v223 = vld [vmem:[#allocation2 + $0x478] sm:$0xff]
    %v224 = vld [vmem:[#allocation2 + $0x480] sm:$0xff]
    %v225 = vld [vmem:[#allocation2 + $0x488] sm:$0xff]
    %v226 = vld [vmem:[#allocation2 + $0x490] sm:$0xff]
    %v227 = vld [vmem:[#allocation2 + $0x498] sm:$0xff]
    %v228 = vld [vmem:[#allocation2 + $0x4a0] sm:$0xff]
    %v229 = vld [vmem:[#allocation2 + $0x4a8] sm:$0xff]
    %v230 = vld [vmem:[#allocation2 + $0x4b0] sm:$0xff]
    %v231 = vld [vmem:[#allocation2 + $0x4b8] sm:$0xff]
    %v232 = vld [vmem:[#allocation2 + $0x4c0] sm:$0xff]
    %v233 = vld [vmem:[#allocation2 + $0x4c8] sm:$0xff]
    %v234 = vld [vmem:[#allocation2 + $0x4d0] sm:$0xff]
    %v235 = vld [vmem:[#allocation2 + $0x4d8] sm:$0xff]
    %v236 = vld [vmem:[#allocation2 + $0x4e0] sm:$0xff]
    %v237 = vld [vmem:[#allocation2 + $0x4e8] sm:$0xff]
    %v238 = vld [vmem:[#allocation2 + $0x4f0] sm:$0xff]
    %v239 = vld [vmem:[#allocation2 + $0x4f8] sm:$0xff]
    %v240 = vld [vmem:[#allocation2 + $0x500] sm:$0xff]
    %v241 = vld [vmem:[#allocation2 + $0x508] sm:$0xff]
    %v242 = vld [vmem:[#allocation2 + $0x510] sm:$0xff]
    %v243 = vld [vmem:[#allocation2 + $0x518] sm:$0xff]
    %v244 = vld [vmem:[#allocation2 + $0x520] sm:$0xff]
    %v245 = vld [vmem:[#allocation2 + $0x528] sm:$0xff]
    %v246 = vld [vmem:[#allocation2 + $0x530] sm:$0xff]
    %v247 = vld [vmem:[#allocation2 + $0x538] sm:$0xff]
    %v248 = vld [vmem:[#allocation2 + $0x540] sm:$0xff]
    %v249 = vld [vmem:[#allocation2 + $0x548] sm:$0xff]
    %v250 = vld [vmem:[#allocation2 + $0x550] sm:$0xff]
    %v251 = vld [vmem:[#allocation2 + $0x558] sm:$0xff]
    %v252 = vld [vmem:[#allocation2 + $0x560] sm:$0xff]
    %v253 = vld [vmem:[#allocation2 + $0x568] sm:$0xff]
    %v254 = vld [vmem:[#allocation2 + $0x570] sm:$0xff]
    %v255 = vld [vmem:[#allocation2 + $0x578] sm:$0xff]
    %v256 = vld [vmem:[#allocation2 + $0x580] sm:$0xff]
    %v257 = vld [vmem:[#allocation2 + $0x588] sm:$0xff]
    %v258 = vld [vmem:[#allocation2 + $0x590] sm:$0xff]
    %v259 = vld [vmem:[#allocation2 + $0x598] sm:$0xff]
    %v260 = vld [vmem:[#allocation2 + $0x5a0] sm:$0xff]
    %v261 = vld [vmem:[#allocation2 + $0x5a8] sm:$0xff]
    %v262 = vld [vmem:[#allocation2 + $0x5b0] sm:$0xff]
    %v263 = vld [vmem:[#allocation2 + $0x5b8] sm:$0xff]
    %v264 = vld [vmem:[#allocation2 + $0x5c0] sm:$0xff]
    %v265 = vld [vmem:[#allocation2 + $0x5c8] sm:$0xff]
    %v266 = vld [vmem:[#allocation2 + $0x5d0] sm:$0xff]
    %v267 = vld [vmem:[#allocation2 + $0x5d8] sm:$0xff]
    %v268 = vld [vmem:[#allocation2 + $0x5e0] sm:$0xff]
    %v269 = vld [vmem:[#allocation2 + $0x5e8] sm:$0xff]
    %v270 = vld [vmem:[#allocation2 + $0x5f0] sm:$0xff]
    %v271 = vld [vmem:[#allocation2 + $0x5f8] sm:$0xff]
    %v272 = vld [vmem:[#allocation2 + $0x600] sm:$0xff]
    %v273 = vld [vmem:[#allocation2 + $0x608] sm:$0xff]
    %v274 = vld [vmem:[#allocation2 + $0x610] sm:$0xff]
    %v275 = vld [vmem:[#allocation2 + $0x618] sm:$0xff]
    %v276 = vld [vmem:[#allocation2 + $0x620] sm:$0xff]
    %v277 = vld [vmem:[#allocation2 + $0x628] sm:$0xff]
    %v278 = vld [vmem:[#allocation2 + $0x630] sm:$0xff]
    %v279 = vld [vmem:[#allocation2 + $0x638] sm:$0xff]
    %v280 = vld [vmem:[#allocation2 + $0x640] sm:$0xff]
    %v281 = vld [vmem:[#allocation2 + $0x648] sm:$0xff]
    %v282 = vld [vmem:[#allocation2 + $0x650] sm:$0xff]
    %v283 = vld [vmem:[#allocation2 + $0x658] sm:$0xff]
    %v284 = vld [vmem:[#allocation2 + $0x660] sm:$0xff]
    %v285 = vld [vmem:[#allocation2 + $0x668] sm:$0xff]
    %v286 = vld [vmem:[#allocation2 + $0x670] sm:$0xff]
    %v287 = vld [vmem:[#allocation2 + $0x678] sm:$0xff]
    %v288 = vld [vmem:[#allocation2 + $0x680] sm:$0xff]
    %v289 = vld [vmem:[#allocation2 + $0x688] sm:$0xff]
    %v290 = vld [vmem:[#allocation2 + $0x690] sm:$0xff]
    %v291 = vld [vmem:[#allocation2 + $0x698] sm:$0xff]
    %v292 = vld [vmem:[#allocation2 + $0x6a0] sm:$0xff]
    %v293 = vld [vmem:[#allocation2 + $0x6a8] sm:$0xff]
    %v294 = vld [vmem:[#allocation2 + $0x6b0] sm:$0xff]
    %v295 = vld [vmem:[#allocation2 + $0x6b8] sm:$0xff]
    %v296 = vld [vmem:[#allocation2 + $0x6c0] sm:$0xff]
    %v297 = vld [vmem:[#allocation2 + $0x6c8] sm:$0xff]
    %v298 = vld [vmem:[#allocation2 + $0x6d0] sm:$0xff]
    %v299 = vld [vmem:[#allocation2 + $0x6d8] sm:$0xff]
    %v300 = vld [vmem:[#allocation2 + $0x6e0] sm:$0xff]
    %v301 = vld [vmem:[#allocation2 + $0x6e8] sm:$0xff]
    %v302 = vld [vmem:[#allocation2 + $0x6f0] sm:$0xff]
    %v303 = vld [vmem:[#allocation2 + $0x6f8] sm:$0xff]
    %v304 = vld [vmem:[%s3] sm:$0xf]
    %v306 = vlaneseq
    %v307 = vshrl.u32 %v306, 7
    %v308 = vsub.s32 0, %v307
    %v309 = vrot.slane %v304, %v308
    %v310 = vlaneseq
    %v311 = vshrl.u32 %v310, 7
    %v312 = vsub.s32 1, %v311
    %v313 = vrot.slane %v304, %v312
    %v314 = vlaneseq
    %v315 = vshrl.u32 %v314, 7
    %v316 = vsub.s32 2, %v315
    %v317 = vrot.slane %v304, %v316
    %v318 = vlaneseq
    %v319 = vshrl.u32 %v318, 7
    %v320 = vsub.s32 3, %v319
    %v321 = vrot.slane %v304, %v320
    %v550 = vunpack.c.l.b16 %v80
    %v551 = vunpack.c.h.b16 %v80
    %v552 = vunpack.c.l.b16 %v81
    %v553 = vunpack.c.h.b16 %v81
    %v554 = vunpack.c.l.b16 %v82
    %v555 = vunpack.c.h.b16 %v82
    %v556 = vunpack.c.l.b16 %v83
    %v557 = vunpack.c.h.b16 %v83
    %v558 = vunpack.c.l.b16 %v84
    %v559 = vunpack.c.h.b16 %v84
    %v560 = vunpack.c.l.b16 %v85
    %v561 = vunpack.c.h.b16 %v85
    %v562 = vunpack.c.l.b16 %v86
    %v563 = vunpack.c.h.b16 %v86
    %v564 = vunpack.c.l.b16 %v87
    %v565 = vunpack.c.h.b16 %v87
    %v566 = vunpack.c.l.b16 %v88
    %v567 = vunpack.c.h.b16 %v88
    %v568 = vunpack.c.l.b16 %v89
    %v569 = vunpack.c.h.b16 %v89
    %v570 = vunpack.c.l.b16 %v90
    %v571 = vunpack.c.h.b16 %v90
    %v572 = vunpack.c.l.b16 %v91
    %v573 = vunpack.c.h.b16 %v91
    %v574 = vunpack.c.l.b16 %v92
    %v575 = vunpack.c.h.b16 %v92
    %v576 = vunpack.c.l.b16 %v93
    %v577 = vunpack.c.h.b16 %v93
    %v578 = vunpack.c.l.b16 %v94
    %v579 = vunpack.c.h.b16 %v94
    %v580 = vunpack.c.l.b16 %v95
    %v581 = vunpack.c.h.b16 %v95
    %v582 = vunpack.c.l.b16 %v96
    %v583 = vunpack.c.h.b16 %v96
    %v584 = vunpack.c.l.b16 %v97
    %v585 = vunpack.c.h.b16 %v97
    %v586 = vunpack.c.l.b16 %v98
    %v587 = vunpack.c.h.b16 %v98
    %v588 = vunpack.c.l.b16 %v99
    %v589 = vunpack.c.h.b16 %v99
    %v590 = vunpack.c.l.b16 %v100
    %v591 = vunpack.c.h.b16 %v100
    %v592 = vunpack.c.l.b16 %v101
    %v593 = vunpack.c.h.b16 %v101
    %v594 = vunpack.c.l.b16 %v102
    %v595 = vunpack.c.h.b16 %v102
    %v596 = vunpack.c.l.b16 %v103
    %v597 = vunpack.c.h.b16 %v103
    %v598 = vunpack.c.l.b16 %v104
    %v599 = vunpack.c.h.b16 %v104
    %v600 = vunpack.c.l.b16 %v105
    %v601 = vunpack.c.h.b16 %v105
    %v602 = vunpack.c.l.b16 %v106
    %v603 = vunpack.c.h.b16 %v106
    %v604 = vunpack.c.l.b16 %v107
    %v605 = vunpack.c.h.b16 %v107
    %v606 = vunpack.c.l.b16 %v108
    %v607 = vunpack.c.h.b16 %v108
    %v608 = vunpack.c.l.b16 %v109
    %v609 = vunpack.c.h.b16 %v109
    %v610 = vunpack.c.l.b16 %v110
    %v611 = vunpack.c.h.b16 %v110
    %v612 = vunpack.c.l.b16 %v111
    %v613 = vunpack.c.h.b16 %v111
    %v614 = vunpack.c.l.b16 %v112
    %v615 = vunpack.c.h.b16 %v112
    %v616 = vunpack.c.l.b16 %v113
    %v617 = vunpack.c.h.b16 %v113
    %v618 = vunpack.c.l.b16 %v114
    %v619 = vunpack.c.h.b16 %v114
    %v620 = vunpack.c.l.b16 %v115
    %v621 = vunpack.c.h.b16 %v115
    %v622 = vunpack.c.l.b16 %v116
    %v623 = vunpack.c.h.b16 %v116
    %v624 = vunpack.c.l.b16 %v117
    %v625 = vunpack.c.h.b16 %v117
    %v626 = vunpack.c.l.b16 %v118
    %v627 = vunpack.c.h.b16 %v118
    %v628 = vunpack.c.l.b16 %v119
    %v629 = vunpack.c.h.b16 %v119
    %v630 = vunpack.c.l.b16 %v120
    %v631 = vunpack.c.h.b16 %v120
    %v632 = vunpack.c.l.b16 %v121
    %v633 = vunpack.c.h.b16 %v121
    %v634 = vunpack.c.l.b16 %v122
    %v635 = vunpack.c.h.b16 %v122
    %v636 = vunpack.c.l.b16 %v123
    %v637 = vunpack.c.h.b16 %v123
    %v638 = vunpack.c.l.b16 %v124
    %v639 = vunpack.c.h.b16 %v124
    %v640 = vunpack.c.l.b16 %v125
    %v641 = vunpack.c.h.b16 %v125
    %v642 = vunpack.c.l.b16 %v126
    %v643 = vunpack.c.h.b16 %v126
    %v644 = vunpack.c.l.b16 %v127
    %v645 = vunpack.c.h.b16 %v127
    %v646 = vunpack.c.l.b16 %v128
    %v647 = vunpack.c.h.b16 %v128
    %v648 = vunpack.c.l.b16 %v129
    %v649 = vunpack.c.h.b16 %v129
    %v650 = vunpack.c.l.b16 %v130
    %v651 = vunpack.c.h.b16 %v130
    %v652 = vunpack.c.l.b16 %v131
    %v653 = vunpack.c.h.b16 %v131
    %v654 = vunpack.c.l.b16 %v132
    %v655 = vunpack.c.h.b16 %v132
    %v656 = vunpack.c.l.b16 %v133
    %v657 = vunpack.c.h.b16 %v133
    %v658 = vunpack.c.l.b16 %v134
    %v659 = vunpack.c.h.b16 %v134
    %v660 = vunpack.c.l.b16 %v135
    %v661 = vunpack.c.h.b16 %v135
    %v662 = vunpack.c.l.b16 %v136
    %v663 = vunpack.c.h.b16 %v136
    %v664 = vunpack.c.l.b16 %v137
    %v665 = vunpack.c.h.b16 %v137
    %v666 = vunpack.c.l.b16 %v138
    %v667 = vunpack.c.h.b16 %v138
    %v668 = vunpack.c.l.b16 %v139
    %v669 = vunpack.c.h.b16 %v139
    %v670 = vunpack.c.l.b16 %v140
    %v671 = vunpack.c.h.b16 %v140
    %v672 = vunpack.c.l.b16 %v141
    %v673 = vunpack.c.h.b16 %v141
    %v674 = vunpack.c.l.b16 %v142
    %v675 = vunpack.c.h.b16 %v142
    %v676 = vunpack.c.l.b16 %v143
    %v677 = vunpack.c.h.b16 %v143
    %v678 = vunpack.c.l.b16 %v144
    %v679 = vunpack.c.h.b16 %v144
    %v680 = vunpack.c.l.b16 %v145
    %v681 = vunpack.c.h.b16 %v145
    %v682 = vunpack.c.l.b16 %v146
    %v683 = vunpack.c.h.b16 %v146
    %v684 = vunpack.c.l.b16 %v147
    %v685 = vunpack.c.h.b16 %v147
    %v686 = vunpack.c.l.b16 %v148
    %v687 = vunpack.c.h.b16 %v148
    %v688 = vunpack.c.l.b16 %v149
    %v689 = vunpack.c.h.b16 %v149
    %v690 = vunpack.c.l.b16 %v150
    %v691 = vunpack.c.h.b16 %v150
    %v692 = vunpack.c.l.b16 %v151
    %v693 = vunpack.c.h.b16 %v151
    %v694 = vunpack.c.l.b16 %v152
    %v695 = vunpack.c.h.b16 %v152
    %v696 = vunpack.c.l.b16 %v153
    %v697 = vunpack.c.h.b16 %v153
    %v698 = vunpack.c.l.b16 %v154
    %v699 = vunpack.c.h.b16 %v154
    %v700 = vunpack.c.l.b16 %v155
    %v701 = vunpack.c.h.b16 %v155
    %v702 = vunpack.c.l.b16 %v156
    %v703 = vunpack.c.h.b16 %v156
    %v704 = vunpack.c.l.b16 %v157
    %v705 = vunpack.c.h.b16 %v157
    %v706 = vunpack.c.l.b16 %v158
    %v707 = vunpack.c.h.b16 %v158
    %v708 = vunpack.c.l.b16 %v159
    %v709 = vunpack.c.h.b16 %v159
    %v710 = vunpack.c.l.b16 %v160
    %v711 = vunpack.c.h.b16 %v160
    %v712 = vunpack.c.l.b16 %v161
    %v713 = vunpack.c.h.b16 %v161
    %v714 = vunpack.c.l.b16 %v162
    %v715 = vunpack.c.h.b16 %v162
    %v716 = vunpack.c.l.b16 %v163
    %v717 = vunpack.c.h.b16 %v163
    %v718 = vunpack.c.l.b16 %v164
    %v719 = vunpack.c.h.b16 %v164
    %v720 = vunpack.c.l.b16 %v165
    %v721 = vunpack.c.h.b16 %v165
    %v722 = vunpack.c.l.b16 %v166
    %v723 = vunpack.c.h.b16 %v166
    %v724 = vunpack.c.l.b16 %v167
    %v725 = vunpack.c.h.b16 %v167
    %v726 = vunpack.c.l.b16 %v168
    %v727 = vunpack.c.h.b16 %v168
    %v728 = vunpack.c.l.b16 %v169
    %v729 = vunpack.c.h.b16 %v169
    %v730 = vunpack.c.l.b16 %v170
    %v731 = vunpack.c.h.b16 %v170
    %v732 = vunpack.c.l.b16 %v171
    %v733 = vunpack.c.h.b16 %v171
    %v734 = vunpack.c.l.b16 %v172
    %v735 = vunpack.c.h.b16 %v172
    %v736 = vunpack.c.l.b16 %v173
    %v737 = vunpack.c.h.b16 %v173
    %v738 = vunpack.c.l.b16 %v174
    %v739 = vunpack.c.h.b16 %v174
    %v740 = vunpack.c.l.b16 %v175
    %v741 = vunpack.c.h.b16 %v175
    %v742 = vunpack.c.l.b16 %v176
    %v743 = vunpack.c.h.b16 %v176
    %v744 = vunpack.c.l.b16 %v177
    %v745 = vunpack.c.h.b16 %v177
    %v746 = vunpack.c.l.b16 %v178
    %v747 = vunpack.c.h.b16 %v178
    %v748 = vunpack.c.l.b16 %v179
    %v749 = vunpack.c.h.b16 %v179
    %v750 = vunpack.c.l.b16 %v180
    %v751 = vunpack.c.h.b16 %v180
    %v752 = vunpack.c.l.b16 %v181
    %v753 = vunpack.c.h.b16 %v181
    %v754 = vunpack.c.l.b16 %v182
    %v755 = vunpack.c.h.b16 %v182
    %v756 = vunpack.c.l.b16 %v183
    %v757 = vunpack.c.h.b16 %v183
    %v758 = vunpack.c.l.b16 %v184
    %v759 = vunpack.c.h.b16 %v184
    %v760 = vunpack.c.l.b16 %v185
    %v761 = vunpack.c.h.b16 %v185
    %v762 = vunpack.c.l.b16 %v186
    %v763 = vunpack.c.h.b16 %v186
    %v764 = vunpack.c.l.b16 %v187
    %v765 = vunpack.c.h.b16 %v187
    %v766 = vunpack.c.l.b16 %v188
    %v767 = vunpack.c.h.b16 %v188
    %v768 = vunpack.c.l.b16 %v189
    %v769 = vunpack.c.h.b16 %v189
    %v770 = vunpack.c.l.b16 %v190
    %v771 = vunpack.c.h.b16 %v190
    %v772 = vunpack.c.l.b16 %v191
    %v773 = vunpack.c.h.b16 %v191
    %v774 = vunpack.c.l.b16 %v192
    %v775 = vunpack.c.h.b16 %v192
    %v776 = vunpack.c.l.b16 %v193
    %v777 = vunpack.c.h.b16 %v193
    %v778 = vunpack.c.l.b16 %v194
    %v779 = vunpack.c.h.b16 %v194
    %v780 = vunpack.c.l.b16 %v195
    %v781 = vunpack.c.h.b16 %v195
    %v782 = vunpack.c.l.b16 %v196
    %v783 = vunpack.c.h.b16 %v196
    %v784 = vunpack.c.l.b16 %v197
    %v785 = vunpack.c.h.b16 %v197
    %v786 = vunpack.c.l.b16 %v198
    %v787 = vunpack.c.h.b16 %v198
    %v788 = vunpack.c.l.b16 %v199
    %v789 = vunpack.c.h.b16 %v199
    %v790 = vunpack.c.l.b16 %v200
    %v791 = vunpack.c.h.b16 %v200
    %v792 = vunpack.c.l.b16 %v201
    %v793 = vunpack.c.h.b16 %v201
    %v794 = vunpack.c.l.b16 %v202
    %v795 = vunpack.c.h.b16 %v202
    %v796 = vunpack.c.l.b16 %v203
    %v797 = vunpack.c.h.b16 %v203
    %v798 = vunpack.c.l.b16 %v204
    %v799 = vunpack.c.h.b16 %v204
    %v800 = vunpack.c.l.b16 %v205
    %v801 = vunpack.c.h.b16 %v205
    %v802 = vunpack.c.l.b16 %v206
    %v803 = vunpack.c.h.b16 %v206
    %v804 = vunpack.c.l.b16 %v207
    %v805 = vunpack.c.h.b16 %v207
    %v806 = vunpack.c.l.b16 %v208
    %v807 = vunpack.c.h.b16 %v208
    %v808 = vunpack.c.l.b16 %v209
    %v809 = vunpack.c.h.b16 %v209
    %v810 = vunpack.c.l.b16 %v210
    %v811 = vunpack.c.h.b16 %v210
    %v812 = vunpack.c.l.b16 %v211
    %v813 = vunpack.c.h.b16 %v211
    %v814 = vunpack.c.l.b16 %v212
    %v815 = vunpack.c.h.b16 %v212
    %v816 = vunpack.c.l.b16 %v213
    %v817 = vunpack.c.h.b16 %v213
    %v818 = vunpack.c.l.b16 %v214
    %v819 = vunpack.c.h.b16 %v214
    %v820 = vunpack.c.l.b16 %v215
    %v821 = vunpack.c.h.b16 %v215
    %v822 = vunpack.c.l.b16 %v216
    %v823 = vunpack.c.h.b16 %v216
    %v824 = vunpack.c.l.b16 %v217
    %v825 = vunpack.c.h.b16 %v217
    %v826 = vunpack.c.l.b16 %v218
    %v827 = vunpack.c.h.b16 %v218
    %v828 = vunpack.c.l.b16 %v219
    %v829 = vunpack.c.h.b16 %v219
    %v830 = vunpack.c.l.b16 %v220
    %v831 = vunpack.c.h.b16 %v220
    %v832 = vunpack.c.l.b16 %v221
    %v833 = vunpack.c.h.b16 %v221
    %v834 = vunpack.c.l.b16 %v222
    %v835 = vunpack.c.h.b16 %v222
    %v836 = vunpack.c.l.b16 %v223
    %v837 = vunpack.c.h.b16 %v223
    %v838 = vunpack.c.l.b16 %v224
    %v839 = vunpack.c.h.b16 %v224
    %v840 = vunpack.c.l.b16 %v225
    %v841 = vunpack.c.h.b16 %v225
    %v842 = vunpack.c.l.b16 %v226
    %v843 = vunpack.c.h.b16 %v226
    %v844 = vunpack.c.l.b16 %v227
    %v845 = vunpack.c.h.b16 %v227
    %v846 = vunpack.c.l.b16 %v228
    %v847 = vunpack.c.h.b16 %v228
    %v848 = vunpack.c.l.b16 %v229
    %v849 = vunpack.c.h.b16 %v229
    %v850 = vunpack.c.l.b16 %v230
    %v851 = vunpack.c.h.b16 %v230
    %v852 = vunpack.c.l.b16 %v231
    %v853 = vunpack.c.h.b16 %v231
    %v854 = vunpack.c.l.b16 %v232
    %v855 = vunpack.c.h.b16 %v232
    %v856 = vunpack.c.l.b16 %v233
    %v857 = vunpack.c.h.b16 %v233
    %v858 = vunpack.c.l.b16 %v234
    %v859 = vunpack.c.h.b16 %v234
    %v860 = vunpack.c.l.b16 %v235
    %v861 = vunpack.c.h.b16 %v235
    %v862 = vunpack.c.l.b16 %v236
    %v863 = vunpack.c.h.b16 %v236
    %v864 = vunpack.c.l.b16 %v237
    %v865 = vunpack.c.h.b16 %v237
    %v866 = vunpack.c.l.b16 %v238
    %v867 = vunpack.c.h.b16 %v238
    %v868 = vunpack.c.l.b16 %v239
    %v869 = vunpack.c.h.b16 %v239
    %v870 = vunpack.c.l.b16 %v240
    %v871 = vunpack.c.h.b16 %v240
    %v872 = vunpack.c.l.b16 %v241
    %v873 = vunpack.c.h.b16 %v241
    %v874 = vunpack.c.l.b16 %v242
    %v875 = vunpack.c.h.b16 %v242
    %v876 = vunpack.c.l.b16 %v243
    %v877 = vunpack.c.h.b16 %v243
    %v878 = vunpack.c.l.b16 %v244
    %v879 = vunpack.c.h.b16 %v244
    %v880 = vunpack.c.l.b16 %v245
    %v881 = vunpack.c.h.b16 %v245
    %v882 = vunpack.c.l.b16 %v246
    %v883 = vunpack.c.h.b16 %v246
    %v884 = vunpack.c.l.b16 %v247
    %v885 = vunpack.c.h.b16 %v247
    %v886 = vunpack.c.l.b16 %v248
    %v887 = vunpack.c.h.b16 %v248
    %v888 = vunpack.c.l.b16 %v249
    %v889 = vunpack.c.h.b16 %v249
    %v890 = vunpack.c.l.b16 %v250
    %v891 = vunpack.c.h.b16 %v250
    %v892 = vunpack.c.l.b16 %v251
    %v893 = vunpack.c.h.b16 %v251
    %v894 = vunpack.c.l.b16 %v252
    %v895 = vunpack.c.h.b16 %v252
    %v896 = vunpack.c.l.b16 %v253
    %v897 = vunpack.c.h.b16 %v253
    %v898 = vunpack.c.l.b16 %v254
    %v899 = vunpack.c.h.b16 %v254
    %v900 = vunpack.c.l.b16 %v255
    %v901 = vunpack.c.h.b16 %v255
    %v902 = vunpack.c.l.b16 %v256
    %v903 = vunpack.c.h.b16 %v256
    %v904 = vunpack.c.l.b16 %v257
    %v905 = vunpack.c.h.b16 %v257
    %v906 = vunpack.c.l.b16 %v258
    %v907 = vunpack.c.h.b16 %v258
    %v908 = vunpack.c.l.b16 %v259
    %v909 = vunpack.c.h.b16 %v259
    %v910 = vunpack.c.l.b16 %v260
    %v911 = vunpack.c.h.b16 %v260
    %v912 = vunpack.c.l.b16 %v261
    %v913 = vunpack.c.h.b16 %v261
    %v914 = vunpack.c.l.b16 %v262
    %v915 = vunpack.c.h.b16 %v262
    %v916 = vunpack.c.l.b16 %v263
    %v917 = vunpack.c.h.b16 %v263
    %v918 = vunpack.c.l.b16 %v264
    %v919 = vunpack.c.h.b16 %v264
    %v920 = vunpack.c.l.b16 %v265
    %v921 = vunpack.c.h.b16 %v265
    %v922 = vunpack.c.l.b16 %v266
    %v923 = vunpack.c.h.b16 %v266
    %v924 = vunpack.c.l.b16 %v267
    %v925 = vunpack.c.h.b16 %v267
    %v926 = vunpack.c.l.b16 %v268
    %v927 = vunpack.c.h.b16 %v268
    %v928 = vunpack.c.l.b16 %v269
    %v929 = vunpack.c.h.b16 %v269
    %v930 = vunpack.c.l.b16 %v270
    %v931 = vunpack.c.h.b16 %v270
    %v932 = vunpack.c.l.b16 %v271
    %v933 = vunpack.c.h.b16 %v271
    %v934 = vunpack.c.l.b16 %v272
    %v935 = vunpack.c.h.b16 %v272
    %v936 = vunpack.c.l.b16 %v273
    %v937 = vunpack.c.h.b16 %v273
    %v938 = vunpack.c.l.b16 %v274
    %v939 = vunpack.c.h.b16 %v274
    %v940 = vunpack.c.l.b16 %v275
    %v941 = vunpack.c.h.b16 %v275
    %v942 = vunpack.c.l.b16 %v276
    %v943 = vunpack.c.h.b16 %v276
    %v944 = vunpack.c.l.b16 %v277
    %v945 = vunpack.c.h.b16 %v277
    %v946 = vunpack.c.l.b16 %v278
    %v947 = vunpack.c.h.b16 %v278
    %v948 = vunpack.c.l.b16 %v279
    %v949 = vunpack.c.h.b16 %v279
    %v950 = vunpack.c.l.b16 %v280
    %v951 = vunpack.c.h.b16 %v280
    %v952 = vunpack.c.l.b16 %v281
    %v953 = vunpack.c.h.b16 %v281
    %v954 = vunpack.c.l.b16 %v282
    %v955 = vunpack.c.h.b16 %v282
    %v956 = vunpack.c.l.b16 %v283
    %v957 = vunpack.c.h.b16 %v283
    %v958 = vunpack.c.l.b16 %v284
    %v959 = vunpack.c.h.b16 %v284
    %v960 = vunpack.c.l.b16 %v285
    %v961 = vunpack.c.h.b16 %v285
    %v962 = vunpack.c.l.b16 %v286
    %v963 = vunpack.c.h.b16 %v286
    %v964 = vunpack.c.l.b16 %v287
    %v965 = vunpack.c.h.b16 %v287
    %v966 = vunpack.c.l.b16 %v288
    %v967 = vunpack.c.h.b16 %v288
    %v968 = vunpack.c.l.b16 %v289
    %v969 = vunpack.c.h.b16 %v289
    %v970 = vunpack.c.l.b16 %v290
    %v971 = vunpack.c.h.b16 %v290
    %v972 = vunpack.c.l.b16 %v291
    %v973 = vunpack.c.h.b16 %v291
    %v974 = vunpack.c.l.b16 %v292
    %v975 = vunpack.c.h.b16 %v292
    %v976 = vunpack.c.l.b16 %v293
    %v977 = vunpack.c.h.b16 %v293
    %v978 = vunpack.c.l.b16 %v294
    %v979 = vunpack.c.h.b16 %v294
    %v980 = vunpack.c.l.b16 %v295
    %v981 = vunpack.c.h.b16 %v295
    %v982 = vunpack.c.l.b16 %v296
    %v983 = vunpack.c.h.b16 %v296
    %v984 = vunpack.c.l.b16 %v297
    %v985 = vunpack.c.h.b16 %v297
    %v986 = vunpack.c.l.b16 %v298
    %v987 = vunpack.c.h.b16 %v298
    %v988 = vunpack.c.l.b16 %v299
    %v989 = vunpack.c.h.b16 %v299
    %v990 = vunpack.c.l.b16 %v300
    %v991 = vunpack.c.h.b16 %v300
    %v992 = vunpack.c.l.b16 %v301
    %v993 = vunpack.c.h.b16 %v301
    %v994 = vunpack.c.l.b16 %v302
    %v995 = vunpack.c.h.b16 %v302
    %v996 = vunpack.c.l.b16 %v303
    %v997 = vunpack.c.h.b16 %v303
    %v998 = vpack.c.b16 %v554, %v550
    %v999 = vpack.c.b16 %v555, %v551
    %v1000 = vpack.c.b16 %v556, %v552
    %v1001 = vpack.c.b16 %v557, %v553
    %v1002 = vpack.c.b16 %v562, %v558
    %v1003 = vpack.c.b16 %v563, %v559
    %v1004 = vpack.c.b16 %v564, %v560
    %v1005 = vpack.c.b16 %v565, %v561
    %v1006 = vpack.c.b16 %v570, %v566
    %v1007 = vpack.c.b16 %v571, %v567
    %v1008 = vpack.c.b16 %v572, %v568
    %v1009 = vpack.c.b16 %v573, %v569
    %v1010 = vpack.c.b16 %v578, %v574
    %v1011 = vpack.c.b16 %v579, %v575
    %v1012 = vpack.c.b16 %v580, %v576
    %v1013 = vpack.c.b16 %v581, %v577
    %v1014 = vpack.c.b16 %v586, %v582
    %v1015 = vpack.c.b16 %v587, %v583
    %v1016 = vpack.c.b16 %v588, %v584
    %v1017 = vpack.c.b16 %v589, %v585
    %v1018 = vpack.c.b16 %v594, %v590
    %v1019 = vpack.c.b16 %v595, %v591
    %v1020 = vpack.c.b16 %v596, %v592
    %v1021 = vpack.c.b16 %v597, %v593
    %v1022 = vpack.c.b16 %v602, %v598
    %v1023 = vpack.c.b16 %v603, %v599
    %v1024 = vpack.c.b16 %v604, %v600
    %v1025 = vpack.c.b16 %v605, %v601
    %v1026 = vpack.c.b16 %v610, %v606
    %v1027 = vpack.c.b16 %v611, %v607
    %v1028 = vpack.c.b16 %v612, %v608
    %v1029 = vpack.c.b16 %v613, %v609
    %v1030 = vpack.c.b16 %v618, %v614
    %v1031 = vpack.c.b16 %v619, %v615
    %v1032 = vpack.c.b16 %v620, %v616
    %v1033 = vpack.c.b16 %v621, %v617
    %v1034 = vpack.c.b16 %v626, %v622
    %v1035 = vpack.c.b16 %v627, %v623
    %v1036 = vpack.c.b16 %v628, %v624
    %v1037 = vpack.c.b16 %v629, %v625
    %v1038 = vpack.c.b16 %v634, %v630
    %v1039 = vpack.c.b16 %v635, %v631
    %v1040 = vpack.c.b16 %v636, %v632
    %v1041 = vpack.c.b16 %v637, %v633
    %v1042 = vpack.c.b16 %v642, %v638
    %v1043 = vpack.c.b16 %v643, %v639
    %v1044 = vpack.c.b16 %v644, %v640
    %v1045 = vpack.c.b16 %v645, %v641
    %v1046 = vpack.c.b16 %v650, %v646
    %v1047 = vpack.c.b16 %v651, %v647
    %v1048 = vpack.c.b16 %v652, %v648
    %v1049 = vpack.c.b16 %v653, %v649
    %v1050 = vpack.c.b16 %v658, %v654
    %v1051 = vpack.c.b16 %v659, %v655
    %v1052 = vpack.c.b16 %v660, %v656
    %v1053 = vpack.c.b16 %v661, %v657
    %v1054 = vpack.c.b16 %v666, %v662
    %v1055 = vpack.c.b16 %v667, %v663
    %v1056 = vpack.c.b16 %v668, %v664
    %v1057 = vpack.c.b16 %v669, %v665
    %v1058 = vpack.c.b16 %v674, %v670
    %v1059 = vpack.c.b16 %v675, %v671
    %v1060 = vpack.c.b16 %v676, %v672
    %v1061 = vpack.c.b16 %v677, %v673
    %v1062 = vpack.c.b16 %v682, %v678
    %v1063 = vpack.c.b16 %v683, %v679
    %v1064 = vpack.c.b16 %v684, %v680
    %v1065 = vpack.c.b16 %v685, %v681
    %v1066 = vpack.c.b16 %v690, %v686
    %v1067 = vpack.c.b16 %v691, %v687
    %v1068 = vpack.c.b16 %v692, %v688
    %v1069 = vpack.c.b16 %v693, %v689
    %v1070 = vpack.c.b16 %v698, %v694
    %v1071 = vpack.c.b16 %v699, %v695
    %v1072 = vpack.c.b16 %v700, %v696
    %v1073 = vpack.c.b16 %v701, %v697
    %v1074 = vpack.c.b16 %v706, %v702
    %v1075 = vpack.c.b16 %v707, %v703
    %v1076 = vpack.c.b16 %v708, %v704
    %v1077 = vpack.c.b16 %v709, %v705
    %v1078 = vpack.c.b16 %v714, %v710
    %v1079 = vpack.c.b16 %v715, %v711
    %v1080 = vpack.c.b16 %v716, %v712
    %v1081 = vpack.c.b16 %v717, %v713
    %v1082 = vpack.c.b16 %v722, %v718
    %v1083 = vpack.c.b16 %v723, %v719
    %v1084 = vpack.c.b16 %v724, %v720
    %v1085 = vpack.c.b16 %v725, %v721
    %v1086 = vpack.c.b16 %v730, %v726
    %v1087 = vpack.c.b16 %v731, %v727
    %v1088 = vpack.c.b16 %v732, %v728
    %v1089 = vpack.c.b16 %v733, %v729
    %v1090 = vpack.c.b16 %v738, %v734
    %v1091 = vpack.c.b16 %v739, %v735
    %v1092 = vpack.c.b16 %v740, %v736
    %v1093 = vpack.c.b16 %v741, %v737
    %v1094 = vpack.c.b16 %v746, %v742
    %v1095 = vpack.c.b16 %v747, %v743
    %v1096 = vpack.c.b16 %v748, %v744
    %v1097 = vpack.c.b16 %v749, %v745
    %v1098 = vpack.c.b16 %v754, %v750
    %v1099 = vpack.c.b16 %v755, %v751
    %v1100 = vpack.c.b16 %v756, %v752
    %v1101 = vpack.c.b16 %v757, %v753
    %v1102 = vpack.c.b16 %v762, %v758
    %v1103 = vpack.c.b16 %v763, %v759
    %v1104 = vpack.c.b16 %v764, %v760
    %v1105 = vpack.c.b16 %v765, %v761
    %v1106 = vpack.c.b16 %v770, %v766
    %v1107 = vpack.c.b16 %v771, %v767
    %v1108 = vpack.c.b16 %v772, %v768
    %v1109 = vpack.c.b16 %v773, %v769
    %v1110 = vpack.c.b16 %v778, %v774
    %v1111 = vpack.c.b16 %v779, %v775
    %v1112 = vpack.c.b16 %v780, %v776
    %v1113 = vpack.c.b16 %v781, %v777
    %v1114 = vpack.c.b16 %v786, %v782
    %v1115 = vpack.c.b16 %v787, %v783
    %v1116 = vpack.c.b16 %v788, %v784
    %v1117 = vpack.c.b16 %v789, %v785
    %v1118 = vpack.c.b16 %v794, %v790
    %v1119 = vpack.c.b16 %v795, %v791
    %v1120 = vpack.c.b16 %v796, %v792
    %v1121 = vpack.c.b16 %v797, %v793
    %v1122 = vpack.c.b16 %v802, %v798
    %v1123 = vpack.c.b16 %v803, %v799
    %v1124 = vpack.c.b16 %v804, %v800
    %v1125 = vpack.c.b16 %v805, %v801
    %v1126 = vpack.c.b16 %v810, %v806
    %v1127 = vpack.c.b16 %v811, %v807
    %v1128 = vpack.c.b16 %v812, %v808
    %v1129 = vpack.c.b16 %v813, %v809
    %v1130 = vpack.c.b16 %v818, %v814
    %v1131 = vpack.c.b16 %v819, %v815
    %v1132 = vpack.c.b16 %v820, %v816
    %v1133 = vpack.c.b16 %v821, %v817
    %v1134 = vpack.c.b16 %v826, %v822
    %v1135 = vpack.c.b16 %v827, %v823
    %v1136 = vpack.c.b16 %v828, %v824
    %v1137 = vpack.c.b16 %v829, %v825
    %v1138 = vpack.c.b16 %v834, %v830
    %v1139 = vpack.c.b16 %v835, %v831
    %v1140 = vpack.c.b16 %v836, %v832
    %v1141 = vpack.c.b16 %v837, %v833
    %v1142 = vpack.c.b16 %v842, %v838
    %v1143 = vpack.c.b16 %v843, %v839
    %v1144 = vpack.c.b16 %v844, %v840
    %v1145 = vpack.c.b16 %v845, %v841
    %v1146 = vpack.c.b16 %v850, %v846
    %v1147 = vpack.c.b16 %v851, %v847
    %v1148 = vpack.c.b16 %v852, %v848
    %v1149 = vpack.c.b16 %v853, %v849
    %v1150 = vpack.c.b16 %v858, %v854
    %v1151 = vpack.c.b16 %v859, %v855
    %v1152 = vpack.c.b16 %v860, %v856
    %v1153 = vpack.c.b16 %v861, %v857
    %v1154 = vpack.c.b16 %v866, %v862
    %v1155 = vpack.c.b16 %v867, %v863
    %v1156 = vpack.c.b16 %v868, %v864
    %v1157 = vpack.c.b16 %v869, %v865
    %v1158 = vpack.c.b16 %v874, %v870
    %v1159 = vpack.c.b16 %v875, %v871
    %v1160 = vpack.c.b16 %v876, %v872
    %v1161 = vpack.c.b16 %v877, %v873
    %v1162 = vpack.c.b16 %v882, %v878
    %v1163 = vpack.c.b16 %v883, %v879
    %v1164 = vpack.c.b16 %v884, %v880
    %v1165 = vpack.c.b16 %v885, %v881
    %v1166 = vpack.c.b16 %v890, %v886
    %v1167 = vpack.c.b16 %v891, %v887
    %v1168 = vpack.c.b16 %v892, %v888
    %v1169 = vpack.c.b16 %v893, %v889
    %v1170 = vpack.c.b16 %v898, %v894
    %v1171 = vpack.c.b16 %v899, %v895
    %v1172 = vpack.c.b16 %v900, %v896
    %v1173 = vpack.c.b16 %v901, %v897
    %v1174 = vpack.c.b16 %v906, %v902
    %v1175 = vpack.c.b16 %v907, %v903
    %v1176 = vpack.c.b16 %v908, %v904
    %v1177 = vpack.c.b16 %v909, %v905
    %v1178 = vpack.c.b16 %v914, %v910
    %v1179 = vpack.c.b16 %v915, %v911
    %v1180 = vpack.c.b16 %v916, %v912
    %v1181 = vpack.c.b16 %v917, %v913
    %v1182 = vpack.c.b16 %v922, %v918
    %v1183 = vpack.c.b16 %v923, %v919
    %v1184 = vpack.c.b16 %v924, %v920
    %v1185 = vpack.c.b16 %v925, %v921
    %v1186 = vpack.c.b16 %v930, %v926
    %v1187 = vpack.c.b16 %v931, %v927
    %v1188 = vpack.c.b16 %v932, %v928
    %v1189 = vpack.c.b16 %v933, %v929
    %v1190 = vpack.c.b16 %v938, %v934
    %v1191 = vpack.c.b16 %v939, %v935
    %v1192 = vpack.c.b16 %v940, %v936
    %v1193 = vpack.c.b16 %v941, %v937
    %v1194 = vpack.c.b16 %v946, %v942
    %v1195 = vpack.c.b16 %v947, %v943
    %v1196 = vpack.c.b16 %v948, %v944
    %v1197 = vpack.c.b16 %v949, %v945
    %v1198 = vpack.c.b16 %v954, %v950
    %v1199 = vpack.c.b16 %v955, %v951
    %v1200 = vpack.c.b16 %v956, %v952
    %v1201 = vpack.c.b16 %v957, %v953
    %v1202 = vpack.c.b16 %v962, %v958
    %v1203 = vpack.c.b16 %v963, %v959
    %v1204 = vpack.c.b16 %v964, %v960
    %v1205 = vpack.c.b16 %v965, %v961
    %v1206 = vpack.c.b16 %v970, %v966
    %v1207 = vpack.c.b16 %v971, %v967
    %v1208 = vpack.c.b16 %v972, %v968
    %v1209 = vpack.c.b16 %v973, %v969
    %v1210 = vpack.c.b16 %v978, %v974
    %v1211 = vpack.c.b16 %v979, %v975
    %v1212 = vpack.c.b16 %v980, %v976
    %v1213 = vpack.c.b16 %v981, %v977
    %v1214 = vpack.c.b16 %v986, %v982
    %v1215 = vpack.c.b16 %v987, %v983
    %v1216 = vpack.c.b16 %v988, %v984
    %v1217 = vpack.c.b16 %v989, %v985
    %v1218 = vpack.c.b16 %v994, %v990
    %v1219 = vpack.c.b16 %v995, %v991
    %v1220 = vpack.c.b16 %v996, %v992
    %v1221 = vpack.c.b16 %v997, %v993
    %1446 = vmatprep.subr.bf16.mxu0 %v1027
    %1447 = vmatpush1.bf16.msra.mxu0 %v1026
    %1448 = vmatprep.subr.bf16.mxu0 %v1023
    %1449 = vmatpush1.bf16.msra.mxu0 %v1022
    %1450 = vmatprep.subr.bf16.mxu0 %v1019
    %1451 = vmatpush1.bf16.msra.mxu0 %v1018
    %1452 = vmatprep.subr.bf16.mxu0 %v1015
    %1453 = vmatpush1.bf16.msra.mxu0 %v1014
    %1454 = vmatprep.subr.bf16.mxu0 %v1011
    %1455 = vmatpush1.bf16.msra.mxu0 %v1010
    %1456 = vmatprep.subr.bf16.mxu0 %v1007
    %1457 = vmatpush1.bf16.msra.mxu0 %v1006
    %1458 = vmatprep.subr.bf16.mxu0 %v1003
    %1459 = vmatpush1.bf16.msra.mxu0 %v1002
    %1460 = vmatprep.subr.bf16.mxu0 %v999
    %1461 = vmatpush1.bf16.msra.mxu0 %v998
    %1462 = vmatprep.subr.bf16.mxu0 %v1059
    %1463 = vmatpush2.bf16.msra.mxu0 %v1058
    %1464 = vmatprep.subr.bf16.mxu0 %v1055
    %1465 = vmatpush2.bf16.msra.mxu0 %v1054
    %1466 = vmatprep.subr.bf16.mxu0 %v1051
    %1467 = vmatpush2.bf16.msra.mxu0 %v1050
    %1468 = vmatprep.subr.bf16.mxu0 %v1047
    %1469 = vmatpush2.bf16.msra.mxu0 %v1046
    %1470 = vmatprep.subr.bf16.mxu0 %v1043
    %1471 = vmatpush2.bf16.msra.mxu0 %v1042
    %1472 = vmatprep.subr.bf16.mxu0 %v1039
    %1473 = vmatpush2.bf16.msra.mxu0 %v1038
    %1474 = vmatprep.subr.bf16.mxu0 %v1035
    %1475 = vmatpush2.bf16.msra.mxu0 %v1034
    %1476 = vmatprep.subr.bf16.mxu0 %v1031
    %1477 = vmatpush2.bf16.msra.mxu0 %v1030
    %1478 = vmatprep.mubr.bf16.mxu0 %v74
    %1479 = vmatmul.mubr.bf16.gmra.mxu0 %v73
    %v1480 = vpop.f32.mrf.mxu0
    %v1481 = vadd.f32 %v309, %v1480
    %v1482 = vpop.f32.mrf.mxu0
    %v1483 = vadd.f32 %v313, %v1482
    %v1484 = vpop.f32.mrf.mxu0
    %v1485 = vpop.f32.mrf.mxu0
    %1486 = vdwg.mxu0
    %1487 = vmatprep.subr.bf16.mxu0 %v1091
    %1488 = vmatpush1.bf16.msra.mxu0 %v1090
    %1489 = vmatprep.subr.bf16.mxu0 %v1087
    %1490 = vmatpush1.bf16.msra.mxu0 %v1086
    %1491 = vmatprep.subr.bf16.mxu0 %v1083
    %1492 = vmatpush1.bf16.msra.mxu0 %v1082
    %1493 = vmatprep.subr.bf16.mxu0 %v1079
    %1494 = vmatpush1.bf16.msra.mxu0 %v1078
    %1495 = vmatprep.subr.bf16.mxu0 %v1075
    %1496 = vmatpush1.bf16.msra.mxu0 %v1074
    %1497 = vmatprep.subr.bf16.mxu0 %v1071
    %1498 = vmatpush1.bf16.msra.mxu0 %v1070
    %1499 = vmatprep.subr.bf16.mxu0 %v1067
    %1500 = vmatpush1.bf16.msra.mxu0 %v1066
    %1501 = vmatprep.subr.bf16.mxu0 %v1063
    %1502 = vmatpush1.bf16.msra.mxu0 %v1062
    %1503 = vmatprep.subr.bf16.mxu0 %v1123
    %1504 = vmatpush2.bf16.msra.mxu0 %v1122
    %1505 = vmatprep.subr.bf16.mxu0 %v1119
    %1506 = vmatpush2.bf16.msra.mxu0 %v1118
    %1507 = vmatprep.subr.bf16.mxu0 %v1115
    %1508 = vmatpush2.bf16.msra.mxu0 %v1114
    %1509 = vmatprep.subr.bf16.mxu0 %v1111
    %1510 = vmatpush2.bf16.msra.mxu0 %v1110
    %1511 = vmatprep.subr.bf16.mxu0 %v1107
    %1512 = vmatpush2.bf16.msra.mxu0 %v1106
    %1513 = vmatprep.subr.bf16.mxu0 %v1103
    %1514 = vmatpush2.bf16.msra.mxu0 %v1102
    %1515 = vmatprep.subr.bf16.mxu0 %v1099
    %1516 = vmatpush2.bf16.msra.mxu0 %v1098
    %1517 = vmatprep.subr.bf16.mxu0 %v1095
    %1518 = vmatpush2.bf16.msra.mxu0 %v1094
    %1519 = vmatprep.mubr.bf16.mxu0 %v76
    %1520 = vmatmul.mubr.bf16.gmra.mxu0 %v75
    %v1521 = vpop.f32.mrf.mxu0
    %v1522 = vadd.f32 %v1481, %v1521
    %v1523 = vpop.f32.mrf.mxu0
    %v1524 = vadd.f32 %v1483, %v1523
    %v1525 = vpop.f32.mrf.mxu0
    %v1526 = vpop.f32.mrf.mxu0
    %1527 = vdwg.mxu0
    %1528 = vmatprep.subr.bf16.mxu0 %v1155
    %1529 = vmatpush1.bf16.msra.mxu0 %v1154
    %1530 = vmatprep.subr.bf16.mxu0 %v1151
    %1531 = vmatpush1.bf16.msra.mxu0 %v1150
    %1532 = vmatprep.subr.bf16.mxu0 %v1147
    %1533 = vmatpush1.bf16.msra.mxu0 %v1146
    %1534 = vmatprep.subr.bf16.mxu0 %v1143
    %1535 = vmatpush1.bf16.msra.mxu0 %v1142
    %1536 = vmatprep.subr.bf16.mxu0 %v1139
    %1537 = vmatpush1.bf16.msra.mxu0 %v1138
    %1538 = vmatprep.subr.bf16.mxu0 %v1135
    %1539 = vmatpush1.bf16.msra.mxu0 %v1134
    %1540 = vmatprep.subr.bf16.mxu0 %v1131
    %1541 = vmatpush1.bf16.msra.mxu0 %v1130
    %1542 = vmatprep.subr.bf16.mxu0 %v1127
    %1543 = vmatpush1.bf16.msra.mxu0 %v1126
    %1544 = vmatprep.subr.bf16.mxu0 %v1187
    %1545 = vmatpush2.bf16.msra.mxu0 %v1186
    %1546 = vmatprep.subr.bf16.mxu0 %v1183
    %1547 = vmatpush2.bf16.msra.mxu0 %v1182
    %1548 = vmatprep.subr.bf16.mxu0 %v1179
    %1549 = vmatpush2.bf16.msra.mxu0 %v1178
    %1550 = vmatprep.subr.bf16.mxu0 %v1175
    %1551 = vmatpush2.bf16.msra.mxu0 %v1174
    %1552 = vmatprep.subr.bf16.mxu0 %v1171
    %1553 = vmatpush2.bf16.msra.mxu0 %v1170
    %1554 = vmatprep.subr.bf16.mxu0 %v1167
    %1555 = vmatpush2.bf16.msra.mxu0 %v1166
    %1556 = vmatprep.subr.bf16.mxu0 %v1163
    %1557 = vmatpush2.bf16.msra.mxu0 %v1162
    %1558 = vmatprep.subr.bf16.mxu0 %v1159
    %1559 = vmatpush2.bf16.msra.mxu0 %v1158
    %1560 = vmatprep.mubr.bf16.mxu0 %v78
    %1561 = vmatmul.mubr.bf16.gmra.mxu0 %v77
    %v1562 = vpop.f32.mrf.mxu0
    %v1563 = vadd.f32 %v1522, %v1562
    %v1564 = vpop.f32.mrf.mxu0
    %v1565 = vadd.f32 %v1524, %v1564
    %v1566 = vpop.f32.mrf.mxu0
    %v1567 = vpop.f32.mrf.mxu0
    %1568 = vdwg.mxu0
    %1569 = vmatprep.subr.bf16.mxu0 %v1219
    %1570 = vmatpush1.bf16.msra.mxu0 %v1218
    %1571 = vmatprep.subr.bf16.mxu0 %v1215
    %1572 = vmatpush1.bf16.msra.mxu0 %v1214
    %1573 = vmatprep.subr.bf16.mxu0 %v1211
    %1574 = vmatpush1.bf16.msra.mxu0 %v1210
    %1575 = vmatprep.subr.bf16.mxu0 %v1207
    %1576 = vmatpush1.bf16.msra.mxu0 %v1206
    %1577 = vmatprep.subr.bf16.mxu0 %v1203
    %1578 = vmatpush1.bf16.msra.mxu0 %v1202
    %1579 = vmatprep.subr.bf16.mxu0 %v1199
    %1580 = vmatpush1.bf16.msra.mxu0 %v1198
    %1581 = vmatprep.subr.bf16.mxu0 %v1195
    %1582 = vmatpush1.bf16.msra.mxu0 %v1194
    %1583 = vmatprep.subr.bf16.mxu0 %v1191
    %1584 = vmatpush1.bf16.msra.mxu0 %v1190
    %1585 = vmatprep.subr.bf16.mxu0 0
    %1586 = vmatpush2.bf16.msra.mxu0 0
    %1587 = vmatprep.subr.bf16.mxu0 0
    %1588 = vmatpush2.bf16.msra.mxu0 0
    %1589 = vmatprep.subr.bf16.mxu0 0
    %1590 = vmatpush2.bf16.msra.mxu0 0
    %1591 = vmatprep.subr.bf16.mxu0 0
    %1592 = vmatpush2.bf16.msra.mxu0 0
    %1593 = vmatprep.subr.bf16.mxu0 0
    %1594 = vmatpush2.bf16.msra.mxu0 0
    %1595 = vmatprep.subr.bf16.mxu0 0
    %1596 = vmatpush2.bf16.msra.mxu0 0
    %1597 = vmatprep.subr.bf16.mxu0 0
    %1598 = vmatpush2.bf16.msra.mxu0 0
    %1599 = vmatprep.subr.bf16.mxu0 0
    %1600 = vmatpush2.bf16.msra.mxu0 0
    %1601 = vmatprep.mubr.bf16.mxu0 0
    %1602 = vmatmul.mubr.bf16.gmra.mxu0 %v79
    %v1603 = vpop.f32.mrf.mxu0
    %v1604 = vadd.f32 %v1563, %v1603
    %v1605 = vpop.f32.mrf.mxu0
    %v1606 = vadd.f32 %v1565, %v1605
    %v1607 = vpop.f32.mrf.mxu0
    %v1608 = vpop.f32.mrf.mxu0
    %1609 = vdwg.mxu0
    %1610 = vmatprep.subr.bf16.mxu0 %v1029
    %1611 = vmatpush1.bf16.msra.mxu0 %v1028
    %1612 = vmatprep.subr.bf16.mxu0 %v1025
    %1613 = vmatpush1.bf16.msra.mxu0 %v1024
    %1614 = vmatprep.subr.bf16.mxu0 %v1021
    %1615 = vmatpush1.bf16.msra.mxu0 %v1020
    %1616 = vmatprep.subr.bf16.mxu0 %v1017
    %1617 = vmatpush1.bf16.msra.mxu0 %v1016
    %1618 = vmatprep.subr.bf16.mxu0 %v1013
    %1619 = vmatpush1.bf16.msra.mxu0 %v1012
    %1620 = vmatprep.subr.bf16.mxu0 %v1009
    %1621 = vmatpush1.bf16.msra.mxu0 %v1008
    %1622 = vmatprep.subr.bf16.mxu0 %v1005
    %1623 = vmatpush1.bf16.msra.mxu0 %v1004
    %1624 = vmatprep.subr.bf16.mxu0 %v1001
    %1625 = vmatpush1.bf16.msra.mxu0 %v1000
    %1626 = vmatprep.subr.bf16.mxu0 %v1061
    %1627 = vmatpush2.bf16.msra.mxu0 %v1060
    %1628 = vmatprep.subr.bf16.mxu0 %v1057
    %1629 = vmatpush2.bf16.msra.mxu0 %v1056
    %1630 = vmatprep.subr.bf16.mxu0 %v1053
    %1631 = vmatpush2.bf16.msra.mxu0 %v1052
    %1632 = vmatprep.subr.bf16.mxu0 %v1049
    %1633 = vmatpush2.bf16.msra.mxu0 %v1048
    %1634 = vmatprep.subr.bf16.mxu0 %v1045
    %1635 = vmatpush2.bf16.msra.mxu0 %v1044
    %1636 = vmatprep.subr.bf16.mxu0 %v1041
    %1637 = vmatpush2.bf16.msra.mxu0 %v1040
    %1638 = vmatprep.subr.bf16.mxu0 %v1037
    %1639 = vmatpush2.bf16.msra.mxu0 %v1036
    %1640 = vmatprep.subr.bf16.mxu0 %v1033
    %1641 = vmatpush2.bf16.msra.mxu0 %v1032
    %1642 = vmatprep.mubr.bf16.mxu0 %v74
    %1643 = vmatmul.mubr.bf16.gmra.mxu0 %v73
    %v1644 = vpop.f32.mrf.mxu0
    %v1645 = vadd.f32 %v317, %v1644
    %v1646 = vpop.f32.mrf.mxu0
    %v1647 = vadd.f32 %v321, %v1646
    %v1648 = vpop.f32.mrf.mxu0
    %v1649 = vpop.f32.mrf.mxu0
    %1650 = vdwg.mxu0
    %1651 = vmatprep.subr.bf16.mxu0 %v1093
    %1652 = vmatpush1.bf16.msra.mxu0 %v1092
    %1653 = vmatprep.subr.bf16.mxu0 %v1089
    %1654 = vmatpush1.bf16.msra.mxu0 %v1088
    %1655 = vmatprep.subr.bf16.mxu0 %v1085
    %1656 = vmatpush1.bf16.msra.mxu0 %v1084
    %1657 = vmatprep.subr.bf16.mxu0 %v1081
    %1658 = vmatpush1.bf16.msra.mxu0 %v1080
    %1659 = vmatprep.subr.bf16.mxu0 %v1077
    %1660 = vmatpush1.bf16.msra.mxu0 %v1076
    %1661 = vmatprep.subr.bf16.mxu0 %v1073
    %1662 = vmatpush1.bf16.msra.mxu0 %v1072
    %1663 = vmatprep.subr.bf16.mxu0 %v1069
    %1664 = vmatpush1.bf16.msra.mxu0 %v1068
    %1665 = vmatprep.subr.bf16.mxu0 %v1065
    %1666 = vmatpush1.bf16.msra.mxu0 %v1064
    %1667 = vmatprep.subr.bf16.mxu0 %v1125
    %1668 = vmatpush2.bf16.msra.mxu0 %v1124
    %1669 = vmatprep.subr.bf16.mxu0 %v1121
    %1670 = vmatpush2.bf16.msra.mxu0 %v1120
    %1671 = vmatprep.subr.bf16.mxu0 %v1117
    %1672 = vmatpush2.bf16.msra.mxu0 %v1116
    %1673 = vmatprep.subr.bf16.mxu0 %v1113
    %1674 = vmatpush2.bf16.msra.mxu0 %v1112
    %1675 = vmatprep.subr.bf16.mxu0 %v1109
    %1676 = vmatpush2.bf16.msra.mxu0 %v1108
    %1677 = vmatprep.subr.bf16.mxu0 %v1105
    %1678 = vmatpush2.bf16.msra.mxu0 %v1104
    %1679 = vmatprep.subr.bf16.mxu0 %v1101
    %1680 = vmatpush2.bf16.msra.mxu0 %v1100
    %1681 = vmatprep.subr.bf16.mxu0 %v1097
    %1682 = vmatpush2.bf16.msra.mxu0 %v1096
    %1683 = vmatprep.mubr.bf16.mxu0 %v76
    %1684 = vmatmul.mubr.bf16.gmra.mxu0 %v75
    %v1685 = vpop.f32.mrf.mxu0
    %v1686 = vadd.f32 %v1645, %v1685
    %v1687 = vpop.f32.mrf.mxu0
    %v1688 = vadd.f32 %v1647, %v1687
    %v1689 = vpop.f32.mrf.mxu0
    %v1690 = vpop.f32.mrf.mxu0
    %1691 = vdwg.mxu0
    %1692 = vmatprep.subr.bf16.mxu0 %v1157
    %1693 = vmatpush1.bf16.msra.mxu0 %v1156
    %1694 = vmatprep.subr.bf16.mxu0 %v1153
    %1695 = vmatpush1.bf16.msra.mxu0 %v1152
    %1696 = vmatprep.subr.bf16.mxu0 %v1149
    %1697 = vmatpush1.bf16.msra.mxu0 %v1148
    %1698 = vmatprep.subr.bf16.mxu0 %v1145
    %1699 = vmatpush1.bf16.msra.mxu0 %v1144
    %1700 = vmatprep.subr.bf16.mxu0 %v1141
    %1701 = vmatpush1.bf16.msra.mxu0 %v1140
    %1702 = vmatprep.subr.bf16.mxu0 %v1137
    %1703 = vmatpush1.bf16.msra.mxu0 %v1136
    %1704 = vmatprep.subr.bf16.mxu0 %v1133
    %1705 = vmatpush1.bf16.msra.mxu0 %v1132
    %1706 = vmatprep.subr.bf16.mxu0 %v1129
    %1707 = vmatpush1.bf16.msra.mxu0 %v1128
    %1708 = vmatprep.subr.bf16.mxu0 %v1189
    %1709 = vmatpush2.bf16.msra.mxu0 %v1188
    %1710 = vmatprep.subr.bf16.mxu0 %v1185
    %1711 = vmatpush2.bf16.msra.mxu0 %v1184
    %1712 = vmatprep.subr.bf16.mxu0 %v1181
    %1713 = vmatpush2.bf16.msra.mxu0 %v1180
    %1714 = vmatprep.subr.bf16.mxu0 %v1177
    %1715 = vmatpush2.bf16.msra.mxu0 %v1176
    %1716 = vmatprep.subr.bf16.mxu0 %v1173
    %1717 = vmatpush2.bf16.msra.mxu0 %v1172
    %1718 = vmatprep.subr.bf16.mxu0 %v1169
    %1719 = vmatpush2.bf16.msra.mxu0 %v1168
    %1720 = vmatprep.subr.bf16.mxu0 %v1165
    %1721 = vmatpush2.bf16.msra.mxu0 %v1164
    %1722 = vmatprep.subr.bf16.mxu0 %v1161
    %1723 = vmatpush2.bf16.msra.mxu0 %v1160
    %1724 = vmatprep.mubr.bf16.mxu0 %v78
    %1725 = vmatmul.mubr.bf16.gmra.mxu0 %v77
    %v1726 = vpop.f32.mrf.mxu0
    %v1727 = vadd.f32 %v1686, %v1726
    %v1728 = vpop.f32.mrf.mxu0
    %v1729 = vadd.f32 %v1688, %v1728
    %v1730 = vpop.f32.mrf.mxu0
    %v1731 = vpop.f32.mrf.mxu0
    %1732 = vdwg.mxu0
    %1733 = vmatprep.subr.bf16.mxu0 %v1221
    %1734 = vmatpush1.bf16.msra.mxu0 %v1220
    %1735 = vmatprep.subr.bf16.mxu0 %v1217
    %1736 = vmatpush1.bf16.msra.mxu0 %v1216
    %1737 = vmatprep.subr.bf16.mxu0 %v1213
    %1738 = vmatpush1.bf16.msra.mxu0 %v1212
    %1739 = vmatprep.subr.bf16.mxu0 %v1209
    %1740 = vmatpush1.bf16.msra.mxu0 %v1208
    %1741 = vmatprep.subr.bf16.mxu0 %v1205
    %1742 = vmatpush1.bf16.msra.mxu0 %v1204
    %1743 = vmatprep.subr.bf16.mxu0 %v1201
    %1744 = vmatpush1.bf16.msra.mxu0 %v1200
    %1745 = vmatprep.subr.bf16.mxu0 %v1197
    %1746 = vmatpush1.bf16.msra.mxu0 %v1196
    %1747 = vmatprep.subr.bf16.mxu0 %v1193
    %1748 = vmatpush1.bf16.msra.mxu0 %v1192
    %1749 = vmatprep.subr.bf16.mxu0 0
    %1750 = vmatpush2.bf16.msra.mxu0 0
    %1751 = vmatprep.subr.bf16.mxu0 0
    %1752 = vmatpush2.bf16.msra.mxu0 0
    %1753 = vmatprep.subr.bf16.mxu0 0
    %1754 = vmatpush2.bf16.msra.mxu0 0
    %1755 = vmatprep.subr.bf16.mxu0 0
    %1756 = vmatpush2.bf16.msra.mxu0 0
    %1757 = vmatprep.subr.bf16.mxu0 0
    %1758 = vmatpush2.bf16.msra.mxu0 0
    %1759 = vmatprep.subr.bf16.mxu0 0
    %1760 = vmatpush2.bf16.msra.mxu0 0
    %1761 = vmatprep.subr.bf16.mxu0 0
    %1762 = vmatpush2.bf16.msra.mxu0 0
    %1763 = vmatprep.subr.bf16.mxu0 0
    %1764 = vmatpush2.bf16.msra.mxu0 0
    %1765 = vmatprep.mubr.bf16.mxu0 0
    %1766 = vmatmul.mubr.bf16.gmra.mxu0 %v79
    %v1767 = vpop.f32.mrf.mxu0
    %v1768 = vadd.f32 %v1727, %v1767
    %v1769 = vpop.f32.mrf.mxu0
    %v1770 = vadd.f32 %v1729, %v1769
    %v1771 = vpop.f32.mrf.mxu0
    %v1772 = vpop.f32.mrf.mxu0
    %1773 = vdwg.mxu0
    %v1774 = vmax.f32 %v1604, 0.0
    %v1775 = vmax.f32 %v1606, 0.0
    %v1776 = vmax.f32 %v1768, 0.0
    %v1777 = vmax.f32 %v1770, 0.0
    %v1778 = vpack.c.bf16 %v1774, %v1774
    %v1779 = vpack.c.bf16 %v1775, %v1775
    %v1780 = vpack.c.bf16 %v1776, %v1776
    %v1781 = vpack.c.bf16 %v1777, %v1777
    %v1782 = vld [vmem:[%s4] sm:$0xf]
    %v1783 = vld [vmem:[%s4 + $0x4] sm:$0xf]
    %v1784 = vld [vmem:[%s4 + $0x8] sm:$0xf]
    %v1785 = vld [vmem:[%s4 + $0xc] sm:$0xf]
    %v1786 = vld [vmem:[%s4 + $0x10] sm:$0xf]
    %v1787 = vld [vmem:[%s4 + $0x14] sm:$0xf]
    %v1788 = vld [vmem:[%s4 + $0x18] sm:$0xf]
    %v1789 = vld [vmem:[%s4 + $0x1c] sm:$0xf]
    %v1790 = vld [vmem:[%s4 + $0x20] sm:$0xf]
    %v1791 = vld [vmem:[%s4 + $0x24] sm:$0xf]
    %v1792 = vld [vmem:[%s4 + $0x28] sm:$0xf]
    %v1793 = vld [vmem:[%s4 + $0x2c] sm:$0xf]
    %v1794 = vld [vmem:[%s4 + $0x30] sm:$0xf]
    %v1795 = vld [vmem:[%s4 + $0x34] sm:$0xf]
    %v1796 = vld [vmem:[%s4 + $0x38] sm:$0xf]
    %v1797 = vld [vmem:[%s4 + $0x3c] sm:$0xf]
    %v1798 = vld [vmem:[%s4 + $0x40] sm:$0xf]
    %v1799 = vld [vmem:[%s4 + $0x44] sm:$0xf]
    %v1800 = vld [vmem:[%s4 + $0x48] sm:$0xf]
    %v1801 = vld [vmem:[%s4 + $0x4c] sm:$0xf]
    %v1802 = vld [vmem:[%s4 + $0x50] sm:$0xf]
    %v1803 = vld [vmem:[%s4 + $0x54] sm:$0xf]
    %v1804 = vld [vmem:[%s4 + $0x58] sm:$0xf]
    %v1805 = vld [vmem:[%s4 + $0x5c] sm:$0xf]
    %v1806 = vld [vmem:[%s4 + $0x60] sm:$0xf]
    %v1807 = vld [vmem:[%s4 + $0x64] sm:$0xf]
    %v1808 = vld [vmem:[%s4 + $0x68] sm:$0xf]
    %v1809 = vld [vmem:[%s4 + $0x6c] sm:$0xf]
    %v1810 = vld [vmem:[%s4 + $0x70] sm:$0xf]
    %v1811 = vld [vmem:[%s4 + $0x74] sm:$0xf]
    %v1812 = vld [vmem:[%s4 + $0x78] sm:$0xf]
    %v1813 = vld [vmem:[%s4 + $0x7c] sm:$0xf]
    %v1814 = vld [vmem:[%s4 + $0x80] sm:$0xf]
    %v1815 = vld [vmem:[%s4 + $0x84] sm:$0xf]
    %v1816 = vld [vmem:[%s4 + $0x88] sm:$0xf]
    %v1817 = vld [vmem:[%s4 + $0x8c] sm:$0xf]
    %v1818 = vld [vmem:[%s4 + $0x90] sm:$0xf]
    %v1819 = vld [vmem:[%s4 + $0x94] sm:$0xf]
    %v1820 = vld [vmem:[%s4 + $0x98] sm:$0xf]
    %v1821 = vld [vmem:[%s4 + $0x9c] sm:$0xf]
    %v1822 = vld [vmem:[%s4 + $0xa0] sm:$0xf]
    %v1823 = vld [vmem:[%s4 + $0xa4] sm:$0xf]
    %v1824 = vld [vmem:[%s4 + $0xa8] sm:$0xf]
    %v1825 = vld [vmem:[%s4 + $0xac] sm:$0xf]
    %v1826 = vld [vmem:[%s4 + $0xb0] sm:$0xf]
    %v1827 = vld [vmem:[%s4 + $0xb4] sm:$0xf]
    %v1828 = vld [vmem:[%s4 + $0xb8] sm:$0xf]
    %v1829 = vld [vmem:[%s4 + $0xbc] sm:$0xf]
    %v1830 = vld [vmem:[%s4 + $0xc0] sm:$0xf]
    %v1831 = vld [vmem:[%s4 + $0xc4] sm:$0xf]
    %v1832 = vld [vmem:[%s4 + $0xc8] sm:$0xf]
    %v1833 = vld [vmem:[%s4 + $0xcc] sm:$0xf]
    %v1834 = vld [vmem:[%s4 + $0xd0] sm:$0xf]
    %v1835 = vld [vmem:[%s4 + $0xd4] sm:$0xf]
    %v1836 = vld [vmem:[%s4 + $0xd8] sm:$0xf]
    %v1837 = vld [vmem:[%s4 + $0xdc] sm:$0xf]
    %v1838 = vld [vmem:[%s4 + $0xe0] sm:$0xf]
    %v1839 = vld [vmem:[%s4 + $0xe4] sm:$0xf]
    %v1840 = vld [vmem:[%s4 + $0xe8] sm:$0xf]
    %v1841 = vld [vmem:[%s4 + $0xec] sm:$0xf]
    %v1842 = vld [vmem:[%s4 + $0xf0] sm:$0xf]
    %v1843 = vld [vmem:[%s4 + $0xf4] sm:$0xf]
    %v1844 = vld [vmem:[%s4 + $0xf8] sm:$0xf]
    %v1845 = vld [vmem:[%s4 + $0xfc] sm:$0xf]
    %v1846 = vld [vmem:[%s5] sm:$0x1]
    %v1848 = vlaneseq
    %v1849 = vshrl.u32 %v1848, 7
    %v1850 = vsub.s32 0, %v1849
    %v1851 = vrot.slane %v1846, %v1850
    %v1917 = vunpack.c.l.b16 %v1782
    %v1918 = vunpack.c.l.b16 %v1783
    %v1919 = vunpack.c.l.b16 %v1784
    %v1920 = vunpack.c.l.b16 %v1785
    %v1921 = vunpack.c.l.b16 %v1786
    %v1922 = vunpack.c.l.b16 %v1787
    %v1923 = vunpack.c.l.b16 %v1788
    %v1924 = vunpack.c.l.b16 %v1789
    %v1925 = vunpack.c.l.b16 %v1790
    %v1926 = vunpack.c.l.b16 %v1791
    %v1927 = vunpack.c.l.b16 %v1792
    %v1928 = vunpack.c.l.b16 %v1793
    %v1929 = vunpack.c.l.b16 %v1794
    %v1930 = vunpack.c.l.b16 %v1795
    %v1931 = vunpack.c.l.b16 %v1796
    %v1932 = vunpack.c.l.b16 %v1797
    %v1933 = vunpack.c.l.b16 %v1798
    %v1934 = vunpack.c.l.b16 %v1799
    %v1935 = vunpack.c.l.b16 %v1800
    %v1936 = vunpack.c.l.b16 %v1801
    %v1937 = vunpack.c.l.b16 %v1802
    %v1938 = vunpack.c.l.b16 %v1803
    %v1939 = vunpack.c.l.b16 %v1804
    %v1940 = vunpack.c.l.b16 %v1805
    %v1941 = vunpack.c.l.b16 %v1806
    %v1942 = vunpack.c.l.b16 %v1807
    %v1943 = vunpack.c.l.b16 %v1808
    %v1944 = vunpack.c.l.b16 %v1809
    %v1945 = vunpack.c.l.b16 %v1810
    %v1946 = vunpack.c.l.b16 %v1811
    %v1947 = vunpack.c.l.b16 %v1812
    %v1948 = vunpack.c.l.b16 %v1813
    %v1949 = vunpack.c.l.b16 %v1814
    %v1950 = vunpack.c.l.b16 %v1815
    %v1951 = vunpack.c.l.b16 %v1816
    %v1952 = vunpack.c.l.b16 %v1817
    %v1953 = vunpack.c.l.b16 %v1818
    %v1954 = vunpack.c.l.b16 %v1819
    %v1955 = vunpack.c.l.b16 %v1820
    %v1956 = vunpack.c.l.b16 %v1821
    %v1957 = vunpack.c.l.b16 %v1822
    %v1958 = vunpack.c.l.b16 %v1823
    %v1959 = vunpack.c.l.b16 %v1824
    %v1960 = vunpack.c.l.b16 %v1825
    %v1961 = vunpack.c.l.b16 %v1826
    %v1962 = vunpack.c.l.b16 %v1827
    %v1963 = vunpack.c.l.b16 %v1828
    %v1964 = vunpack.c.l.b16 %v1829
    %v1965 = vunpack.c.l.b16 %v1830
    %v1966 = vunpack.c.l.b16 %v1831
    %v1967 = vunpack.c.l.b16 %v1832
    %v1968 = vunpack.c.l.b16 %v1833
    %v1969 = vunpack.c.l.b16 %v1834
    %v1970 = vunpack.c.l.b16 %v1835
    %v1971 = vunpack.c.l.b16 %v1836
    %v1972 = vunpack.c.l.b16 %v1837
    %v1973 = vunpack.c.l.b16 %v1838
    %v1974 = vunpack.c.l.b16 %v1839
    %v1975 = vunpack.c.l.b16 %v1840
    %v1976 = vunpack.c.l.b16 %v1841
    %v1977 = vunpack.c.l.b16 %v1842
    %v1978 = vunpack.c.l.b16 %v1843
    %v1979 = vunpack.c.l.b16 %v1844
    %v1980 = vunpack.c.l.b16 %v1845
    %v1981 = vpack.c.b16 %v1918, %v1917
    %v1982 = vpack.c.b16 %v1920, %v1919
    %v1983 = vpack.c.b16 %v1922, %v1921
    %v1984 = vpack.c.b16 %v1924, %v1923
    %v1985 = vpack.c.b16 %v1926, %v1925
    %v1986 = vpack.c.b16 %v1928, %v1927
    %v1987 = vpack.c.b16 %v1930, %v1929
    %v1988 = vpack.c.b16 %v1932, %v1931
    %v1989 = vpack.c.b16 %v1934, %v1933
    %v1990 = vpack.c.b16 %v1936, %v1935
    %v1991 = vpack.c.b16 %v1938, %v1937
    %v1992 = vpack.c.b16 %v1940, %v1939
    %v1993 = vpack.c.b16 %v1942, %v1941
    %v1994 = vpack.c.b16 %v1944, %v1943
    %v1995 = vpack.c.b16 %v1946, %v1945
    %v1996 = vpack.c.b16 %v1948, %v1947
    %v1997 = vpack.c.b16 %v1950, %v1949
    %v1998 = vpack.c.b16 %v1952, %v1951
    %v1999 = vpack.c.b16 %v1954, %v1953
    %v2000 = vpack.c.b16 %v1956, %v1955
    %v2001 = vpack.c.b16 %v1958, %v1957
    %v2002 = vpack.c.b16 %v1960, %v1959
    %v2003 = vpack.c.b16 %v1962, %v1961
    %v2004 = vpack.c.b16 %v1964, %v1963
    %v2005 = vpack.c.b16 %v1966, %v1965
    %v2006 = vpack.c.b16 %v1968, %v1967
    %v2007 = vpack.c.b16 %v1970, %v1969
    %v2008 = vpack.c.b16 %v1972, %v1971
    %v2009 = vpack.c.b16 %v1974, %v1973
    %v2010 = vpack.c.b16 %v1976, %v1975
    %v2011 = vpack.c.b16 %v1978, %v1977
    %v2012 = vpack.c.b16 %v1980, %v1979
    %2045 = vmatprep.subr.bf16.mxu0 0
    %2046 = vmatpush1.bf16.msra.mxu0 %v1988
    %2047 = vmatprep.subr.bf16.mxu0 0
    %2048 = vmatpush1.bf16.msra.mxu0 %v1987
    %2049 = vmatprep.subr.bf16.mxu0 0
    %2050 = vmatpush1.bf16.msra.mxu0 %v1986
    %2051 = vmatprep.subr.bf16.mxu0 0
    %2052 = vmatpush1.bf16.msra.mxu0 %v1985
    %2053 = vmatprep.subr.bf16.mxu0 0
    %2054 = vmatpush1.bf16.msra.mxu0 %v1984
    %2055 = vmatprep.subr.bf16.mxu0 0
    %2056 = vmatpush1.bf16.msra.mxu0 %v1983
    %2057 = vmatprep.subr.bf16.mxu0 0
    %2058 = vmatpush1.bf16.msra.mxu0 %v1982
    %2059 = vmatprep.subr.bf16.mxu0 0
    %2060 = vmatpush1.bf16.msra.mxu0 %v1981
    %2061 = vmatprep.subr.bf16.mxu0 0
    %2062 = vmatpush2.bf16.msra.mxu0 %v1996
    %2063 = vmatprep.subr.bf16.mxu0 0
    %2064 = vmatpush2.bf16.msra.mxu0 %v1995
    %2065 = vmatprep.subr.bf16.mxu0 0
    %2066 = vmatpush2.bf16.msra.mxu0 %v1994
    %2067 = vmatprep.subr.bf16.mxu0 0
    %2068 = vmatpush2.bf16.msra.mxu0 %v1993
    %2069 = vmatprep.subr.bf16.mxu0 0
    %2070 = vmatpush2.bf16.msra.mxu0 %v1992
    %2071 = vmatprep.subr.bf16.mxu0 0
    %2072 = vmatpush2.bf16.msra.mxu0 %v1991
    %2073 = vmatprep.subr.bf16.mxu0 0
    %2074 = vmatpush2.bf16.msra.mxu0 %v1990
    %2075 = vmatprep.subr.bf16.mxu0 0
    %2076 = vmatpush2.bf16.msra.mxu0 %v1989
    %2077 = vmatprep.mubr.bf16.mxu0 %v1779
    %2078 = vmatmul.mubr.bf16.gmra.mxu0 %v1778
    %v2079 = vpop.f32.mrf.mxu0
    %v2080 = vadd.f32 %v1851, %v2079
    %v2081 = vpop.f32.mrf.mxu0
    %v2082 = vpop.f32.mrf.mxu0
    %v2083 = vpop.f32.mrf.mxu0
    %2084 = vdwg.mxu0
    %2085 = vmatprep.subr.bf16.mxu0 0
    %2086 = vmatpush1.bf16.msra.mxu0 %v2004
    %2087 = vmatprep.subr.bf16.mxu0 0
    %2088 = vmatpush1.bf16.msra.mxu0 %v2003
    %2089 = vmatprep.subr.bf16.mxu0 0
    %2090 = vmatpush1.bf16.msra.mxu0 %v2002
    %2091 = vmatprep.subr.bf16.mxu0 0
    %2092 = vmatpush1.bf16.msra.mxu0 %v2001
    %2093 = vmatprep.subr.bf16.mxu0 0
    %2094 = vmatpush1.bf16.msra.mxu0 %v2000
    %2095 = vmatprep.subr.bf16.mxu0 0
    %2096 = vmatpush1.bf16.msra.mxu0 %v1999
    %2097 = vmatprep.subr.bf16.mxu0 0
    %2098 = vmatpush1.bf16.msra.mxu0 %v1998
    %2099 = vmatprep.subr.bf16.mxu0 0
    %2100 = vmatpush1.bf16.msra.mxu0 %v1997
    %2101 = vmatprep.subr.bf16.mxu0 0
    %2102 = vmatpush2.bf16.msra.mxu0 %v2012
    %2103 = vmatprep.subr.bf16.mxu0 0
    %2104 = vmatpush2.bf16.msra.mxu0 %v2011
    %2105 = vmatprep.subr.bf16.mxu0 0
    %2106 = vmatpush2.bf16.msra.mxu0 %v2010
    %2107 = vmatprep.subr.bf16.mxu0 0
    %2108 = vmatpush2.bf16.msra.mxu0 %v2009
    %2109 = vmatprep.subr.bf16.mxu0 0
    %2110 = vmatpush2.bf16.msra.mxu0 %v2008
    %2111 = vmatprep.subr.bf16.mxu0 0
    %2112 = vmatpush2.bf16.msra.mxu0 %v2007
    %2113 = vmatprep.subr.bf16.mxu0 0
    %2114 = vmatpush2.bf16.msra.mxu0 %v2006
    %2115 = vmatprep.subr.bf16.mxu0 0
    %2116 = vmatpush2.bf16.msra.mxu0 %v2005
    %2117 = vmatprep.mubr.bf16.mxu0 %v1781
    %2118 = vmatmul.mubr.bf16.gmra.mxu0 %v1780
    %v2119 = vpop.f32.mrf.mxu0
    %v2120 = vadd.f32 %v2080, %v2119
    %v2121 = vpop.f32.mrf.mxu0
    %v2122 = vpop.f32.mrf.mxu0
    %v2123 = vpop.f32.mrf.mxu0
    %2124 = vdwg.mxu0
    %v2125 = vmul.f32 %v2120, 1.442695
    %v2126 = vpow.pop %v2125
    %v2127 = vld [vmem:[%s1] sm:$0xff]
    %2129 = vrot.lane.b32.xlu0 %v2127, 2
    %v2130 = vpop.permute.xlu0 %2129
    %v2132 = vmul.f32 %v2126, %v2130
    %2134 = vrot.lane.b32.xlu0 %v2132, 126
    %v2135 = vpop.permute.xlu0 %2134
    %v2137 = vadd.f32 %v2120, %v2135
    %vm2138 = vcmask 31744
    %2139 = vst.msk [vmem:[%s11] sm:$0xff] %vm2138, %v2120
    %v2140 = vld [vmem:[%s6] sm:$0xff]
    %v2141 = vld [vmem:[%s7] sm:$0xf]
    %2143 = vset.pattern.permute.xlu0 0
    %2144 = vperm.xlu0 %2143, %v2137
    %v2145 = vpop.permute.xlu0 %2144
    %v2148 = vlaneseq
    %v2149 = vshrl.u32 %v2148, 7
    %v2150 = vsub.s32 0, %v2149
    %v2151 = vrot.slane %v2140, %v2150
    %v2152 = vlaneseq
    %v2153 = vshrl.u32 %v2152, 7
    %v2154 = vsub.s32 2, %v2153
    %v2155 = vrot.slane %v2140, %v2154
    %v2156 = vlaneseq
    %v2157 = vshrl.u32 %v2156, 7
    %v2158 = vsub.s32 4, %v2157
    %v2159 = vrot.slane %v2140, %v2158
    %v2160 = vlaneseq
    %v2161 = vshrl.u32 %v2160, 7
    %v2162 = vsub.s32 6, %v2161
    %v2163 = vrot.slane %v2140, %v2162
    %v2168 = vlaneseq
    %v2169 = vshrl.u32 %v2168, 7
    %v2170 = vsub.s32 0, %v2169
    %v2171 = vrot.slane %v2151, %v2170
    %v2172 = vlaneseq
    %v2173 = vshrl.u32 %v2172, 7
    %v2174 = vsub.s32 0, %v2173
    %v2175 = vrot.slane %v2155, %v2174
    %v2176 = vlaneseq
    %v2177 = vshrl.u32 %v2176, 7
    %v2178 = vsub.s32 0, %v2177
    %v2179 = vrot.slane %v2159, %v2178
    %v2180 = vlaneseq
    %v2181 = vshrl.u32 %v2180, 7
    %v2182 = vsub.s32 0, %v2181
    %v2183 = vrot.slane %v2163, %v2182
    %v2184 = vmul.f32 %v2145, %v2171
    %v2185 = vmul.f32 %v2145, %v2175
    %v2186 = vmul.f32 %v2145, %v2179
    %v2187 = vmul.f32 %v2145, %v2183
    %v2189 = vlaneseq
    %v2190 = vshrl.u32 %v2189, 7
    %v2191 = vsub.s32 0, %v2190
    %v2192 = vrot.slane %v2141, %v2191
    %v2193 = vlaneseq
    %v2194 = vshrl.u32 %v2193, 7
    %v2195 = vsub.s32 1, %v2194
    %v2196 = vrot.slane %v2141, %v2195
    %v2197 = vlaneseq
    %v2198 = vshrl.u32 %v2197, 7
    %v2199 = vsub.s32 2, %v2198
    %v2200 = vrot.slane %v2141, %v2199
    %v2201 = vlaneseq
    %v2202 = vshrl.u32 %v2201, 7
    %v2203 = vsub.s32 3, %v2202
    %v2204 = vrot.slane %v2141, %v2203
    %v2209 = vadd.f32 %v2192, %v2184
    %v2210 = vadd.f32 %v2196, %v2185
    %v2211 = vadd.f32 %v2200, %v2186
    %v2212 = vadd.f32 %v2204, %v2187
    %2213 = vset.pattern.permute.xlu0 1
    %2214 = vperm.xlu0 %2213, %v2137
    %v2215 = vpop.permute.xlu0 %2214
    %v2217 = vlaneseq
    %v2218 = vshrl.u32 %v2217, 7
    %v2219 = vsub.s32 1, %v2218
    %v2220 = vrot.slane %v2140, %v2219
    %v2221 = vlaneseq
    %v2222 = vshrl.u32 %v2221, 7
    %v2223 = vsub.s32 3, %v2222
    %v2224 = vrot.slane %v2140, %v2223
    %v2225 = vlaneseq
    %v2226 = vshrl.u32 %v2225, 7
    %v2227 = vsub.s32 5, %v2226
    %v2228 = vrot.slane %v2140, %v2227
    %v2229 = vlaneseq
    %v2230 = vshrl.u32 %v2229, 7
    %v2231 = vsub.s32 7, %v2230
    %v2232 = vrot.slane %v2140, %v2231
    %v2237 = vlaneseq
    %v2238 = vshrl.u32 %v2237, 7
    %v2239 = vsub.s32 1, %v2238
    %v2240 = vrot.slane %v2220, %v2239
    %v2241 = vlaneseq
    %v2242 = vshrl.u32 %v2241, 7
    %v2243 = vsub.s32 1, %v2242
    %v2244 = vrot.slane %v2224, %v2243
    %v2245 = vlaneseq
    %v2246 = vshrl.u32 %v2245, 7
    %v2247 = vsub.s32 1, %v2246
    %v2248 = vrot.slane %v2228, %v2247
    %v2249 = vlaneseq
    %v2250 = vshrl.u32 %v2249, 7
    %v2251 = vsub.s32 1, %v2250
    %v2252 = vrot.slane %v2232, %v2251
    %v2253 = vmul.f32 %v2215, %v2240
    %v2254 = vmul.f32 %v2215, %v2244
    %v2255 = vmul.f32 %v2215, %v2248
    %v2256 = vmul.f32 %v2215, %v2252
    %v2257 = vadd.f32 %v2209, %v2253
    %v2258 = vadd.f32 %v2210, %v2254
    %v2259 = vadd.f32 %v2211, %v2255
    %v2260 = vadd.f32 %v2212, %v2256
    %v2261 = vmax.f32 %v2257, 0.0
    %v2262 = vmax.f32 %v2258, 0.0
    %v2263 = vmax.f32 %v2259, 0.0
    %v2264 = vmax.f32 %v2260, 0.0
    %v2265 = vpack.c.bf16 %v2261, %v2261
    %v2266 = vpack.c.bf16 %v2262, %v2262
    %v2267 = vpack.c.bf16 %v2263, %v2263
    %v2268 = vpack.c.bf16 %v2264, %v2264
    %v2269 = vld [vmem:[#allocation4] sm:$0xff]
    %v2270 = vld [vmem:[#allocation4 + $0x8] sm:$0xff]
    %v2271 = vld [vmem:[#allocation4 + $0x10] sm:$0xff]
    %v2272 = vld [vmem:[#allocation4 + $0x18] sm:$0xf]
    %v2273 = vld [vmem:[#allocation4 + $0x1c] sm:$0xff]
    %v2274 = vld [vmem:[#allocation4 + $0x24] sm:$0xff]
    %v2275 = vld [vmem:[#allocation4 + $0x2c] sm:$0xff]
    %v2276 = vld [vmem:[#allocation4 + $0x34] sm:$0xf]
    %v2277 = vld [vmem:[#allocation4 + $0x38] sm:$0xff]
    %v2278 = vld [vmem:[#allocation4 + $0x40] sm:$0xff]
    %v2279 = vld [vmem:[#allocation4 + $0x48] sm:$0xff]
    %v2280 = vld [vmem:[#allocation4 + $0x50] sm:$0xf]
    %v2281 = vld [vmem:[#allocation4 + $0x54] sm:$0xff]
    %v2282 = vld [vmem:[#allocation4 + $0x5c] sm:$0xff]
    %v2283 = vld [vmem:[#allocation4 + $0x64] sm:$0xff]
    %v2284 = vld [vmem:[#allocation4 + $0x6c] sm:$0xf]
    %v2285 = vld [vmem:[#allocation4 + $0x70] sm:$0xff]
    %v2286 = vld [vmem:[#allocation4 + $0x78] sm:$0xff]
    %v2287 = vld [vmem:[#allocation4 + $0x80] sm:$0xff]
    %v2288 = vld [vmem:[#allocation4 + $0x88] sm:$0xf]
    %v2289 = vld [vmem:[#allocation4 + $0x8c] sm:$0xff]
    %v2290 = vld [vmem:[#allocation4 + $0x94] sm:$0xff]
    %v2291 = vld [vmem:[#allocation4 + $0x9c] sm:$0xff]
    %v2292 = vld [vmem:[#allocation4 + $0xa4] sm:$0xf]
    %v2293 = vld [vmem:[#allocation4 + $0xa8] sm:$0xff]
    %v2294 = vld [vmem:[#allocation4 + $0xb0] sm:$0xff]
    %v2295 = vld [vmem:[#allocation4 + $0xb8] sm:$0xff]
    %v2296 = vld [vmem:[#allocation4 + $0xc0] sm:$0xf]
    %v2297 = vld [vmem:[#allocation4 + $0xc4] sm:$0xff]
    %v2298 = vld [vmem:[#allocation4 + $0xcc] sm:$0xff]
    %v2299 = vld [vmem:[#allocation4 + $0xd4] sm:$0xff]
    %v2300 = vld [vmem:[#allocation4 + $0xdc] sm:$0xf]
    %v2301 = vld [vmem:[#allocation4 + $0xe0] sm:$0xff]
    %v2302 = vld [vmem:[#allocation4 + $0xe8] sm:$0xff]
    %v2303 = vld [vmem:[#allocation4 + $0xf0] sm:$0xff]
    %v2304 = vld [vmem:[#allocation4 + $0xf8] sm:$0xf]
    %v2305 = vld [vmem:[#allocation4 + $0xfc] sm:$0xff]
    %v2306 = vld [vmem:[#allocation4 + $0x104] sm:$0xff]
    %v2307 = vld [vmem:[#allocation4 + $0x10c] sm:$0xff]
    %v2308 = vld [vmem:[#allocation4 + $0x114] sm:$0xf]
    %v2309 = vld [vmem:[#allocation4 + $0x118] sm:$0xff]
    %v2310 = vld [vmem:[#allocation4 + $0x120] sm:$0xff]
    %v2311 = vld [vmem:[#allocation4 + $0x128] sm:$0xff]
    %v2312 = vld [vmem:[#allocation4 + $0x130] sm:$0xf]
    %v2313 = vld [vmem:[#allocation4 + $0x134] sm:$0xff]
    %v2314 = vld [vmem:[#allocation4 + $0x13c] sm:$0xff]
    %v2315 = vld [vmem:[#allocation4 + $0x144] sm:$0xff]
    %v2316 = vld [vmem:[#allocation4 + $0x14c] sm:$0xf]
    %v2317 = vld [vmem:[#allocation4 + $0x150] sm:$0xff]
    %v2318 = vld [vmem:[#allocation4 + $0x158] sm:$0xff]
    %v2319 = vld [vmem:[#allocation4 + $0x160] sm:$0xff]
    %v2320 = vld [vmem:[#allocation4 + $0x168] sm:$0xf]
    %v2321 = vld [vmem:[#allocation4 + $0x16c] sm:$0xff]
    %v2322 = vld [vmem:[#allocation4 + $0x174] sm:$0xff]
    %v2323 = vld [vmem:[#allocation4 + $0x17c] sm:$0xff]
    %v2324 = vld [vmem:[#allocation4 + $0x184] sm:$0xf]
    %v2325 = vld [vmem:[#allocation4 + $0x188] sm:$0xff]
    %v2326 = vld [vmem:[#allocation4 + $0x190] sm:$0xff]
    %v2327 = vld [vmem:[#allocation4 + $0x198] sm:$0xff]
    %v2328 = vld [vmem:[#allocation4 + $0x1a0] sm:$0xf]
    %v2329 = vld [vmem:[#allocation4 + $0x1a4] sm:$0xff]
    %v2330 = vld [vmem:[#allocation4 + $0x1ac] sm:$0xff]
    %v2331 = vld [vmem:[#allocation4 + $0x1b4] sm:$0xff]
    %v2332 = vld [vmem:[#allocation4 + $0x1bc] sm:$0xf]
    %v2333 = vld [vmem:[#allocation4 + $0x1c0] sm:$0xff]
    %v2334 = vld [vmem:[#allocation4 + $0x1c8] sm:$0xff]
    %v2335 = vld [vmem:[#allocation4 + $0x1d0] sm:$0xff]
    %v2336 = vld [vmem:[#allocation4 + $0x1d8] sm:$0xf]
    %v2337 = vld [vmem:[#allocation4 + $0x1dc] sm:$0xff]
    %v2338 = vld [vmem:[#allocation4 + $0x1e4] sm:$0xff]
    %v2339 = vld [vmem:[#allocation4 + $0x1ec] sm:$0xff]
    %v2340 = vld [vmem:[#allocation4 + $0x1f4] sm:$0xf]
    %v2341 = vld [vmem:[#allocation4 + $0x1f8] sm:$0xff]
    %v2342 = vld [vmem:[#allocation4 + $0x200] sm:$0xff]
    %v2343 = vld [vmem:[#allocation4 + $0x208] sm:$0xff]
    %v2344 = vld [vmem:[#allocation4 + $0x210] sm:$0xf]
    %v2345 = vld [vmem:[#allocation4 + $0x214] sm:$0xff]
    %v2346 = vld [vmem:[#allocation4 + $0x21c] sm:$0xff]
    %v2347 = vld [vmem:[#allocation4 + $0x224] sm:$0xff]
    %v2348 = vld [vmem:[#allocation4 + $0x22c] sm:$0xf]
    %v2349 = vld [vmem:[#allocation4 + $0x230] sm:$0xff]
    %v2350 = vld [vmem:[#allocation4 + $0x238] sm:$0xff]
    %v2351 = vld [vmem:[#allocation4 + $0x240] sm:$0xff]
    %v2352 = vld [vmem:[#allocation4 + $0x248] sm:$0xf]
    %v2353 = vld [vmem:[#allocation4 + $0x24c] sm:$0xff]
    %v2354 = vld [vmem:[#allocation4 + $0x254] sm:$0xff]
    %v2355 = vld [vmem:[#allocation4 + $0x25c] sm:$0xff]
    %v2356 = vld [vmem:[#allocation4 + $0x264] sm:$0xf]
    %v2357 = vld [vmem:[#allocation4 + $0x268] sm:$0xff]
    %v2358 = vld [vmem:[#allocation4 + $0x270] sm:$0xff]
    %v2359 = vld [vmem:[#allocation4 + $0x278] sm:$0xff]
    %v2360 = vld [vmem:[#allocation4 + $0x280] sm:$0xf]
    %v2361 = vld [vmem:[#allocation4 + $0x284] sm:$0xff]
    %v2362 = vld [vmem:[#allocation4 + $0x28c] sm:$0xff]
    %v2363 = vld [vmem:[#allocation4 + $0x294] sm:$0xff]
    %v2364 = vld [vmem:[#allocation4 + $0x29c] sm:$0xf]
    %v2365 = vld [vmem:[#allocation4 + $0x2a0] sm:$0xff]
    %v2366 = vld [vmem:[#allocation4 + $0x2a8] sm:$0xff]
    %v2367 = vld [vmem:[#allocation4 + $0x2b0] sm:$0xff]
    %v2368 = vld [vmem:[#allocation4 + $0x2b8] sm:$0xf]
    %v2369 = vld [vmem:[#allocation4 + $0x2bc] sm:$0xff]
    %v2370 = vld [vmem:[#allocation4 + $0x2c4] sm:$0xff]
    %v2371 = vld [vmem:[#allocation4 + $0x2cc] sm:$0xff]
    %v2372 = vld [vmem:[#allocation4 + $0x2d4] sm:$0xf]
    %v2373 = vld [vmem:[#allocation4 + $0x2d8] sm:$0xff]
    %v2374 = vld [vmem:[#allocation4 + $0x2e0] sm:$0xff]
    %v2375 = vld [vmem:[#allocation4 + $0x2e8] sm:$0xff]
    %v2376 = vld [vmem:[#allocation4 + $0x2f0] sm:$0xf]
    %v2377 = vld [vmem:[#allocation4 + $0x2f4] sm:$0xff]
    %v2378 = vld [vmem:[#allocation4 + $0x2fc] sm:$0xff]
    %v2379 = vld [vmem:[#allocation4 + $0x304] sm:$0xff]
    %v2380 = vld [vmem:[#allocation4 + $0x30c] sm:$0xf]
    %v2381 = vld [vmem:[#allocation4 + $0x310] sm:$0xff]
    %v2382 = vld [vmem:[#allocation4 + $0x318] sm:$0xff]
    %v2383 = vld [vmem:[#allocation4 + $0x320] sm:$0xff]
    %v2384 = vld [vmem:[#allocation4 + $0x328] sm:$0xf]
    %v2385 = vld [vmem:[#allocation4 + $0x32c] sm:$0xff]
    %v2386 = vld [vmem:[#allocation4 + $0x334] sm:$0xff]
    %v2387 = vld [vmem:[#allocation4 + $0x33c] sm:$0xff]
    %v2388 = vld [vmem:[#allocation4 + $0x344] sm:$0xf]
    %v2389 = vld [vmem:[#allocation4 + $0x348] sm:$0xff]
    %v2390 = vld [vmem:[#allocation4 + $0x350] sm:$0xff]
    %v2391 = vld [vmem:[#allocation4 + $0x358] sm:$0xff]
    %v2392 = vld [vmem:[#allocation4 + $0x360] sm:$0xf]
    %v2393 = vld [vmem:[#allocation4 + $0x364] sm:$0xff]
    %v2394 = vld [vmem:[#allocation4 + $0x36c] sm:$0xff]
    %v2395 = vld [vmem:[#allocation4 + $0x374] sm:$0xff]
    %v2396 = vld [vmem:[#allocation4 + $0x37c] sm:$0xf]
    %v2397 = vld [vmem:[#allocation4 + $0x380] sm:$0xff]
    %v2398 = vld [vmem:[#allocation4 + $0x388] sm:$0xff]
    %v2399 = vld [vmem:[#allocation4 + $0x390] sm:$0xff]
    %v2400 = vld [vmem:[#allocation4 + $0x398] sm:$0xf]
    %v2401 = vld [vmem:[#allocation4 + $0x39c] sm:$0xff]
    %v2402 = vld [vmem:[#allocation4 + $0x3a4] sm:$0xff]
    %v2403 = vld [vmem:[#allocation4 + $0x3ac] sm:$0xff]
    %v2404 = vld [vmem:[#allocation4 + $0x3b4] sm:$0xf]
    %v2405 = vld [vmem:[#allocation4 + $0x3b8] sm:$0xff]
    %v2406 = vld [vmem:[#allocation4 + $0x3c0] sm:$0xff]
    %v2407 = vld [vmem:[#allocation4 + $0x3c8] sm:$0xff]
    %v2408 = vld [vmem:[#allocation4 + $0x3d0] sm:$0xf]
    %v2409 = vld [vmem:[#allocation4 + $0x3d4] sm:$0xff]
    %v2410 = vld [vmem:[#allocation4 + $0x3dc] sm:$0xff]
    %v2411 = vld [vmem:[#allocation4 + $0x3e4] sm:$0xff]
    %v2412 = vld [vmem:[#allocation4 + $0x3ec] sm:$0xf]
    %v2413 = vld [vmem:[#allocation4 + $0x3f0] sm:$0xff]
    %v2414 = vld [vmem:[#allocation4 + $0x3f8] sm:$0xff]
    %v2415 = vld [vmem:[#allocation4 + $0x400] sm:$0xff]
    %v2416 = vld [vmem:[#allocation4 + $0x408] sm:$0xf]
    %v2417 = vld [vmem:[#allocation4 + $0x40c] sm:$0xff]
    %v2418 = vld [vmem:[#allocation4 + $0x414] sm:$0xff]
    %v2419 = vld [vmem:[#allocation4 + $0x41c] sm:$0xff]
    %v2420 = vld [vmem:[#allocation4 + $0x424] sm:$0xf]
    %v2421 = vld [vmem:[#allocation4 + $0x428] sm:$0xff]
    %v2422 = vld [vmem:[#allocation4 + $0x430] sm:$0xff]
    %v2423 = vld [vmem:[#allocation4 + $0x438] sm:$0xff]
    %v2424 = vld [vmem:[#allocation4 + $0x440] sm:$0xf]
    %v2425 = vld [vmem:[#allocation4 + $0x444] sm:$0xff]
    %v2426 = vld [vmem:[#allocation4 + $0x44c] sm:$0xff]
    %v2427 = vld [vmem:[#allocation4 + $0x454] sm:$0xff]
    %v2428 = vld [vmem:[#allocation4 + $0x45c] sm:$0xf]
    %v2429 = vld [vmem:[#allocation4 + $0x460] sm:$0xff]
    %v2430 = vld [vmem:[#allocation4 + $0x468] sm:$0xff]
    %v2431 = vld [vmem:[#allocation4 + $0x470] sm:$0xff]
    %v2432 = vld [vmem:[#allocation4 + $0x478] sm:$0xf]
    %v2433 = vld [vmem:[#allocation4 + $0x47c] sm:$0xff]
    %v2434 = vld [vmem:[#allocation4 + $0x484] sm:$0xff]
    %v2435 = vld [vmem:[#allocation4 + $0x48c] sm:$0xff]
    %v2436 = vld [vmem:[#allocation4 + $0x494] sm:$0xf]
    %v2437 = vld [vmem:[#allocation4 + $0x498] sm:$0xff]
    %v2438 = vld [vmem:[#allocation4 + $0x4a0] sm:$0xff]
    %v2439 = vld [vmem:[#allocation4 + $0x4a8] sm:$0xff]
    %v2440 = vld [vmem:[#allocation4 + $0x4b0] sm:$0xf]
    %v2441 = vld [vmem:[#allocation4 + $0x4b4] sm:$0xff]
    %v2442 = vld [vmem:[#allocation4 + $0x4bc] sm:$0xff]
    %v2443 = vld [vmem:[#allocation4 + $0x4c4] sm:$0xff]
    %v2444 = vld [vmem:[#allocation4 + $0x4cc] sm:$0xf]
    %v2445 = vld [vmem:[#allocation4 + $0x4d0] sm:$0xff]
    %v2446 = vld [vmem:[#allocation4 + $0x4d8] sm:$0xff]
    %v2447 = vld [vmem:[#allocation4 + $0x4e0] sm:$0xff]
    %v2448 = vld [vmem:[#allocation4 + $0x4e8] sm:$0xf]
    %v2449 = vld [vmem:[#allocation4 + $0x4ec] sm:$0xff]
    %v2450 = vld [vmem:[#allocation4 + $0x4f4] sm:$0xff]
    %v2451 = vld [vmem:[#allocation4 + $0x4fc] sm:$0xff]
    %v2452 = vld [vmem:[#allocation4 + $0x504] sm:$0xf]
    %v2453 = vld [vmem:[#allocation4 + $0x508] sm:$0xff]
    %v2454 = vld [vmem:[#allocation4 + $0x510] sm:$0xff]
    %v2455 = vld [vmem:[#allocation4 + $0x518] sm:$0xff]
    %v2456 = vld [vmem:[#allocation4 + $0x520] sm:$0xf]
    %v2457 = vld [vmem:[#allocation4 + $0x524] sm:$0xff]
    %v2458 = vld [vmem:[#allocation4 + $0x52c] sm:$0xff]
    %v2459 = vld [vmem:[#allocation4 + $0x534] sm:$0xff]
    %v2460 = vld [vmem:[#allocation4 + $0x53c] sm:$0xf]
    %v2461 = vld [vmem:[#allocation4 + $0x540] sm:$0xff]
    %v2462 = vld [vmem:[#allocation4 + $0x548] sm:$0xff]
    %v2463 = vld [vmem:[#allocation4 + $0x550] sm:$0xff]
    %v2464 = vld [vmem:[#allocation4 + $0x558] sm:$0xf]
    %v2465 = vld [vmem:[#allocation4 + $0x55c] sm:$0xff]
    %v2466 = vld [vmem:[#allocation4 + $0x564] sm:$0xff]
    %v2467 = vld [vmem:[#allocation4 + $0x56c] sm:$0xff]
    %v2468 = vld [vmem:[#allocation4 + $0x574] sm:$0xf]
    %v2469 = vld [vmem:[#allocation4 + $0x578] sm:$0xff]
    %v2470 = vld [vmem:[#allocation4 + $0x580] sm:$0xff]
    %v2471 = vld [vmem:[#allocation4 + $0x588] sm:$0xff]
    %v2472 = vld [vmem:[#allocation4 + $0x590] sm:$0xf]
    %v2473 = vld [vmem:[#allocation4 + $0x594] sm:$0xff]
    %v2474 = vld [vmem:[#allocation4 + $0x59c] sm:$0xff]
    %v2475 = vld [vmem:[#allocation4 + $0x5a4] sm:$0xff]
    %v2476 = vld [vmem:[#allocation4 + $0x5ac] sm:$0xf]
    %v2477 = vld [vmem:[#allocation4 + $0x5b0] sm:$0xff]
    %v2478 = vld [vmem:[#allocation4 + $0x5b8] sm:$0xff]
    %v2479 = vld [vmem:[#allocation4 + $0x5c0] sm:$0xff]
    %v2480 = vld [vmem:[#allocation4 + $0x5c8] sm:$0xf]
    %v2481 = vld [vmem:[#allocation4 + $0x5cc] sm:$0xff]
    %v2482 = vld [vmem:[#allocation4 + $0x5d4] sm:$0xff]
    %v2483 = vld [vmem:[#allocation4 + $0x5dc] sm:$0xff]
    %v2484 = vld [vmem:[#allocation4 + $0x5e4] sm:$0xf]
    %v2485 = vld [vmem:[#allocation4 + $0x5e8] sm:$0xff]
    %v2486 = vld [vmem:[#allocation4 + $0x5f0] sm:$0xff]
    %v2487 = vld [vmem:[#allocation4 + $0x5f8] sm:$0xff]
    %v2488 = vld [vmem:[#allocation4 + $0x600] sm:$0xf]
    %v2489 = vld [vmem:[#allocation4 + $0x604] sm:$0xff]
    %v2490 = vld [vmem:[#allocation4 + $0x60c] sm:$0xff]
    %v2491 = vld [vmem:[#allocation4 + $0x614] sm:$0xff]
    %v2492 = vld [vmem:[#allocation4 + $0x61c] sm:$0xf]
    %v2493 = vld [vmem:[#allocation4 + $0x620] sm:$0xff]
    %v2494 = vld [vmem:[#allocation4 + $0x628] sm:$0xff]
    %v2495 = vld [vmem:[#allocation4 + $0x630] sm:$0xff]
    %v2496 = vld [vmem:[#allocation4 + $0x638] sm:$0xf]
    %v2497 = vld [vmem:[#allocation4 + $0x63c] sm:$0xff]
    %v2498 = vld [vmem:[#allocation4 + $0x644] sm:$0xff]
    %v2499 = vld [vmem:[#allocation4 + $0x64c] sm:$0xff]
    %v2500 = vld [vmem:[#allocation4 + $0x654] sm:$0xf]
    %v2501 = vld [vmem:[#allocation4 + $0x658] sm:$0xff]
    %v2502 = vld [vmem:[#allocation4 + $0x660] sm:$0xff]
    %v2503 = vld [vmem:[#allocation4 + $0x668] sm:$0xff]
    %v2504 = vld [vmem:[#allocation4 + $0x670] sm:$0xf]
    %v2505 = vld [vmem:[#allocation4 + $0x674] sm:$0xff]
    %v2506 = vld [vmem:[#allocation4 + $0x67c] sm:$0xff]
    %v2507 = vld [vmem:[#allocation4 + $0x684] sm:$0xff]
    %v2508 = vld [vmem:[#allocation4 + $0x68c] sm:$0xf]
    %v2509 = vld [vmem:[#allocation4 + $0x690] sm:$0xff]
    %v2510 = vld [vmem:[#allocation4 + $0x698] sm:$0xff]
    %v2511 = vld [vmem:[#allocation4 + $0x6a0] sm:$0xff]
    %v2512 = vld [vmem:[#allocation4 + $0x6a8] sm:$0xf]
    %v2513 = vld [vmem:[#allocation4 + $0x6ac] sm:$0xff]
    %v2514 = vld [vmem:[#allocation4 + $0x6b4] sm:$0xff]
    %v2515 = vld [vmem:[#allocation4 + $0x6bc] sm:$0xff]
    %v2516 = vld [vmem:[#allocation4 + $0x6c4] sm:$0xf]
    %v2517 = vld [vmem:[#allocation4 + $0x6c8] sm:$0xff]
    %v2518 = vld [vmem:[#allocation4 + $0x6d0] sm:$0xff]
    %v2519 = vld [vmem:[#allocation4 + $0x6d8] sm:$0xff]
    %v2520 = vld [vmem:[#allocation4 + $0x6e0] sm:$0xf]
    %v2521 = vld [vmem:[#allocation4 + $0x6e4] sm:$0xff]
    %v2522 = vld [vmem:[#allocation4 + $0x6ec] sm:$0xff]
    %v2523 = vld [vmem:[#allocation4 + $0x6f4] sm:$0xff]
    %v2524 = vld [vmem:[#allocation4 + $0x6fc] sm:$0xf]
    %v2525 = vld [vmem:[%s9] sm:$0xff]
    %v2527 = vlaneseq
    %v2528 = vshrl.u32 %v2527, 7
    %v2529 = vsub.s32 0, %v2528
    %v2530 = vrot.slane %v2525, %v2529
    %v2531 = vlaneseq
    %v2532 = vshrl.u32 %v2531, 7
    %v2533 = vsub.s32 1, %v2532
    %v2534 = vrot.slane %v2525, %v2533
    %v2535 = vlaneseq
    %v2536 = vshrl.u32 %v2535, 7
    %v2537 = vsub.s32 2, %v2536
    %v2538 = vrot.slane %v2525, %v2537
    %v2539 = vlaneseq
    %v2540 = vshrl.u32 %v2539, 7
    %v2541 = vsub.s32 3, %v2540
    %v2542 = vrot.slane %v2525, %v2541
    %v2543 = vlaneseq
    %v2544 = vshrl.u32 %v2543, 7
    %v2545 = vsub.s32 4, %v2544
    %v2546 = vrot.slane %v2525, %v2545
    %v2547 = vlaneseq
    %v2548 = vshrl.u32 %v2547, 7
    %v2549 = vsub.s32 5, %v2548
    %v2550 = vrot.slane %v2525, %v2549
    %v2551 = vlaneseq
    %v2552 = vshrl.u32 %v2551, 7
    %v2553 = vsub.s32 6, %v2552
    %v2554 = vrot.slane %v2525, %v2553
    %v2818 = vunpack.c.l.b16 %v2269
    %v2819 = vunpack.c.h.b16 %v2269
    %v2820 = vunpack.c.l.b16 %v2270
    %v2821 = vunpack.c.h.b16 %v2270
    %v2822 = vunpack.c.l.b16 %v2271
    %v2823 = vunpack.c.h.b16 %v2271
    %v2824 = vunpack.c.l.b16 %v2272
    %v2825 = vunpack.c.l.b16 %v2273
    %v2826 = vunpack.c.h.b16 %v2273
    %v2827 = vunpack.c.l.b16 %v2274
    %v2828 = vunpack.c.h.b16 %v2274
    %v2829 = vunpack.c.l.b16 %v2275
    %v2830 = vunpack.c.h.b16 %v2275
    %v2831 = vunpack.c.l.b16 %v2276
    %v2832 = vunpack.c.l.b16 %v2277
    %v2833 = vunpack.c.h.b16 %v2277
    %v2834 = vunpack.c.l.b16 %v2278
    %v2835 = vunpack.c.h.b16 %v2278
    %v2836 = vunpack.c.l.b16 %v2279
    %v2837 = vunpack.c.h.b16 %v2279
    %v2838 = vunpack.c.l.b16 %v2280
    %v2839 = vunpack.c.l.b16 %v2281
    %v2840 = vunpack.c.h.b16 %v2281
    %v2841 = vunpack.c.l.b16 %v2282
    %v2842 = vunpack.c.h.b16 %v2282
    %v2843 = vunpack.c.l.b16 %v2283
    %v2844 = vunpack.c.h.b16 %v2283
    %v2845 = vunpack.c.l.b16 %v2284
    %v2846 = vunpack.c.l.b16 %v2285
    %v2847 = vunpack.c.h.b16 %v2285
    %v2848 = vunpack.c.l.b16 %v2286
    %v2849 = vunpack.c.h.b16 %v2286
    %v2850 = vunpack.c.l.b16 %v2287
    %v2851 = vunpack.c.h.b16 %v2287
    %v2852 = vunpack.c.l.b16 %v2288
    %v2853 = vunpack.c.l.b16 %v2289
    %v2854 = vunpack.c.h.b16 %v2289
    %v2855 = vunpack.c.l.b16 %v2290
    %v2856 = vunpack.c.h.b16 %v2290
    %v2857 = vunpack.c.l.b16 %v2291
    %v2858 = vunpack.c.h.b16 %v2291
    %v2859 = vunpack.c.l.b16 %v2292
    %v2860 = vunpack.c.l.b16 %v2293
    %v2861 = vunpack.c.h.b16 %v2293
    %v2862 = vunpack.c.l.b16 %v2294
    %v2863 = vunpack.c.h.b16 %v2294
    %v2864 = vunpack.c.l.b16 %v2295
    %v2865 = vunpack.c.h.b16 %v2295
    %v2866 = vunpack.c.l.b16 %v2296
    %v2867 = vunpack.c.l.b16 %v2297
    %v2868 = vunpack.c.h.b16 %v2297
    %v2869 = vunpack.c.l.b16 %v2298
    %v2870 = vunpack.c.h.b16 %v2298
    %v2871 = vunpack.c.l.b16 %v2299
    %v2872 = vunpack.c.h.b16 %v2299
    %v2873 = vunpack.c.l.b16 %v2300
    %v2874 = vunpack.c.l.b16 %v2301
    %v2875 = vunpack.c.h.b16 %v2301
    %v2876 = vunpack.c.l.b16 %v2302
    %v2877 = vunpack.c.h.b16 %v2302
    %v2878 = vunpack.c.l.b16 %v2303
    %v2879 = vunpack.c.h.b16 %v2303
    %v2880 = vunpack.c.l.b16 %v2304
    %v2881 = vunpack.c.l.b16 %v2305
    %v2882 = vunpack.c.h.b16 %v2305
    %v2883 = vunpack.c.l.b16 %v2306
    %v2884 = vunpack.c.h.b16 %v2306
    %v2885 = vunpack.c.l.b16 %v2307
    %v2886 = vunpack.c.h.b16 %v2307
    %v2887 = vunpack.c.l.b16 %v2308
    %v2888 = vunpack.c.l.b16 %v2309
    %v2889 = vunpack.c.h.b16 %v2309
    %v2890 = vunpack.c.l.b16 %v2310
    %v2891 = vunpack.c.h.b16 %v2310
    %v2892 = vunpack.c.l.b16 %v2311
    %v2893 = vunpack.c.h.b16 %v2311
    %v2894 = vunpack.c.l.b16 %v2312
    %v2895 = vunpack.c.l.b16 %v2313
    %v2896 = vunpack.c.h.b16 %v2313
    %v2897 = vunpack.c.l.b16 %v2314
    %v2898 = vunpack.c.h.b16 %v2314
    %v2899 = vunpack.c.l.b16 %v2315
    %v2900 = vunpack.c.h.b16 %v2315
    %v2901 = vunpack.c.l.b16 %v2316
    %v2902 = vunpack.c.l.b16 %v2317
    %v2903 = vunpack.c.h.b16 %v2317
    %v2904 = vunpack.c.l.b16 %v2318
    %v2905 = vunpack.c.h.b16 %v2318
    %v2906 = vunpack.c.l.b16 %v2319
    %v2907 = vunpack.c.h.b16 %v2319
    %v2908 = vunpack.c.l.b16 %v2320
    %v2909 = vunpack.c.l.b16 %v2321
    %v2910 = vunpack.c.h.b16 %v2321
    %v2911 = vunpack.c.l.b16 %v2322
    %v2912 = vunpack.c.h.b16 %v2322
    %v2913 = vunpack.c.l.b16 %v2323
    %v2914 = vunpack.c.h.b16 %v2323
    %v2915 = vunpack.c.l.b16 %v2324
    %v2916 = vunpack.c.l.b16 %v2325
    %v2917 = vunpack.c.h.b16 %v2325
    %v2918 = vunpack.c.l.b16 %v2326
    %v2919 = vunpack.c.h.b16 %v2326
    %v2920 = vunpack.c.l.b16 %v2327
    %v2921 = vunpack.c.h.b16 %v2327
    %v2922 = vunpack.c.l.b16 %v2328
    %v2923 = vunpack.c.l.b16 %v2329
    %v2924 = vunpack.c.h.b16 %v2329
    %v2925 = vunpack.c.l.b16 %v2330
    %v2926 = vunpack.c.h.b16 %v2330
    %v2927 = vunpack.c.l.b16 %v2331
    %v2928 = vunpack.c.h.b16 %v2331
    %v2929 = vunpack.c.l.b16 %v2332
    %v2930 = vunpack.c.l.b16 %v2333
    %v2931 = vunpack.c.h.b16 %v2333
    %v2932 = vunpack.c.l.b16 %v2334
    %v2933 = vunpack.c.h.b16 %v2334
    %v2934 = vunpack.c.l.b16 %v2335
    %v2935 = vunpack.c.h.b16 %v2335
    %v2936 = vunpack.c.l.b16 %v2336
    %v2937 = vunpack.c.l.b16 %v2337
    %v2938 = vunpack.c.h.b16 %v2337
    %v2939 = vunpack.c.l.b16 %v2338
    %v2940 = vunpack.c.h.b16 %v2338
    %v2941 = vunpack.c.l.b16 %v2339
    %v2942 = vunpack.c.h.b16 %v2339
    %v2943 = vunpack.c.l.b16 %v2340
    %v2944 = vunpack.c.l.b16 %v2341
    %v2945 = vunpack.c.h.b16 %v2341
    %v2946 = vunpack.c.l.b16 %v2342
    %v2947 = vunpack.c.h.b16 %v2342
    %v2948 = vunpack.c.l.b16 %v2343
    %v2949 = vunpack.c.h.b16 %v2343
    %v2950 = vunpack.c.l.b16 %v2344
    %v2951 = vunpack.c.l.b16 %v2345
    %v2952 = vunpack.c.h.b16 %v2345
    %v2953 = vunpack.c.l.b16 %v2346
    %v2954 = vunpack.c.h.b16 %v2346
    %v2955 = vunpack.c.l.b16 %v2347
    %v2956 = vunpack.c.h.b16 %v2347
    %v2957 = vunpack.c.l.b16 %v2348
    %v2958 = vunpack.c.l.b16 %v2349
    %v2959 = vunpack.c.h.b16 %v2349
    %v2960 = vunpack.c.l.b16 %v2350
    %v2961 = vunpack.c.h.b16 %v2350
    %v2962 = vunpack.c.l.b16 %v2351
    %v2963 = vunpack.c.h.b16 %v2351
    %v2964 = vunpack.c.l.b16 %v2352
    %v2965 = vunpack.c.l.b16 %v2353
    %v2966 = vunpack.c.h.b16 %v2353
    %v2967 = vunpack.c.l.b16 %v2354
    %v2968 = vunpack.c.h.b16 %v2354
    %v2969 = vunpack.c.l.b16 %v2355
    %v2970 = vunpack.c.h.b16 %v2355
    %v2971 = vunpack.c.l.b16 %v2356
    %v2972 = vunpack.c.l.b16 %v2357
    %v2973 = vunpack.c.h.b16 %v2357
    %v2974 = vunpack.c.l.b16 %v2358
    %v2975 = vunpack.c.h.b16 %v2358
    %v2976 = vunpack.c.l.b16 %v2359
    %v2977 = vunpack.c.h.b16 %v2359
    %v2978 = vunpack.c.l.b16 %v2360
    %v2979 = vunpack.c.l.b16 %v2361
    %v2980 = vunpack.c.h.b16 %v2361
    %v2981 = vunpack.c.l.b16 %v2362
    %v2982 = vunpack.c.h.b16 %v2362
    %v2983 = vunpack.c.l.b16 %v2363
    %v2984 = vunpack.c.h.b16 %v2363
    %v2985 = vunpack.c.l.b16 %v2364
    %v2986 = vunpack.c.l.b16 %v2365
    %v2987 = vunpack.c.h.b16 %v2365
    %v2988 = vunpack.c.l.b16 %v2366
    %v2989 = vunpack.c.h.b16 %v2366
    %v2990 = vunpack.c.l.b16 %v2367
    %v2991 = vunpack.c.h.b16 %v2367
    %v2992 = vunpack.c.l.b16 %v2368
    %v2993 = vunpack.c.l.b16 %v2369
    %v2994 = vunpack.c.h.b16 %v2369
    %v2995 = vunpack.c.l.b16 %v2370
    %v2996 = vunpack.c.h.b16 %v2370
    %v2997 = vunpack.c.l.b16 %v2371
    %v2998 = vunpack.c.h.b16 %v2371
    %v2999 = vunpack.c.l.b16 %v2372
    %v3000 = vunpack.c.l.b16 %v2373
    %v3001 = vunpack.c.h.b16 %v2373
    %v3002 = vunpack.c.l.b16 %v2374
    %v3003 = vunpack.c.h.b16 %v2374
    %v3004 = vunpack.c.l.b16 %v2375
    %v3005 = vunpack.c.h.b16 %v2375
    %v3006 = vunpack.c.l.b16 %v2376
    %v3007 = vunpack.c.l.b16 %v2377
    %v3008 = vunpack.c.h.b16 %v2377
    %v3009 = vunpack.c.l.b16 %v2378
    %v3010 = vunpack.c.h.b16 %v2378
    %v3011 = vunpack.c.l.b16 %v2379
    %v3012 = vunpack.c.h.b16 %v2379
    %v3013 = vunpack.c.l.b16 %v2380
    %v3014 = vunpack.c.l.b16 %v2381
    %v3015 = vunpack.c.h.b16 %v2381
    %v3016 = vunpack.c.l.b16 %v2382
    %v3017 = vunpack.c.h.b16 %v2382
    %v3018 = vunpack.c.l.b16 %v2383
    %v3019 = vunpack.c.h.b16 %v2383
    %v3020 = vunpack.c.l.b16 %v2384
    %v3021 = vunpack.c.l.b16 %v2385
    %v3022 = vunpack.c.h.b16 %v2385
    %v3023 = vunpack.c.l.b16 %v2386
    %v3024 = vunpack.c.h.b16 %v2386
    %v3025 = vunpack.c.l.b16 %v2387
    %v3026 = vunpack.c.h.b16 %v2387
    %v3027 = vunpack.c.l.b16 %v2388
    %v3028 = vunpack.c.l.b16 %v2389
    %v3029 = vunpack.c.h.b16 %v2389
    %v3030 = vunpack.c.l.b16 %v2390
    %v3031 = vunpack.c.h.b16 %v2390
    %v3032 = vunpack.c.l.b16 %v2391
    %v3033 = vunpack.c.h.b16 %v2391
    %v3034 = vunpack.c.l.b16 %v2392
    %v3035 = vunpack.c.l.b16 %v2393
    %v3036 = vunpack.c.h.b16 %v2393
    %v3037 = vunpack.c.l.b16 %v2394
    %v3038 = vunpack.c.h.b16 %v2394
    %v3039 = vunpack.c.l.b16 %v2395
    %v3040 = vunpack.c.h.b16 %v2395
    %v3041 = vunpack.c.l.b16 %v2396
    %v3042 = vunpack.c.l.b16 %v2397
    %v3043 = vunpack.c.h.b16 %v2397
    %v3044 = vunpack.c.l.b16 %v2398
    %v3045 = vunpack.c.h.b16 %v2398
    %v3046 = vunpack.c.l.b16 %v2399
    %v3047 = vunpack.c.h.b16 %v2399
    %v3048 = vunpack.c.l.b16 %v2400
    %v3049 = vunpack.c.l.b16 %v2401
    %v3050 = vunpack.c.h.b16 %v2401
    %v3051 = vunpack.c.l.b16 %v2402
    %v3052 = vunpack.c.h.b16 %v2402
    %v3053 = vunpack.c.l.b16 %v2403
    %v3054 = vunpack.c.h.b16 %v2403
    %v3055 = vunpack.c.l.b16 %v2404
    %v3056 = vunpack.c.l.b16 %v2405
    %v3057 = vunpack.c.h.b16 %v2405
    %v3058 = vunpack.c.l.b16 %v2406
    %v3059 = vunpack.c.h.b16 %v2406
    %v3060 = vunpack.c.l.b16 %v2407
    %v3061 = vunpack.c.h.b16 %v2407
    %v3062 = vunpack.c.l.b16 %v2408
    %v3063 = vunpack.c.l.b16 %v2409
    %v3064 = vunpack.c.h.b16 %v2409
    %v3065 = vunpack.c.l.b16 %v2410
    %v3066 = vunpack.c.h.b16 %v2410
    %v3067 = vunpack.c.l.b16 %v2411
    %v3068 = vunpack.c.h.b16 %v2411
    %v3069 = vunpack.c.l.b16 %v2412
    %v3070 = vunpack.c.l.b16 %v2413
    %v3071 = vunpack.c.h.b16 %v2413
    %v3072 = vunpack.c.l.b16 %v2414
    %v3073 = vunpack.c.h.b16 %v2414
    %v3074 = vunpack.c.l.b16 %v2415
    %v3075 = vunpack.c.h.b16 %v2415
    %v3076 = vunpack.c.l.b16 %v2416
    %v3077 = vunpack.c.l.b16 %v2417
    %v3078 = vunpack.c.h.b16 %v2417
    %v3079 = vunpack.c.l.b16 %v2418
    %v3080 = vunpack.c.h.b16 %v2418
    %v3081 = vunpack.c.l.b16 %v2419
    %v3082 = vunpack.c.h.b16 %v2419
    %v3083 = vunpack.c.l.b16 %v2420
    %v3084 = vunpack.c.l.b16 %v2421
    %v3085 = vunpack.c.h.b16 %v2421
    %v3086 = vunpack.c.l.b16 %v2422
    %v3087 = vunpack.c.h.b16 %v2422
    %v3088 = vunpack.c.l.b16 %v2423
    %v3089 = vunpack.c.h.b16 %v2423
    %v3090 = vunpack.c.l.b16 %v2424
    %v3091 = vunpack.c.l.b16 %v2425
    %v3092 = vunpack.c.h.b16 %v2425
    %v3093 = vunpack.c.l.b16 %v2426
    %v3094 = vunpack.c.h.b16 %v2426
    %v3095 = vunpack.c.l.b16 %v2427
    %v3096 = vunpack.c.h.b16 %v2427
    %v3097 = vunpack.c.l.b16 %v2428
    %v3098 = vunpack.c.l.b16 %v2429
    %v3099 = vunpack.c.h.b16 %v2429
    %v3100 = vunpack.c.l.b16 %v2430
    %v3101 = vunpack.c.h.b16 %v2430
    %v3102 = vunpack.c.l.b16 %v2431
    %v3103 = vunpack.c.h.b16 %v2431
    %v3104 = vunpack.c.l.b16 %v2432
    %v3105 = vunpack.c.l.b16 %v2433
    %v3106 = vunpack.c.h.b16 %v2433
    %v3107 = vunpack.c.l.b16 %v2434
    %v3108 = vunpack.c.h.b16 %v2434
    %v3109 = vunpack.c.l.b16 %v2435
    %v3110 = vunpack.c.h.b16 %v2435
    %v3111 = vunpack.c.l.b16 %v2436
    %v3112 = vunpack.c.l.b16 %v2437
    %v3113 = vunpack.c.h.b16 %v2437
    %v3114 = vunpack.c.l.b16 %v2438
    %v3115 = vunpack.c.h.b16 %v2438
    %v3116 = vunpack.c.l.b16 %v2439
    %v3117 = vunpack.c.h.b16 %v2439
    %v3118 = vunpack.c.l.b16 %v2440
    %v3119 = vunpack.c.l.b16 %v2441
    %v3120 = vunpack.c.h.b16 %v2441
    %v3121 = vunpack.c.l.b16 %v2442
    %v3122 = vunpack.c.h.b16 %v2442
    %v3123 = vunpack.c.l.b16 %v2443
    %v3124 = vunpack.c.h.b16 %v2443
    %v3125 = vunpack.c.l.b16 %v2444
    %v3126 = vunpack.c.l.b16 %v2445
    %v3127 = vunpack.c.h.b16 %v2445
    %v3128 = vunpack.c.l.b16 %v2446
    %v3129 = vunpack.c.h.b16 %v2446
    %v3130 = vunpack.c.l.b16 %v2447
    %v3131 = vunpack.c.h.b16 %v2447
    %v3132 = vunpack.c.l.b16 %v2448
    %v3133 = vunpack.c.l.b16 %v2449
    %v3134 = vunpack.c.h.b16 %v2449
    %v3135 = vunpack.c.l.b16 %v2450
    %v3136 = vunpack.c.h.b16 %v2450
    %v3137 = vunpack.c.l.b16 %v2451
    %v3138 = vunpack.c.h.b16 %v2451
    %v3139 = vunpack.c.l.b16 %v2452
    %v3140 = vunpack.c.l.b16 %v2453
    %v3141 = vunpack.c.h.b16 %v2453
    %v3142 = vunpack.c.l.b16 %v2454
    %v3143 = vunpack.c.h.b16 %v2454
    %v3144 = vunpack.c.l.b16 %v2455
    %v3145 = vunpack.c.h.b16 %v2455
    %v3146 = vunpack.c.l.b16 %v2456
    %v3147 = vunpack.c.l.b16 %v2457
    %v3148 = vunpack.c.h.b16 %v2457
    %v3149 = vunpack.c.l.b16 %v2458
    %v3150 = vunpack.c.h.b16 %v2458
    %v3151 = vunpack.c.l.b16 %v2459
    %v3152 = vunpack.c.h.b16 %v2459
    %v3153 = vunpack.c.l.b16 %v2460
    %v3154 = vunpack.c.l.b16 %v2461
    %v3155 = vunpack.c.h.b16 %v2461
    %v3156 = vunpack.c.l.b16 %v2462
    %v3157 = vunpack.c.h.b16 %v2462
    %v3158 = vunpack.c.l.b16 %v2463
    %v3159 = vunpack.c.h.b16 %v2463
    %v3160 = vunpack.c.l.b16 %v2464
    %v3161 = vunpack.c.l.b16 %v2465
    %v3162 = vunpack.c.h.b16 %v2465
    %v3163 = vunpack.c.l.b16 %v2466
    %v3164 = vunpack.c.h.b16 %v2466
    %v3165 = vunpack.c.l.b16 %v2467
    %v3166 = vunpack.c.h.b16 %v2467
    %v3167 = vunpack.c.l.b16 %v2468
    %v3168 = vunpack.c.l.b16 %v2469
    %v3169 = vunpack.c.h.b16 %v2469
    %v3170 = vunpack.c.l.b16 %v2470
    %v3171 = vunpack.c.h.b16 %v2470
    %v3172 = vunpack.c.l.b16 %v2471
    %v3173 = vunpack.c.h.b16 %v2471
    %v3174 = vunpack.c.l.b16 %v2472
    %v3175 = vunpack.c.l.b16 %v2473
    %v3176 = vunpack.c.h.b16 %v2473
    %v3177 = vunpack.c.l.b16 %v2474
    %v3178 = vunpack.c.h.b16 %v2474
    %v3179 = vunpack.c.l.b16 %v2475
    %v3180 = vunpack.c.h.b16 %v2475
    %v3181 = vunpack.c.l.b16 %v2476
    %v3182 = vunpack.c.l.b16 %v2477
    %v3183 = vunpack.c.h.b16 %v2477
    %v3184 = vunpack.c.l.b16 %v2478
    %v3185 = vunpack.c.h.b16 %v2478
    %v3186 = vunpack.c.l.b16 %v2479
    %v3187 = vunpack.c.h.b16 %v2479
    %v3188 = vunpack.c.l.b16 %v2480
    %v3189 = vunpack.c.l.b16 %v2481
    %v3190 = vunpack.c.h.b16 %v2481
    %v3191 = vunpack.c.l.b16 %v2482
    %v3192 = vunpack.c.h.b16 %v2482
    %v3193 = vunpack.c.l.b16 %v2483
    %v3194 = vunpack.c.h.b16 %v2483
    %v3195 = vunpack.c.l.b16 %v2484
    %v3196 = vunpack.c.l.b16 %v2485
    %v3197 = vunpack.c.h.b16 %v2485
    %v3198 = vunpack.c.l.b16 %v2486
    %v3199 = vunpack.c.h.b16 %v2486
    %v3200 = vunpack.c.l.b16 %v2487
    %v3201 = vunpack.c.h.b16 %v2487
    %v3202 = vunpack.c.l.b16 %v2488
    %v3203 = vunpack.c.l.b16 %v2489
    %v3204 = vunpack.c.h.b16 %v2489
    %v3205 = vunpack.c.l.b16 %v2490
    %v3206 = vunpack.c.h.b16 %v2490
    %v3207 = vunpack.c.l.b16 %v2491
    %v3208 = vunpack.c.h.b16 %v2491
    %v3209 = vunpack.c.l.b16 %v2492
    %v3210 = vunpack.c.l.b16 %v2493
    %v3211 = vunpack.c.h.b16 %v2493
    %v3212 = vunpack.c.l.b16 %v2494
    %v3213 = vunpack.c.h.b16 %v2494
    %v3214 = vunpack.c.l.b16 %v2495
    %v3215 = vunpack.c.h.b16 %v2495
    %v3216 = vunpack.c.l.b16 %v2496
    %v3217 = vunpack.c.l.b16 %v2497
    %v3218 = vunpack.c.h.b16 %v2497
    %v3219 = vunpack.c.l.b16 %v2498
    %v3220 = vunpack.c.h.b16 %v2498
    %v3221 = vunpack.c.l.b16 %v2499
    %v3222 = vunpack.c.h.b16 %v2499
    %v3223 = vunpack.c.l.b16 %v2500
    %v3224 = vunpack.c.l.b16 %v2501
    %v3225 = vunpack.c.h.b16 %v2501
    %v3226 = vunpack.c.l.b16 %v2502
    %v3227 = vunpack.c.h.b16 %v2502
    %v3228 = vunpack.c.l.b16 %v2503
    %v3229 = vunpack.c.h.b16 %v2503
    %v3230 = vunpack.c.l.b16 %v2504
    %v3231 = vunpack.c.l.b16 %v2505
    %v3232 = vunpack.c.h.b16 %v2505
    %v3233 = vunpack.c.l.b16 %v2506
    %v3234 = vunpack.c.h.b16 %v2506
    %v3235 = vunpack.c.l.b16 %v2507
    %v3236 = vunpack.c.h.b16 %v2507
    %v3237 = vunpack.c.l.b16 %v2508
    %v3238 = vunpack.c.l.b16 %v2509
    %v3239 = vunpack.c.h.b16 %v2509
    %v3240 = vunpack.c.l.b16 %v2510
    %v3241 = vunpack.c.h.b16 %v2510
    %v3242 = vunpack.c.l.b16 %v2511
    %v3243 = vunpack.c.h.b16 %v2511
    %v3244 = vunpack.c.l.b16 %v2512
    %v3245 = vunpack.c.l.b16 %v2513
    %v3246 = vunpack.c.h.b16 %v2513
    %v3247 = vunpack.c.l.b16 %v2514
    %v3248 = vunpack.c.h.b16 %v2514
    %v3249 = vunpack.c.l.b16 %v2515
    %v3250 = vunpack.c.h.b16 %v2515
    %v3251 = vunpack.c.l.b16 %v2516
    %v3252 = vunpack.c.l.b16 %v2517
    %v3253 = vunpack.c.h.b16 %v2517
    %v3254 = vunpack.c.l.b16 %v2518
    %v3255 = vunpack.c.h.b16 %v2518
    %v3256 = vunpack.c.l.b16 %v2519
    %v3257 = vunpack.c.h.b16 %v2519
    %v3258 = vunpack.c.l.b16 %v2520
    %v3259 = vunpack.c.l.b16 %v2521
    %v3260 = vunpack.c.h.b16 %v2521
    %v3261 = vunpack.c.l.b16 %v2522
    %v3262 = vunpack.c.h.b16 %v2522
    %v3263 = vunpack.c.l.b16 %v2523
    %v3264 = vunpack.c.h.b16 %v2523
    %v3265 = vunpack.c.l.b16 %v2524
    %v3266 = vpack.c.b16 %v2825, %v2818
    %v3267 = vpack.c.b16 %v2826, %v2819
    %v3268 = vpack.c.b16 %v2827, %v2820
    %v3269 = vpack.c.b16 %v2828, %v2821
    %v3270 = vpack.c.b16 %v2829, %v2822
    %v3271 = vpack.c.b16 %v2830, %v2823
    %v3272 = vpack.c.b16 %v2831, %v2824
    %v3273 = vpack.c.b16 %v2839, %v2832
    %v3274 = vpack.c.b16 %v2840, %v2833
    %v3275 = vpack.c.b16 %v2841, %v2834
    %v3276 = vpack.c.b16 %v2842, %v2835
    %v3277 = vpack.c.b16 %v2843, %v2836
    %v3278 = vpack.c.b16 %v2844, %v2837
    %v3279 = vpack.c.b16 %v2845, %v2838
    %v3280 = vpack.c.b16 %v2853, %v2846
    %v3281 = vpack.c.b16 %v2854, %v2847
    %v3282 = vpack.c.b16 %v2855, %v2848
    %v3283 = vpack.c.b16 %v2856, %v2849
    %v3284 = vpack.c.b16 %v2857, %v2850
    %v3285 = vpack.c.b16 %v2858, %v2851
    %v3286 = vpack.c.b16 %v2859, %v2852
    %v3287 = vpack.c.b16 %v2867, %v2860
    %v3288 = vpack.c.b16 %v2868, %v2861
    %v3289 = vpack.c.b16 %v2869, %v2862
    %v3290 = vpack.c.b16 %v2870, %v2863
    %v3291 = vpack.c.b16 %v2871, %v2864
    %v3292 = vpack.c.b16 %v2872, %v2865
    %v3293 = vpack.c.b16 %v2873, %v2866
    %v3294 = vpack.c.b16 %v2881, %v2874
    %v3295 = vpack.c.b16 %v2882, %v2875
    %v3296 = vpack.c.b16 %v2883, %v2876
    %v3297 = vpack.c.b16 %v2884, %v2877
    %v3298 = vpack.c.b16 %v2885, %v2878
    %v3299 = vpack.c.b16 %v2886, %v2879
    %v3300 = vpack.c.b16 %v2887, %v2880
    %v3301 = vpack.c.b16 %v2895, %v2888
    %v3302 = vpack.c.b16 %v2896, %v2889
    %v3303 = vpack.c.b16 %v2897, %v2890
    %v3304 = vpack.c.b16 %v2898, %v2891
    %v3305 = vpack.c.b16 %v2899, %v2892
    %v3306 = vpack.c.b16 %v2900, %v2893
    %v3307 = vpack.c.b16 %v2901, %v2894
    %v3308 = vpack.c.b16 %v2909, %v2902
    %v3309 = vpack.c.b16 %v2910, %v2903
    %v3310 = vpack.c.b16 %v2911, %v2904
    %v3311 = vpack.c.b16 %v2912, %v2905
    %v3312 = vpack.c.b16 %v2913, %v2906
    %v3313 = vpack.c.b16 %v2914, %v2907
    %v3314 = vpack.c.b16 %v2915, %v2908
    %v3315 = vpack.c.b16 %v2923, %v2916
    %v3316 = vpack.c.b16 %v2924, %v2917
    %v3317 = vpack.c.b16 %v2925, %v2918
    %v3318 = vpack.c.b16 %v2926, %v2919
    %v3319 = vpack.c.b16 %v2927, %v2920
    %v3320 = vpack.c.b16 %v2928, %v2921
    %v3321 = vpack.c.b16 %v2929, %v2922
    %v3322 = vpack.c.b16 %v2937, %v2930
    %v3323 = vpack.c.b16 %v2938, %v2931
    %v3324 = vpack.c.b16 %v2939, %v2932
    %v3325 = vpack.c.b16 %v2940, %v2933
    %v3326 = vpack.c.b16 %v2941, %v2934
    %v3327 = vpack.c.b16 %v2942, %v2935
    %v3328 = vpack.c.b16 %v2943, %v2936
    %v3329 = vpack.c.b16 %v2951, %v2944
    %v3330 = vpack.c.b16 %v2952, %v2945
    %v3331 = vpack.c.b16 %v2953, %v2946
    %v3332 = vpack.c.b16 %v2954, %v2947
    %v3333 = vpack.c.b16 %v2955, %v2948
    %v3334 = vpack.c.b16 %v2956, %v2949
    %v3335 = vpack.c.b16 %v2957, %v2950
    %v3336 = vpack.c.b16 %v2965, %v2958
    %v3337 = vpack.c.b16 %v2966, %v2959
    %v3338 = vpack.c.b16 %v2967, %v2960
    %v3339 = vpack.c.b16 %v2968, %v2961
    %v3340 = vpack.c.b16 %v2969, %v2962
    %v3341 = vpack.c.b16 %v2970, %v2963
    %v3342 = vpack.c.b16 %v2971, %v2964
    %v3343 = vpack.c.b16 %v2979, %v2972
    %v3344 = vpack.c.b16 %v2980, %v2973
    %v3345 = vpack.c.b16 %v2981, %v2974
    %v3346 = vpack.c.b16 %v2982, %v2975
    %v3347 = vpack.c.b16 %v2983, %v2976
    %v3348 = vpack.c.b16 %v2984, %v2977
    %v3349 = vpack.c.b16 %v2985, %v2978
    %v3350 = vpack.c.b16 %v2993, %v2986
    %v3351 = vpack.c.b16 %v2994, %v2987
    %v3352 = vpack.c.b16 %v2995, %v2988
    %v3353 = vpack.c.b16 %v2996, %v2989
    %v3354 = vpack.c.b16 %v2997, %v2990
    %v3355 = vpack.c.b16 %v2998, %v2991
    %v3356 = vpack.c.b16 %v2999, %v2992
    %v3357 = vpack.c.b16 %v3007, %v3000
    %v3358 = vpack.c.b16 %v3008, %v3001
    %v3359 = vpack.c.b16 %v3009, %v3002
    %v3360 = vpack.c.b16 %v3010, %v3003
    %v3361 = vpack.c.b16 %v3011, %v3004
    %v3362 = vpack.c.b16 %v3012, %v3005
    %v3363 = vpack.c.b16 %v3013, %v3006
    %v3364 = vpack.c.b16 %v3021, %v3014
    %v3365 = vpack.c.b16 %v3022, %v3015
    %v3366 = vpack.c.b16 %v3023, %v3016
    %v3367 = vpack.c.b16 %v3024, %v3017
    %v3368 = vpack.c.b16 %v3025, %v3018
    %v3369 = vpack.c.b16 %v3026, %v3019
    %v3370 = vpack.c.b16 %v3027, %v3020
    %v3371 = vpack.c.b16 %v3035, %v3028
    %v3372 = vpack.c.b16 %v3036, %v3029
    %v3373 = vpack.c.b16 %v3037, %v3030
    %v3374 = vpack.c.b16 %v3038, %v3031
    %v3375 = vpack.c.b16 %v3039, %v3032
    %v3376 = vpack.c.b16 %v3040, %v3033
    %v3377 = vpack.c.b16 %v3041, %v3034
    %v3378 = vpack.c.b16 %v3049, %v3042
    %v3379 = vpack.c.b16 %v3050, %v3043
    %v3380 = vpack.c.b16 %v3051, %v3044
    %v3381 = vpack.c.b16 %v3052, %v3045
    %v3382 = vpack.c.b16 %v3053, %v3046
    %v3383 = vpack.c.b16 %v3054, %v3047
    %v3384 = vpack.c.b16 %v3055, %v3048
    %v3385 = vpack.c.b16 %v3063, %v3056
    %v3386 = vpack.c.b16 %v3064, %v3057
    %v3387 = vpack.c.b16 %v3065, %v3058
    %v3388 = vpack.c.b16 %v3066, %v3059
    %v3389 = vpack.c.b16 %v3067, %v3060
    %v3390 = vpack.c.b16 %v3068, %v3061
    %v3391 = vpack.c.b16 %v3069, %v3062
    %v3392 = vpack.c.b16 %v3077, %v3070
    %v3393 = vpack.c.b16 %v3078, %v3071
    %v3394 = vpack.c.b16 %v3079, %v3072
    %v3395 = vpack.c.b16 %v3080, %v3073
    %v3396 = vpack.c.b16 %v3081, %v3074
    %v3397 = vpack.c.b16 %v3082, %v3075
    %v3398 = vpack.c.b16 %v3083, %v3076
    %v3399 = vpack.c.b16 %v3091, %v3084
    %v3400 = vpack.c.b16 %v3092, %v3085
    %v3401 = vpack.c.b16 %v3093, %v3086
    %v3402 = vpack.c.b16 %v3094, %v3087
    %v3403 = vpack.c.b16 %v3095, %v3088
    %v3404 = vpack.c.b16 %v3096, %v3089
    %v3405 = vpack.c.b16 %v3097, %v3090
    %v3406 = vpack.c.b16 %v3105, %v3098
    %v3407 = vpack.c.b16 %v3106, %v3099
    %v3408 = vpack.c.b16 %v3107, %v3100
    %v3409 = vpack.c.b16 %v3108, %v3101
    %v3410 = vpack.c.b16 %v3109, %v3102
    %v3411 = vpack.c.b16 %v3110, %v3103
    %v3412 = vpack.c.b16 %v3111, %v3104
    %v3413 = vpack.c.b16 %v3119, %v3112
    %v3414 = vpack.c.b16 %v3120, %v3113
    %v3415 = vpack.c.b16 %v3121, %v3114
    %v3416 = vpack.c.b16 %v3122, %v3115
    %v3417 = vpack.c.b16 %v3123, %v3116
    %v3418 = vpack.c.b16 %v3124, %v3117
    %v3419 = vpack.c.b16 %v3125, %v3118
    %v3420 = vpack.c.b16 %v3133, %v3126
    %v3421 = vpack.c.b16 %v3134, %v3127
    %v3422 = vpack.c.b16 %v3135, %v3128
    %v3423 = vpack.c.b16 %v3136, %v3129
    %v3424 = vpack.c.b16 %v3137, %v3130
    %v3425 = vpack.c.b16 %v3138, %v3131
    %v3426 = vpack.c.b16 %v3139, %v3132
    %v3427 = vpack.c.b16 %v3147, %v3140
    %v3428 = vpack.c.b16 %v3148, %v3141
    %v3429 = vpack.c.b16 %v3149, %v3142
    %v3430 = vpack.c.b16 %v3150, %v3143
    %v3431 = vpack.c.b16 %v3151, %v3144
    %v3432 = vpack.c.b16 %v3152, %v3145
    %v3433 = vpack.c.b16 %v3153, %v3146
    %v3434 = vpack.c.b16 %v3161, %v3154
    %v3435 = vpack.c.b16 %v3162, %v3155
    %v3436 = vpack.c.b16 %v3163, %v3156
    %v3437 = vpack.c.b16 %v3164, %v3157
    %v3438 = vpack.c.b16 %v3165, %v3158
    %v3439 = vpack.c.b16 %v3166, %v3159
    %v3440 = vpack.c.b16 %v3167, %v3160
    %v3441 = vpack.c.b16 %v3175, %v3168
    %v3442 = vpack.c.b16 %v3176, %v3169
    %v3443 = vpack.c.b16 %v3177, %v3170
    %v3444 = vpack.c.b16 %v3178, %v3171
    %v3445 = vpack.c.b16 %v3179, %v3172
    %v3446 = vpack.c.b16 %v3180, %v3173
    %v3447 = vpack.c.b16 %v3181, %v3174
    %v3448 = vpack.c.b16 %v3189, %v3182
    %v3449 = vpack.c.b16 %v3190, %v3183
    %v3450 = vpack.c.b16 %v3191, %v3184
    %v3451 = vpack.c.b16 %v3192, %v3185
    %v3452 = vpack.c.b16 %v3193, %v3186
    %v3453 = vpack.c.b16 %v3194, %v3187
    %v3454 = vpack.c.b16 %v3195, %v3188
    %v3455 = vpack.c.b16 %v3203, %v3196
    %v3456 = vpack.c.b16 %v3204, %v3197
    %v3457 = vpack.c.b16 %v3205, %v3198
    %v3458 = vpack.c.b16 %v3206, %v3199
    %v3459 = vpack.c.b16 %v3207, %v3200
    %v3460 = vpack.c.b16 %v3208, %v3201
    %v3461 = vpack.c.b16 %v3209, %v3202
    %v3462 = vpack.c.b16 %v3217, %v3210
    %v3463 = vpack.c.b16 %v3218, %v3211
    %v3464 = vpack.c.b16 %v3219, %v3212
    %v3465 = vpack.c.b16 %v3220, %v3213
    %v3466 = vpack.c.b16 %v3221, %v3214
    %v3467 = vpack.c.b16 %v3222, %v3215
    %v3468 = vpack.c.b16 %v3223, %v3216
    %v3469 = vpack.c.b16 %v3231, %v3224
    %v3470 = vpack.c.b16 %v3232, %v3225
    %v3471 = vpack.c.b16 %v3233, %v3226
    %v3472 = vpack.c.b16 %v3234, %v3227
    %v3473 = vpack.c.b16 %v3235, %v3228
    %v3474 = vpack.c.b16 %v3236, %v3229
    %v3475 = vpack.c.b16 %v3237, %v3230
    %v3476 = vpack.c.b16 %v3245, %v3238
    %v3477 = vpack.c.b16 %v3246, %v3239
    %v3478 = vpack.c.b16 %v3247, %v3240
    %v3479 = vpack.c.b16 %v3248, %v3241
    %v3480 = vpack.c.b16 %v3249, %v3242
    %v3481 = vpack.c.b16 %v3250, %v3243
    %v3482 = vpack.c.b16 %v3251, %v3244
    %v3483 = vpack.c.b16 %v3259, %v3252
    %v3484 = vpack.c.b16 %v3260, %v3253
    %v3485 = vpack.c.b16 %v3261, %v3254
    %v3486 = vpack.c.b16 %v3262, %v3255
    %v3487 = vpack.c.b16 %v3263, %v3256
    %v3488 = vpack.c.b16 %v3264, %v3257
    %v3489 = vpack.c.b16 %v3265, %v3258
    %3714 = vmatprep.subr.bf16.mxu0 %v3316
    %3715 = vmatpush1.bf16.msra.mxu0 %v3315
    %3716 = vmatprep.subr.bf16.mxu0 %v3309
    %3717 = vmatpush1.bf16.msra.mxu0 %v3308
    %3718 = vmatprep.subr.bf16.mxu0 %v3302
    %3719 = vmatpush1.bf16.msra.mxu0 %v3301
    %3720 = vmatprep.subr.bf16.mxu0 %v3295
    %3721 = vmatpush1.bf16.msra.mxu0 %v3294
    %3722 = vmatprep.subr.bf16.mxu0 %v3288
    %3723 = vmatpush1.bf16.msra.mxu0 %v3287
    %3724 = vmatprep.subr.bf16.mxu0 %v3281
    %3725 = vmatpush1.bf16.msra.mxu0 %v3280
    %3726 = vmatprep.subr.bf16.mxu0 %v3274
    %3727 = vmatpush1.bf16.msra.mxu0 %v3273
    %3728 = vmatprep.subr.bf16.mxu0 %v3267
    %3729 = vmatpush1.bf16.msra.mxu0 %v3266
    %3730 = vmatprep.subr.bf16.mxu0 %v3372
    %3731 = vmatpush2.bf16.msra.mxu0 %v3371
    %3732 = vmatprep.subr.bf16.mxu0 %v3365
    %3733 = vmatpush2.bf16.msra.mxu0 %v3364
    %3734 = vmatprep.subr.bf16.mxu0 %v3358
    %3735 = vmatpush2.bf16.msra.mxu0 %v3357
    %3736 = vmatprep.subr.bf16.mxu0 %v3351
    %3737 = vmatpush2.bf16.msra.mxu0 %v3350
    %3738 = vmatprep.subr.bf16.mxu0 %v3344
    %3739 = vmatpush2.bf16.msra.mxu0 %v3343
    %3740 = vmatprep.subr.bf16.mxu0 %v3337
    %3741 = vmatpush2.bf16.msra.mxu0 %v3336
    %3742 = vmatprep.subr.bf16.mxu0 %v3330
    %3743 = vmatpush2.bf16.msra.mxu0 %v3329
    %3744 = vmatprep.subr.bf16.mxu0 %v3323
    %3745 = vmatpush2.bf16.msra.mxu0 %v3322
    %3746 = vmatprep.mubr.bf16.mxu0 %v2266
    %3747 = vmatmul.mubr.bf16.gmra.mxu0 %v2265
    %v3748 = vpop.f32.mrf.mxu0
    %v3749 = vadd.f32 %v2530, %v3748
    %v3750 = vpop.f32.mrf.mxu0
    %v3751 = vadd.f32 %v2534, %v3750
    %v3752 = vpop.f32.mrf.mxu0
    %v3753 = vpop.f32.mrf.mxu0
    %3754 = vdwg.mxu0
    %3755 = vmatprep.subr.bf16.mxu0 %v3428
    %3756 = vmatpush1.bf16.msra.mxu0 %v3427
    %3757 = vmatprep.subr.bf16.mxu0 %v3421
    %3758 = vmatpush1.bf16.msra.mxu0 %v3420
    %3759 = vmatprep.subr.bf16.mxu0 %v3414
    %3760 = vmatpush1.bf16.msra.mxu0 %v3413
    %3761 = vmatprep.subr.bf16.mxu0 %v3407
    %3762 = vmatpush1.bf16.msra.mxu0 %v3406
    %3763 = vmatprep.subr.bf16.mxu0 %v3400
    %3764 = vmatpush1.bf16.msra.mxu0 %v3399
    %3765 = vmatprep.subr.bf16.mxu0 %v3393
    %3766 = vmatpush1.bf16.msra.mxu0 %v3392
    %3767 = vmatprep.subr.bf16.mxu0 %v3386
    %3768 = vmatpush1.bf16.msra.mxu0 %v3385
    %3769 = vmatprep.subr.bf16.mxu0 %v3379
    %3770 = vmatpush1.bf16.msra.mxu0 %v3378
    %3771 = vmatprep.subr.bf16.mxu0 %v3484
    %3772 = vmatpush2.bf16.msra.mxu0 %v3483
    %3773 = vmatprep.subr.bf16.mxu0 %v3477
    %3774 = vmatpush2.bf16.msra.mxu0 %v3476
    %3775 = vmatprep.subr.bf16.mxu0 %v3470
    %3776 = vmatpush2.bf16.msra.mxu0 %v3469
    %3777 = vmatprep.subr.bf16.mxu0 %v3463
    %3778 = vmatpush2.bf16.msra.mxu0 %v3462
    %3779 = vmatprep.subr.bf16.mxu0 %v3456
    %3780 = vmatpush2.bf16.msra.mxu0 %v3455
    %3781 = vmatprep.subr.bf16.mxu0 %v3449
    %3782 = vmatpush2.bf16.msra.mxu0 %v3448
    %3783 = vmatprep.subr.bf16.mxu0 %v3442
    %3784 = vmatpush2.bf16.msra.mxu0 %v3441
    %3785 = vmatprep.subr.bf16.mxu0 %v3435
    %3786 = vmatpush2.bf16.msra.mxu0 %v3434
    %3787 = vmatprep.mubr.bf16.mxu0 %v2268
    %3788 = vmatmul.mubr.bf16.gmra.mxu0 %v2267
    %v3789 = vpop.f32.mrf.mxu0
    %v3790 = vadd.f32 %v3749, %v3789
    %v3791 = vpop.f32.mrf.mxu0
    %v3792 = vadd.f32 %v3751, %v3791
    %v3793 = vpop.f32.mrf.mxu0
    %v3794 = vpop.f32.mrf.mxu0
    %3795 = vdwg.mxu0
    %3796 = vmatprep.subr.bf16.mxu0 %v3318
    %3797 = vmatpush1.bf16.msra.mxu0 %v3317
    %3798 = vmatprep.subr.bf16.mxu0 %v3311
    %3799 = vmatpush1.bf16.msra.mxu0 %v3310
    %3800 = vmatprep.subr.bf16.mxu0 %v3304
    %3801 = vmatpush1.bf16.msra.mxu0 %v3303
    %3802 = vmatprep.subr.bf16.mxu0 %v3297
    %3803 = vmatpush1.bf16.msra.mxu0 %v3296
    %3804 = vmatprep.subr.bf16.mxu0 %v3290
    %3805 = vmatpush1.bf16.msra.mxu0 %v3289
    %3806 = vmatprep.subr.bf16.mxu0 %v3283
    %3807 = vmatpush1.bf16.msra.mxu0 %v3282
    %3808 = vmatprep.subr.bf16.mxu0 %v3276
    %3809 = vmatpush1.bf16.msra.mxu0 %v3275
    %3810 = vmatprep.subr.bf16.mxu0 %v3269
    %3811 = vmatpush1.bf16.msra.mxu0 %v3268
    %3812 = vmatprep.subr.bf16.mxu0 %v3374
    %3813 = vmatpush2.bf16.msra.mxu0 %v3373
    %3814 = vmatprep.subr.bf16.mxu0 %v3367
    %3815 = vmatpush2.bf16.msra.mxu0 %v3366
    %3816 = vmatprep.subr.bf16.mxu0 %v3360
    %3817 = vmatpush2.bf16.msra.mxu0 %v3359
    %3818 = vmatprep.subr.bf16.mxu0 %v3353
    %3819 = vmatpush2.bf16.msra.mxu0 %v3352
    %3820 = vmatprep.subr.bf16.mxu0 %v3346
    %3821 = vmatpush2.bf16.msra.mxu0 %v3345
    %3822 = vmatprep.subr.bf16.mxu0 %v3339
    %3823 = vmatpush2.bf16.msra.mxu0 %v3338
    %3824 = vmatprep.subr.bf16.mxu0 %v3332
    %3825 = vmatpush2.bf16.msra.mxu0 %v3331
    %3826 = vmatprep.subr.bf16.mxu0 %v3325
    %3827 = vmatpush2.bf16.msra.mxu0 %v3324
    %3828 = vmatprep.mubr.bf16.mxu0 %v2266
    %3829 = vmatmul.mubr.bf16.gmra.mxu0 %v2265
    %v3830 = vpop.f32.mrf.mxu0
    %v3831 = vadd.f32 %v2538, %v3830
    %v3832 = vpop.f32.mrf.mxu0
    %v3833 = vadd.f32 %v2542, %v3832
    %v3834 = vpop.f32.mrf.mxu0
    %v3835 = vpop.f32.mrf.mxu0
    %3836 = vdwg.mxu0
    %3837 = vmatprep.subr.bf16.mxu0 %v3430
    %3838 = vmatpush1.bf16.msra.mxu0 %v3429
    %3839 = vmatprep.subr.bf16.mxu0 %v3423
    %3840 = vmatpush1.bf16.msra.mxu0 %v3422
    %3841 = vmatprep.subr.bf16.mxu0 %v3416
    %3842 = vmatpush1.bf16.msra.mxu0 %v3415
    %3843 = vmatprep.subr.bf16.mxu0 %v3409
    %3844 = vmatpush1.bf16.msra.mxu0 %v3408
    %3845 = vmatprep.subr.bf16.mxu0 %v3402
    %3846 = vmatpush1.bf16.msra.mxu0 %v3401
    %3847 = vmatprep.subr.bf16.mxu0 %v3395
    %3848 = vmatpush1.bf16.msra.mxu0 %v3394
    %3849 = vmatprep.subr.bf16.mxu0 %v3388
    %3850 = vmatpush1.bf16.msra.mxu0 %v3387
    %3851 = vmatprep.subr.bf16.mxu0 %v3381
    %3852 = vmatpush1.bf16.msra.mxu0 %v3380
    %3853 = vmatprep.subr.bf16.mxu0 %v3486
    %3854 = vmatpush2.bf16.msra.mxu0 %v3485
    %3855 = vmatprep.subr.bf16.mxu0 %v3479
    %3856 = vmatpush2.bf16.msra.mxu0 %v3478
    %3857 = vmatprep.subr.bf16.mxu0 %v3472
    %3858 = vmatpush2.bf16.msra.mxu0 %v3471
    %3859 = vmatprep.subr.bf16.mxu0 %v3465
    %3860 = vmatpush2.bf16.msra.mxu0 %v3464
    %3861 = vmatprep.subr.bf16.mxu0 %v3458
    %3862 = vmatpush2.bf16.msra.mxu0 %v3457
    %3863 = vmatprep.subr.bf16.mxu0 %v3451
    %3864 = vmatpush2.bf16.msra.mxu0 %v3450
    %3865 = vmatprep.subr.bf16.mxu0 %v3444
    %3866 = vmatpush2.bf16.msra.mxu0 %v3443
    %3867 = vmatprep.subr.bf16.mxu0 %v3437
    %3868 = vmatpush2.bf16.msra.mxu0 %v3436
    %3869 = vmatprep.mubr.bf16.mxu0 %v2268
    %3870 = vmatmul.mubr.bf16.gmra.mxu0 %v2267
    %v3871 = vpop.f32.mrf.mxu0
    %v3872 = vadd.f32 %v3831, %v3871
    %v3873 = vpop.f32.mrf.mxu0
    %v3874 = vadd.f32 %v3833, %v3873
    %v3875 = vpop.f32.mrf.mxu0
    %v3876 = vpop.f32.mrf.mxu0
    %3877 = vdwg.mxu0
    %3878 = vmatprep.subr.bf16.mxu0 %v3320
    %3879 = vmatpush1.bf16.msra.mxu0 %v3319
    %3880 = vmatprep.subr.bf16.mxu0 %v3313
    %3881 = vmatpush1.bf16.msra.mxu0 %v3312
    %3882 = vmatprep.subr.bf16.mxu0 %v3306
    %3883 = vmatpush1.bf16.msra.mxu0 %v3305
    %3884 = vmatprep.subr.bf16.mxu0 %v3299
    %3885 = vmatpush1.bf16.msra.mxu0 %v3298
    %3886 = vmatprep.subr.bf16.mxu0 %v3292
    %3887 = vmatpush1.bf16.msra.mxu0 %v3291
    %3888 = vmatprep.subr.bf16.mxu0 %v3285
    %3889 = vmatpush1.bf16.msra.mxu0 %v3284
    %3890 = vmatprep.subr.bf16.mxu0 %v3278
    %3891 = vmatpush1.bf16.msra.mxu0 %v3277
    %3892 = vmatprep.subr.bf16.mxu0 %v3271
    %3893 = vmatpush1.bf16.msra.mxu0 %v3270
    %3894 = vmatprep.subr.bf16.mxu0 %v3376
    %3895 = vmatpush2.bf16.msra.mxu0 %v3375
    %3896 = vmatprep.subr.bf16.mxu0 %v3369
    %3897 = vmatpush2.bf16.msra.mxu0 %v3368
    %3898 = vmatprep.subr.bf16.mxu0 %v3362
    %3899 = vmatpush2.bf16.msra.mxu0 %v3361
    %3900 = vmatprep.subr.bf16.mxu0 %v3355
    %3901 = vmatpush2.bf16.msra.mxu0 %v3354
    %3902 = vmatprep.subr.bf16.mxu0 %v3348
    %3903 = vmatpush2.bf16.msra.mxu0 %v3347
    %3904 = vmatprep.subr.bf16.mxu0 %v3341
    %3905 = vmatpush2.bf16.msra.mxu0 %v3340
    %3906 = vmatprep.subr.bf16.mxu0 %v3334
    %3907 = vmatpush2.bf16.msra.mxu0 %v3333
    %3908 = vmatprep.subr.bf16.mxu0 %v3327
    %3909 = vmatpush2.bf16.msra.mxu0 %v3326
    %3910 = vmatprep.mubr.bf16.mxu0 %v2266
    %3911 = vmatmul.mubr.bf16.gmra.mxu0 %v2265
    %v3912 = vpop.f32.mrf.mxu0
    %v3913 = vadd.f32 %v2546, %v3912
    %v3914 = vpop.f32.mrf.mxu0
    %v3915 = vadd.f32 %v2550, %v3914
    %v3916 = vpop.f32.mrf.mxu0
    %v3917 = vpop.f32.mrf.mxu0
    %3918 = vdwg.mxu0
    %3919 = vmatprep.subr.bf16.mxu0 %v3432
    %3920 = vmatpush1.bf16.msra.mxu0 %v3431
    %3921 = vmatprep.subr.bf16.mxu0 %v3425
    %3922 = vmatpush1.bf16.msra.mxu0 %v3424
    %3923 = vmatprep.subr.bf16.mxu0 %v3418
    %3924 = vmatpush1.bf16.msra.mxu0 %v3417
    %3925 = vmatprep.subr.bf16.mxu0 %v3411
    %3926 = vmatpush1.bf16.msra.mxu0 %v3410
    %3927 = vmatprep.subr.bf16.mxu0 %v3404
    %3928 = vmatpush1.bf16.msra.mxu0 %v3403
    %3929 = vmatprep.subr.bf16.mxu0 %v3397
    %3930 = vmatpush1.bf16.msra.mxu0 %v3396
    %3931 = vmatprep.subr.bf16.mxu0 %v3390
    %3932 = vmatpush1.bf16.msra.mxu0 %v3389
    %3933 = vmatprep.subr.bf16.mxu0 %v3383
    %3934 = vmatpush1.bf16.msra.mxu0 %v3382
    %3935 = vmatprep.subr.bf16.mxu0 %v3488
    %3936 = vmatpush2.bf16.msra.mxu0 %v3487
    %3937 = vmatprep.subr.bf16.mxu0 %v3481
    %3938 = vmatpush2.bf16.msra.mxu0 %v3480
    %3939 = vmatprep.subr.bf16.mxu0 %v3474
    %3940 = vmatpush2.bf16.msra.mxu0 %v3473
    %3941 = vmatprep.subr.bf16.mxu0 %v3467
    %3942 = vmatpush2.bf16.msra.mxu0 %v3466
    %3943 = vmatprep.subr.bf16.mxu0 %v3460
    %3944 = vmatpush2.bf16.msra.mxu0 %v3459
    %3945 = vmatprep.subr.bf16.mxu0 %v3453
    %3946 = vmatpush2.bf16.msra.mxu0 %v3452
    %3947 = vmatprep.subr.bf16.mxu0 %v3446
    %3948 = vmatpush2.bf16.msra.mxu0 %v3445
    %3949 = vmatprep.subr.bf16.mxu0 %v3439
    %3950 = vmatpush2.bf16.msra.mxu0 %v3438
    %3951 = vmatprep.mubr.bf16.mxu0 %v2268
    %3952 = vmatmul.mubr.bf16.gmra.mxu0 %v2267
    %v3953 = vpop.f32.mrf.mxu0
    %v3954 = vadd.f32 %v3913, %v3953
    %v3955 = vpop.f32.mrf.mxu0
    %v3956 = vadd.f32 %v3915, %v3955
    %v3957 = vpop.f32.mrf.mxu0
    %v3958 = vpop.f32.mrf.mxu0
    %3959 = vdwg.mxu0
    %3960 = vmatprep.subr.bf16.mxu0 0
    %3961 = vmatpush1.bf16.msra.mxu0 %v3321
    %3962 = vmatprep.subr.bf16.mxu0 0
    %3963 = vmatpush1.bf16.msra.mxu0 %v3314
    %3964 = vmatprep.subr.bf16.mxu0 0
    %3965 = vmatpush1.bf16.msra.mxu0 %v3307
    %3966 = vmatprep.subr.bf16.mxu0 0
    %3967 = vmatpush1.bf16.msra.mxu0 %v3300
    %3968 = vmatprep.subr.bf16.mxu0 0
    %3969 = vmatpush1.bf16.msra.mxu0 %v3293
    %3970 = vmatprep.subr.bf16.mxu0 0
    %3971 = vmatpush1.bf16.msra.mxu0 %v3286
    %3972 = vmatprep.subr.bf16.mxu0 0
    %3973 = vmatpush1.bf16.msra.mxu0 %v3279
    %3974 = vmatprep.subr.bf16.mxu0 0
    %3975 = vmatpush1.bf16.msra.mxu0 %v3272
    %3976 = vmatprep.subr.bf16.mxu0 0
    %3977 = vmatpush2.bf16.msra.mxu0 %v3377
    %3978 = vmatprep.subr.bf16.mxu0 0
    %3979 = vmatpush2.bf16.msra.mxu0 %v3370
    %3980 = vmatprep.subr.bf16.mxu0 0
    %3981 = vmatpush2.bf16.msra.mxu0 %v3363
    %3982 = vmatprep.subr.bf16.mxu0 0
    %3983 = vmatpush2.bf16.msra.mxu0 %v3356
    %3984 = vmatprep.subr.bf16.mxu0 0
    %3985 = vmatpush2.bf16.msra.mxu0 %v3349
    %3986 = vmatprep.subr.bf16.mxu0 0
    %3987 = vmatpush2.bf16.msra.mxu0 %v3342
    %3988 = vmatprep.subr.bf16.mxu0 0
    %3989 = vmatpush2.bf16.msra.mxu0 %v3335
    %3990 = vmatprep.subr.bf16.mxu0 0
    %3991 = vmatpush2.bf16.msra.mxu0 %v3328
    %3992 = vmatprep.mubr.bf16.mxu0 %v2266
    %3993 = vmatmul.mubr.bf16.gmra.mxu0 %v2265
    %v3994 = vpop.f32.mrf.mxu0
    %v3995 = vadd.f32 %v2554, %v3994
    %v3996 = vpop.f32.mrf.mxu0
    %v3997 = vpop.f32.mrf.mxu0
    %v3998 = vpop.f32.mrf.mxu0
    %3999 = vdwg.mxu0
    %4000 = vmatprep.subr.bf16.mxu0 0
    %4001 = vmatpush1.bf16.msra.mxu0 %v3433
    %4002 = vmatprep.subr.bf16.mxu0 0
    %4003 = vmatpush1.bf16.msra.mxu0 %v3426
    %4004 = vmatprep.subr.bf16.mxu0 0
    %4005 = vmatpush1.bf16.msra.mxu0 %v3419
    %4006 = vmatprep.subr.bf16.mxu0 0
    %4007 = vmatpush1.bf16.msra.mxu0 %v3412
    %4008 = vmatprep.subr.bf16.mxu0 0
    %4009 = vmatpush1.bf16.msra.mxu0 %v3405
    %4010 = vmatprep.subr.bf16.mxu0 0
    %4011 = vmatpush1.bf16.msra.mxu0 %v3398
    %4012 = vmatprep.subr.bf16.mxu0 0
    %4013 = vmatpush1.bf16.msra.mxu0 %v3391
    %4014 = vmatprep.subr.bf16.mxu0 0
    %4015 = vmatpush1.bf16.msra.mxu0 %v3384
    %4016 = vmatprep.subr.bf16.mxu0 0
    %4017 = vmatpush2.bf16.msra.mxu0 %v3489
    %4018 = vmatprep.subr.bf16.mxu0 0
    %4019 = vmatpush2.bf16.msra.mxu0 %v3482
    %4020 = vmatprep.subr.bf16.mxu0 0
    %4021 = vmatpush2.bf16.msra.mxu0 %v3475
    %4022 = vmatprep.subr.bf16.mxu0 0
    %4023 = vmatpush2.bf16.msra.mxu0 %v3468
    %4024 = vmatprep.subr.bf16.mxu0 0
    %4025 = vmatpush2.bf16.msra.mxu0 %v3461
    %4026 = vmatprep.subr.bf16.mxu0 0
    %4027 = vmatpush2.bf16.msra.mxu0 %v3454
    %4028 = vmatprep.subr.bf16.mxu0 0
    %4029 = vmatpush2.bf16.msra.mxu0 %v3447
    %4030 = vmatprep.subr.bf16.mxu0 0
    %4031 = vmatpush2.bf16.msra.mxu0 %v3440
    %4032 = vmatprep.mubr.bf16.mxu0 %v2268
    %4033 = vmatmul.mubr.bf16.gmra.mxu0 %v2267
    %v4034 = vpop.f32.mrf.mxu0
    %v4035 = vadd.f32 %v3995, %v4034
    %v4036 = vpop.f32.mrf.mxu0
    %v4037 = vpop.f32.mrf.mxu0
    %v4038 = vpop.f32.mrf.mxu0
    %4039 = vdwg.mxu0
    %v4040 = vxor.u32 %v3790, 2147483648
    %v4041 = vxor.u32 %v3792, 2147483648
    %v4042 = vxor.u32 %v3872, 2147483648
    %v4043 = vxor.u32 %v3874, 2147483648
    %v4044 = vxor.u32 %v3954, 2147483648
    %v4045 = vxor.u32 %v3956, 2147483648
    %v4046 = vxor.u32 %v4035, 2147483648
    %v4047 = vmul.f32 %v4040, 1.442695
    %v4048 = vpow.pop %v4047
    %v4049 = vmul.f32 %v4041, 1.442695
    %v4050 = vpow.pop %v4049
    %v4051 = vmul.f32 %v4042, 1.442695
    %v4052 = vpow.pop %v4051
    %v4053 = vmul.f32 %v4043, 1.442695
    %v4054 = vpow.pop %v4053
    %v4055 = vmul.f32 %v4044, 1.442695
    %v4056 = vpow.pop %v4055
    %v4057 = vmul.f32 %v4045, 1.442695
    %v4058 = vpow.pop %v4057
    %v4059 = vmul.f32 %v4046, 1.442695
    %v4060 = vpow.pop %v4059
    %v4061 = vadd.f32 %v4048, 1.0
    %v4062 = vadd.f32 %v4050, 1.0
    %v4063 = vadd.f32 %v4052, 1.0
    %v4064 = vadd.f32 %v4054, 1.0
    %v4065 = vadd.f32 %v4056, 1.0
    %v4066 = vadd.f32 %v4058, 1.0
    %v4067 = vadd.f32 %v4060, 1.0
    %v4068 = vrcp.pop %v4061
    %v4069 = vmul.f32 1.0, %v4068
    %v4070 = vrcp.pop %v4062
    %v4071 = vmul.f32 1.0, %v4070
    %v4072 = vrcp.pop %v4063
    %v4073 = vmul.f32 1.0, %v4072
    %v4074 = vrcp.pop %v4064
    %v4075 = vmul.f32 1.0, %v4074
    %v4076 = vrcp.pop %v4065
    %v4077 = vmul.f32 1.0, %v4076
    %v4078 = vrcp.pop %v4066
    %v4079 = vmul.f32 1.0, %v4078
    %v4080 = vrcp.pop %v4067
    %v4081 = vmul.f32 1.0, %v4080
    %4082 = vst [vmem:[%s10] sm:$0xff] %v4069
    %4083 = vst [vmem:[%s10 + $0x8] sm:$0xff] %v4071
    %4084 = vst [vmem:[%s10 + $0x10] sm:$0xff] %v4073
    %4085 = vst [vmem:[%s10 + $0x18] sm:$0xff] %v4075
    %4086 = vst [vmem:[%s10 + $0x20] sm:$0xff] %v4077
    %4087 = vst [vmem:[%s10 + $0x28] sm:$0xff] %v4079
    %4088 = vst [vmem:[%s10 + $0x30] sm:$0xff] %v4081
    // Predicated region
    $region50: #{vae_forward.1} parent=1 // pred_check
      _
    $region51: #{vae_forward.1} parent=1 // pred_check_branch
      %4090 = sbr.rel (0) target = $region53
    $region52: #{vae_forward.1} parent=1 // pred_region
      _
    $region53: #{vae_forward.1} parent=1 // pred_fallthru
      _
    // Predicated region
    $region54: #{vae_forward.1} parent=1 // pred_check
      _
    $region55: #{vae_forward.1} parent=1 // pred_check_branch
      %4092 = sbr.rel (0) target = $region57
    $region56: #{vae_forward.1} parent=1 // pred_region
      _
    $region57: #{vae_forward.1} parent=1 // pred_fallthru
      _
    // Predicated region
    $region58: #{vae_forward.1} parent=1 // pred_check
      _
    $region59: #{vae_forward.1} parent=1 // pred_check_branch
      %4094 = sbr.rel (0) target = $region61
    $region60: #{vae_forward.1} parent=1 // pred_region
      _
    $region61: #{vae_forward.1} parent=1 // pred_fallthru
      _
    // Predicated region
    $region62: #{vae_forward.1} parent=1 // pred_check
      _
    $region63: #{vae_forward.1} parent=1 // pred_check_branch
      %4096 = sbr.rel (0) target = $region65
    $region64: #{vae_forward.1} parent=1 // pred_region
      _
    $region65: #{vae_forward.1} parent=1 // pred_fallthru
      _
    %4097 = vsyncpa [#allocation3], 1
    %4098 = vsyncpa [#allocation5], 1

</llo_original>
